<compile_context>
chip_gen: v6e
topology: v6e:2x2x1
jax: 0.10.0
libtpu: 0.0.40
codegen_flags: <defaults>
</compile_context>

<pallas_src>
import math
import jax
import jax.numpy as jnp
from jax import lax
from jax.experimental import pallas as pl
from jax.experimental.pallas import tpu as pltpu

SOURCE_MAX_LEN = 128   # small stand-in for the original 1024 (text seq length)
DIM_MODEL = 64
DIM_CONTEXT = 512
N_VISUAL = 49
LN_EPS = 1e-5


def _sigmoid(x):
    # exp + approx reciprocal both use the EUP slot (keeps the divide off the VALU).
    return pl.reciprocal(1.0 + jnp.exp(-x), approx=True)


def _maf_kernel(text_ref, vc_ref, wt_ref, ukv_ref, wtext_ref, wkv_ref,
                wog_ref, vecs_ref, out_ref, ctx_s):
    f32, bf16 = jnp.float32, jnp.bfloat16
    Bt, S, D = text_ref.shape
    M = Bt * S
    D2 = 2 * D
    Jp = wt_ref.shape[1]

    text = text_ref[...].reshape(M, D)               # (M, D) f32 (elementwise path)
    text_bf = text.astype(bf16)                      # bf16 copy for MXU operands

    # ---- context path, re-associated:  wt @ (vc @ [u_k^T | u_v^T]) ------------
    # One flat (Bt*Jp, C) x (C, 2D) matmul for the big K=512 contraction, then
    # per-batch (S, Jp) x (Jp, 2D) matmuls written into VMEM scratch.
    small = jnp.dot(vc_ref[...], ukv_ref[...],
                    preferred_element_type=f32).astype(bf16)     # (Bt*Jp, 2D)
    wt = wt_ref[...]                                             # (S, Jp) bf16
    if Bt == 1:
        ctx = jnp.dot(wt, small, preferred_element_type=f32)     # (M, 2D)
    else:
        for b in range(Bt):                                      # static trip count
            ctx_s[b] = jnp.dot(wt, small[b * Jp:(b + 1) * Jp, :],
                               preferred_element_type=f32)
        ctx = ctx_s[...].reshape(M, D2)                          # (M, 2D) f32
    # ctx = [key_ctx | val_ctx], packed lane-dense.

    # ---- packed, lane-dense (1, 2D) parameter rows ----
    w1kv = vecs_ref[0:1, :]        # [w1_k | w1_v]
    w2k_m = vecs_ref[1:2, :]       # [w2_k | 0   ]
    w2v_m = vecs_ref[2:3, :]       # [0    | w2_v]
    b_qg = vecs_ref[3:4, :]        # [b_q*scale | b_gate]
    b_kv = vecs_ref[4:5, :]        # [b_k | b_v]
    b_og = vecs_ref[5:6, :]        # [b_out | b_out @ Wg1^T]
    gb = vecs_ref[6:7, :]          # [gamma | beta]

    # ---- fused text projection: [q*scale | gate_text | T_k | T_v] -------------
    # Single (M, D) x (D, 4D) matmul; N=256 fills the 256-wide MXU on v6e/v7x.
    qgkv = jnp.dot(text_bf, wtext_ref[...], preferred_element_type=f32)  # (M, 4D)
    qg = qgkv[:, :D2] + b_qg       # 128-lane aligned slice: [q*scale+bq | gate_text+bg]
    t_kv = qgkv[:, D2:]            # [text @ wk^T | text @ wv^T]

    # ---- lambda gates (context-aware key/value mixing) ------------------------
    tk = jnp.sum(text * w1kv[:, :D], axis=-1, keepdims=True)
    tv = jnp.sum(text * w1kv[:, D:], axis=-1, keepdims=True)
    ck = jnp.sum(ctx * w2k_m, axis=-1, keepdims=True)   # full-lane reduce (masked row)
    cv = jnp.sum(ctx * w2v_m, axis=-1, keepdims=True)
    lam_k = _sigmoid(tk + ck)
    lam_v = _sigmoid(tv + cv)
    lane = lax.broadcasted_iota(jnp.int32, (M, D2), 1)
    lam2 = jnp.where(lane < D, lam_k, lam_v)             # (M, 2D)

    # ---- fused [k | v] projection (block-diagonal weight), mixing factored ----
    # k = (1-l_k)(text@wk^T) + l_k(key_ctx@wk^T) + b_k   (and likewise for v).
    ctx_kv = jnp.dot(ctx.astype(bf16), wkv_ref[...],
                     preferred_element_type=f32)          # (M, 2D)
    kv = t_kv + lam2 * (ctx_kv - t_kv) + b_kv             # (M, 2D) = [k | v]

    # ---- single-head attention (per batch element) ----------------------------
    q3 = qg[:, :D].astype(bf16).reshape(Bt, S, D)   # 1/sqrt(D) folded into wq/bq
    k3 = kv[:, :D].astype(bf16).reshape(Bt, S, D)
    v3 = kv[:, D:].astype(bf16).reshape(Bt, S, D)
    s = jnp.einsum('bqd,bkd->bqk', q3, k3, preferred_element_type=f32)
    s = s - jnp.max(s, axis=-1, keepdims=True)
    p = jnp.exp(s)
    attn = p * pl.reciprocal(jnp.sum(p, axis=-1, keepdims=True), approx=True)
    ao = jnp.einsum('bqk,bkd->bqd', attn.astype(bf16), v3,
                    preferred_element_type=f32).reshape(M, D)

    # ---- fused [video_out | gate_video] projection -----------------------------
    og = jnp.dot(ao.astype(bf16), wog_ref[...],
                 preferred_element_type=f32) + b_og        # (M, 2D)
    video_out = og[:, :D]
    gate = _sigmoid(og[:, D:] + qg[:, D:])    # video term + (text@Wg2^T + b_gate)

    # ---- residual + LayerNorm(D) (f32) ----------------------------------------
    y = text + gate * video_out
    mean = jnp.mean(y, axis=-1, keepdims=True)
    var = jnp.mean(jnp.square(y - mean), axis=-1, keepdims=True)
    out = (y - mean) * lax.rsqrt(var + LN_EPS) * gb[:, :D] + gb[:, D:]
    out_ref[...] = out.reshape(Bt, S, D).astype(out_ref.dtype)


def _tensorcores_per_device():
    """TensorCores addressable per JAX device (Pallas 'megacore' parallelism)."""
    try:
        kind = jax.devices()[0].device_kind.lower()
    except Exception:
        return 1
    # v4 / v5p (megacore) and v7x expose 2 TensorCores per device; v2/v3/v5e/v6e: 1.
    if ("v4" in kind) or ("v5p" in kind) or ("v7" in kind) or ("7x" in kind):
        return 2
    return 1


def _default_block_b(B):
    n_tc = _tensorcores_per_device()
    if n_tc > 1 and B % n_tc == 0:
        return B // n_tc          # exactly one (big) grid step per TensorCore
    return B                      # single-TC chip: one grid step, M = B*S rows


def maf_pallas(text_input, visual_context, params, block_b=None):
    B, S, D = text_input.shape
    _, J, C = visual_context.shape
    wt_p, ukv, w_text, w_kv, w_og, vecs = params
    J_pad = wt_p.shape[1]

    if block_b is None:
        block_b = _default_block_b(B)
    assert B % block_b == 0
    grid = (B // block_b,)

    # visual_context is only ever a bf16 MXU operand: cast + sublane-pad in the
    # wrapper (halves its DMA, removes the per-batch in-kernel cast).
    vc_p = jnp.pad(visual_context.astype(jnp.bfloat16),
                   ((0, 0), (0, J_pad - J), (0, 0))).reshape(B * J_pad, C)

    # TODO(synk): if SOURCE_MAX_LEN returns to 1024, re-derive block_b and tile the
    # (S, S) attention (flash-style) for v7x's 64 MiB VMEM instead of whole-S.

    macs_per_b = (J_pad * C * 2 * D        # vc @ [u_k^T | u_v^T]
                  + S * J_pad * 2 * D      # wt @ small
                  + S * D * 4 * D          # text @ [wq | wg2 | wk | wv]
                  + S * 2 * D * 2 * D      # ctx @ blockdiag(wk, wv)
                  + 2 * S * S * D          # q@k^T and attn@v
                  + S * D * 2 * D)         # ao @ [out_proj | out_proj.gate]
    cost = pl.CostEstimate(
        flops=int(2 * B * macs_per_b),
        transcendentals=int(B * (S * S + S * D + 3 * S)),
        bytes_accessed=int(sum(int(p.size) * p.dtype.itemsize for p in params)
                           + 2 * text_input.size * 4 + vc_p.size * 2))

    return pl.pallas_call(
        _maf_kernel,
        out_shape=jax.ShapeDtypeStruct((B, S, D), text_input.dtype),
        grid=grid,
        in_specs=[
            pl.BlockSpec((block_b, S, D), lambda b: (b, 0, 0)),
            pl.BlockSpec((block_b * J_pad, C), lambda b: (b, 0)),
            pl.BlockSpec(wt_p.shape, lambda b: (0, 0)),
            pl.BlockSpec(ukv.shape, lambda b: (0, 0)),
            pl.BlockSpec(w_text.shape, lambda b: (0, 0)),
            pl.BlockSpec(w_kv.shape, lambda b: (0, 0)),
            pl.BlockSpec(w_og.shape, lambda b: (0, 0)),
            pl.BlockSpec(vecs.shape, lambda b: (0, 0)),
        ],
        out_specs=pl.BlockSpec((block_b, S, D), lambda b: (b, 0, 0)),
        scratch_shapes=[pltpu.VMEM((block_b, S, 2 * D), jnp.float32)],
        compiler_params=pltpu.CompilerParams(
            dimension_semantics=("parallel",),
            vmem_limit_bytes=32 * 1024 * 1024),
        cost_estimate=cost,
    )(text_input, vc_p, wt_p, ukv, w_text, w_kv, w_og, vecs)


def prep_params(wt, uk, uv, w1k, w2k, w1v, w2v, in_proj_w, in_proj_b,
                out_proj_w, out_proj_b, gate_w, gate_b, ln_gamma, ln_beta):
    """Pre-transpose / pack / fuse PyTorch-convention weights into kernel layout."""
    D = uk.shape[0]
    S, J = wt.shape
    J_pad = ((J + 7) // 8) * 8                    # sublane-align the 49 visual tokens
    scale = 1.0 / math.sqrt(D)                    # attention scale folded into wq/bq
    bf16 = jnp.bfloat16

    wq, wk_, wv_ = in_proj_w[:D], in_proj_w[D:2 * D], in_proj_w[2 * D:]
    bq, bk, bv = in_proj_b[:D], in_proj_b[D:2 * D], in_proj_b[2 * D:]
    wg1, wg2 = gate_w[:, :D], gate_w[:, D:]       # gate halves: video / text

    wt_p = jnp.zeros((S, J_pad), jnp.float32).at[:, :J].set(wt).astype(bf16)
    ukv = jnp.concatenate([uk.T, uv.T], axis=1).astype(bf16)            # (C, 2D)
    # [wq^T*scale | wg2^T | wk^T | wv^T]: one (D, 4D) text projection.
    w_text = jnp.concatenate([wq.T * scale, wg2.T, wk_.T, wv_.T],
                             axis=1).astype(bf16)                       # (D, 4D)
    # Block-diagonal diag(wk^T, wv^T): fused (2D, 2D) context k/v projection.
    w_kv = jnp.zeros((2 * D, 2 * D), jnp.float32)
    w_kv = w_kv.at[:D, :D].set(wk_.T).at[D:, D:].set(wv_.T).astype(bf16)
    # [out_proj^T | out_proj^T @ wg1^T]: out-proj and the gate's video path fused.
    w_og = jnp.concatenate([out_proj_w.T, out_proj_w.T @ wg1.T],
                           axis=1).astype(bf16)                         # (D, 2D)

    zeros = jnp.zeros((D,), jnp.float32)
    vecs = jnp.stack([
        jnp.concatenate([w1k[0], w1v[0]]),                   # [w1_k | w1_v]
        jnp.concatenate([w2k[0], zeros]),                    # [w2_k | 0   ]
        jnp.concatenate([zeros, w2v[0]]),                    # [0    | w2_v]
        jnp.concatenate([bq * scale, gate_b]),               # [b_q*scale | b_gate]
        jnp.concatenate([bk, bv]),                           # [b_k | b_v]
        jnp.concatenate([out_proj_b, out_proj_b @ wg1.T]),   # [b_o | b_o@Wg1^T]
        jnp.concatenate([ln_gamma, ln_beta]),                # [gamma | beta]
    ]).astype(jnp.float32)                                   # (7, 2D)
    return [wt_p, ukv, w_text, w_kv, w_og, vecs]


def maf_reference(text, vc, raw):
    """Pure-JAX f32 reference (same math as the PyTorch forward, eval mode)."""
    (wt, uk, uv, w1k, w2k, w1v, w2v, in_proj_w, in_proj_b,
     out_proj_w, out_proj_b, gate_w, gate_b, ln_gamma, ln_beta) = raw
    hp = lax.Precision.HIGHEST
    D = uk.shape[0]
    vc_t = jnp.einsum('sj,bjc->bsc', wt, vc, precision=hp)
    key_ctx = jnp.einsum('bsc,dc->bsd', vc_t, uk, precision=hp)
    val_ctx = jnp.einsum('bsc,dc->bsd', vc_t, uv, precision=hp)
    lam_k = jax.nn.sigmoid(jnp.einsum('bsd,od->bso', text, w1k, precision=hp)
                           + jnp.einsum('bsd,od->bso', key_ctx, w2k, precision=hp))
    lam_v = jax.nn.sigmoid(jnp.einsum('bsd,od->bso', text, w1v, precision=hp)
                           + jnp.einsum('bsd,od->bso', val_ctx, w2v, precision=hp))
    k_cap = (1 - lam_k) * text + lam_k * key_ctx
    v_cap = (1 - lam_v) * text + lam_v * val_ctx
    wq, wk_, wv_ = in_proj_w[:D], in_proj_w[D:2 * D], in_proj_w[2 * D:]
    bq, bk, bv = in_proj_b[:D], in_proj_b[D:2 * D], in_proj_b[2 * D:]
    q = jnp.einsum('bsd,ed->bse', text, wq, precision=hp) + bq
    k = jnp.einsum('bsd,ed->bse', k_cap, wk_, precision=hp) + bk
    v = jnp.einsum('bsd,ed->bse', v_cap, wv_, precision=hp) + bv
    scores = jnp.einsum('bqd,bkd->bqk', q, k, precision=hp) / math.sqrt(D)
    attn = jax.nn.softmax(scores, axis=-1)
    ao = jnp.einsum('bqk,bkd->bqd', attn, v, precision=hp)
    video_out = jnp.einsum('bsd,ed->bse', ao, out_proj_w, precision=hp) + out_proj_b
    gate_in = jnp.concatenate([video_out, text], axis=-1)
    gate = jax.nn.sigmoid(jnp.einsum('bsd,ed->bse', gate_in, gate_w,
                                     precision=hp) + gate_b)
    y = text + gate * video_out
    mean = jnp.mean(y, -1, keepdims=True)
    var = jnp.mean(jnp.square(y - mean), -1, keepdims=True)
    return (y - mean) * lax.rsqrt(var + LN_EPS) * ln_gamma + ln_beta


if __name__ == "__main__":
    B = 2
    S = SOURCE_MAX_LEN
    D = DIM_MODEL
    C = DIM_CONTEXT
    J = N_VISUAL

    key = jax.random.PRNGKey(0)
    ks = jax.random.split(key, 16)

    def init(k, shape, scale=0.05):
        return scale * jax.random.normal(k, shape, jnp.float32)

    text_input = init(ks[0], (B, S, D), 1.0)
    visual_context = init(ks[1], (B, J, C), 1.0)

    # Deterministic synthetic parameters (PyTorch shape conventions).
    wt = init(ks[2], (S, J))                       # visual_context_transform.weight
    uk = init(ks[3], (D, C))                       # u_k.weight
    uv = init(ks[4], (D, C))                       # u_v.weight
    w1k = init(ks[5], (1, D))
    w2k = init(ks[6], (1, D))
    w1v = init(ks[7], (1, D))
    w2v = init(ks[8], (1, D))
    in_proj_w = init(ks[9], (3 * D, D))            # MultiheadAttention in_proj
    in_proj_b = init(ks[10], (3 * D,))
    out_proj_w = init(ks[11], (D, D))
    out_proj_b = init(ks[12], (D,))
    gate_w = init(ks[13], (D, 2 * D))              # visual_gate.weight
    gate_b = init(ks[14], (D,))
    ln_gamma = jnp.ones((D,), jnp.float32)         # LayerNorm default init
    ln_beta = jnp.zeros((D,), jnp.float32)

    raw = (wt, uk, uv, w1k, w2k, w1v, w2v, in_proj_w, in_proj_b,
           out_proj_w, out_proj_b, gate_w, gate_b, ln_gamma, ln_beta)
    params = prep_params(*raw)

    out = maf_pallas(text_input, visual_context, params)
    out = jax.block_until_ready(out)

    ref = jax.block_until_ready(maf_reference(text_input, visual_context, raw))
    assert out.shape == (B, S, D)
    assert jnp.allclose(out, ref, atol=2e-2, rtol=2e-2), (
        f"max abs err {float(jnp.max(jnp.abs(out - ref)))}")
    print("KERNEL_OK")
</pallas_src>

<mosaic_0001>
module attributes {stable_mosaic.version = 11 : i64} {
  func.func @_maf_kernel(%arg0: i32, %arg1: memref<2x128x64xf32, #tpu.memory_space<vmem>>, %arg2: memref<112x512xbf16, #tpu.memory_space<vmem>>, %arg3: memref<128x56xbf16, #tpu.memory_space<vmem>>, %arg4: memref<512x128xbf16, #tpu.memory_space<vmem>>, %arg5: memref<64x256xbf16, #tpu.memory_space<vmem>>, %arg6: memref<128x128xbf16, #tpu.memory_space<vmem>>, %arg7: memref<64x128xbf16, #tpu.memory_space<vmem>>, %arg8: memref<7x128xf32, #tpu.memory_space<vmem>>, %arg9: memref<2x128x64xf32, #tpu.memory_space<vmem>>, %arg10: memref<2x128x128xf32, #tpu.memory_space<vmem>>) attributes {dimension_semantics = [#tpu.dimension_semantics<parallel>], iteration_bounds = array<i64: 1>, scalar_prefetch = 0 : i64, scratch_operands = 1 : i64, tpu.core_type = #tpu.core_type<tc>, window_params = [{transform_indices = @transform_0, window_bounds = array<i64: 2, 128, 64>}, {transform_indices = @transform_1, window_bounds = array<i64: 112, 512>}, {pipeline_mode = #tpu.pipeline_mode<synchronous>, transform_indices = @transform_2, window_bounds = array<i64: 128, 56>}, {pipeline_mode = #tpu.pipeline_mode<synchronous>, transform_indices = @transform_3, window_bounds = array<i64: 512, 128>}, {pipeline_mode = #tpu.pipeline_mode<synchronous>, transform_indices = @transform_4, window_bounds = array<i64: 64, 256>}, {pipeline_mode = #tpu.pipeline_mode<synchronous>, transform_indices = @transform_5, window_bounds = array<i64: 128, 128>}, {pipeline_mode = #tpu.pipeline_mode<synchronous>, transform_indices = @transform_6, window_bounds = array<i64: 64, 128>}, {pipeline_mode = #tpu.pipeline_mode<synchronous>, transform_indices = @transform_7, window_bounds = array<i64: 7, 128>}, {transform_indices = @transform_8, window_bounds = array<i64: 2, 128, 64>}]} {
    %c0 = arith.constant 0 : index
    %c0_0 = arith.constant 0 : index
    %c0_1 = arith.constant 0 : index
    %0 = vector.load %arg1[%c0, %c0_0, %c0_1] : memref<2x128x64xf32, #tpu.memory_space<vmem>>, vector<2x128x64xf32>
    %1 = vector.shape_cast %0 : vector<2x128x64xf32> to vector<256x64xf32>
    %2 = arith.truncf %1 : vector<256x64xf32> to vector<256x64xbf16>
    %c0_2 = arith.constant 0 : index
    %c0_3 = arith.constant 0 : index
    %3 = vector.load %arg2[%c0_2, %c0_3] : memref<112x512xbf16, #tpu.memory_space<vmem>>, vector<112x512xbf16>
    %c0_4 = arith.constant 0 : index
    %c0_5 = arith.constant 0 : index
    %4 = vector.load %arg4[%c0_4, %c0_5] : memref<512x128xbf16, #tpu.memory_space<vmem>>, vector<512x128xbf16>
    %cst = arith.constant dense<0.000000e+00> : vector<112x128xf32>
    %5 = tpu.matmul %3, %4, %cst {dimension_numbers = #tpu.dot_dimension_numbers<[1], [0], [0], [1], [0, 0, 1, 1], [], []>} : vector<112x512xbf16>, vector<512x128xbf16>, vector<112x128xf32> -> vector<112x128xf32>
    %6 = arith.truncf %5 : vector<112x128xf32> to vector<112x128xbf16>
    %c0_6 = arith.constant 0 : index
    %c0_7 = arith.constant 0 : index
    %7 = vector.load %arg3[%c0_6, %c0_7] : memref<128x56xbf16, #tpu.memory_space<vmem>>, vector<128x56xbf16>
    %8 = vector.extract_strided_slice %6 {offsets = [0, 0], sizes = [56, 128], strides = [1, 1]} : vector<112x128xbf16> to vector<56x128xbf16>
    %cst_8 = arith.constant dense<0.000000e+00> : vector<128x128xf32>
    %9 = tpu.matmul %7, %8, %cst_8 {dimension_numbers = #tpu.dot_dimension_numbers<[1], [0], [0], [1], [0, 0, 1, 1], [], []>} : vector<128x56xbf16>, vector<56x128xbf16>, vector<128x128xf32> -> vector<128x128xf32>
    %c0_9 = arith.constant 0 : index
    %c0_10 = arith.constant 0 : index
    %c0_11 = arith.constant 0 : index
    %10 = vector.load %arg10[%c0_9, %c0_10, %c0_11] : memref<2x128x128xf32, #tpu.memory_space<vmem>>, vector<1x128x128xf32>
    %11 = vector.shape_cast %10 : vector<1x128x128xf32> to vector<128x128xf32>
    %12 = vector.shape_cast %9 : vector<128x128xf32> to vector<1x128x128xf32>
    tpu.vector_store %arg10[%c0_9, %c0_10, %c0_11], %12 {strides = array<i32>} : memref<2x128x128xf32, #tpu.memory_space<vmem>>, vector<1x128x128xf32>,
    %13 = vector.extract_strided_slice %6 {offsets = [56, 0], sizes = [56, 128], strides = [1, 1]} : vector<112x128xbf16> to vector<56x128xbf16>
    %cst_12 = arith.constant dense<0.000000e+00> : vector<128x128xf32>
    %14 = tpu.matmul %7, %13, %cst_12 {dimension_numbers = #tpu.dot_dimension_numbers<[1], [0], [0], [1], [0, 0, 1, 1], [], []>} : vector<128x56xbf16>, vector<56x128xbf16>, vector<128x128xf32> -> vector<128x128xf32>
    %c1 = arith.constant 1 : index
    %c0_13 = arith.constant 0 : index
    %c0_14 = arith.constant 0 : index
    %15 = vector.load %arg10[%c1, %c0_13, %c0_14] : memref<2x128x128xf32, #tpu.memory_space<vmem>>, vector<1x128x128xf32>
    %16 = vector.shape_cast %15 : vector<1x128x128xf32> to vector<128x128xf32>
    %17 = vector.shape_cast %14 : vector<128x128xf32> to vector<1x128x128xf32>
    tpu.vector_store %arg10[%c1, %c0_13, %c0_14], %17 {strides = array<i32>} : memref<2x128x128xf32, #tpu.memory_space<vmem>>, vector<1x128x128xf32>,
    %c0_15 = arith.constant 0 : index
    %c0_16 = arith.constant 0 : index
    %c0_17 = arith.constant 0 : index
    %18 = vector.load %arg10[%c0_15, %c0_16, %c0_17] : memref<2x128x128xf32, #tpu.memory_space<vmem>>, vector<2x128x128xf32>
    %19 = vector.shape_cast %18 : vector<2x128x128xf32> to vector<256x128xf32>
    %c0_18 = arith.constant 0 : index
    %c0_19 = arith.constant 0 : index
    %20 = vector.load %arg8[%c0_18, %c0_19] : memref<7x128xf32, #tpu.memory_space<vmem>>, vector<1x128xf32>
    %c1_20 = arith.constant 1 : index
    %c0_21 = arith.constant 0 : index
    %21 = vector.load %arg8[%c1_20, %c0_21] : memref<7x128xf32, #tpu.memory_space<vmem>>, vector<1x128xf32>
    %c2 = arith.constant 2 : index
    %c0_22 = arith.constant 0 : index
    %22 = vector.load %arg8[%c2, %c0_22] : memref<7x128xf32, #tpu.memory_space<vmem>>, vector<1x128xf32>
    %c3 = arith.constant 3 : index
    %c0_23 = arith.constant 0 : index
    %23 = vector.load %arg8[%c3, %c0_23] : memref<7x128xf32, #tpu.memory_space<vmem>>, vector<1x128xf32>
    %c4 = arith.constant 4 : index
    %c0_24 = arith.constant 0 : index
    %24 = vector.load %arg8[%c4, %c0_24] : memref<7x128xf32, #tpu.memory_space<vmem>>, vector<1x128xf32>
    %c5 = arith.constant 5 : index
    %c0_25 = arith.constant 0 : index
    %25 = vector.load %arg8[%c5, %c0_25] : memref<7x128xf32, #tpu.memory_space<vmem>>, vector<1x128xf32>
    %c6 = arith.constant 6 : index
    %c0_26 = arith.constant 0 : index
    %26 = vector.load %arg8[%c6, %c0_26] : memref<7x128xf32, #tpu.memory_space<vmem>>, vector<1x128xf32>
    %c0_27 = arith.constant 0 : index
    %c0_28 = arith.constant 0 : index
    %27 = vector.load %arg5[%c0_27, %c0_28] : memref<64x256xbf16, #tpu.memory_space<vmem>>, vector<64x256xbf16>
    %cst_29 = arith.constant dense<0.000000e+00> : vector<256x256xf32>
    %28 = tpu.matmul %2, %27, %cst_29 {dimension_numbers = #tpu.dot_dimension_numbers<[1], [0], [0], [1], [0, 0, 1, 1], [], []>} : vector<256x64xbf16>, vector<64x256xbf16>, vector<256x256xf32> -> vector<256x256xf32>
    %29 = vector.extract_strided_slice %28 {offsets = [0, 0], sizes = [256, 128], strides = [1, 1]} : vector<256x256xf32> to vector<256x128xf32>
    %30 = vector.broadcast %23 : vector<1x128xf32> to vector<256x128xf32>
    %31 = arith.addf %29, %30 : vector<256x128xf32>
    %32 = vector.extract_strided_slice %28 {offsets = [0, 128], sizes = [256, 128], strides = [1, 1]} : vector<256x256xf32> to vector<256x128xf32>
    %33 = vector.extract_strided_slice %20 {offsets = [0, 0], sizes = [1, 64], strides = [1, 1]} : vector<1x128xf32> to vector<1x64xf32>
    %34 = vector.broadcast %33 : vector<1x64xf32> to vector<256x64xf32>
    %35 = arith.mulf %1, %34 : vector<256x64xf32>
    %cst_30 = arith.constant dense<0.000000e+00> : vector<256xf32>
    %36 = vector.multi_reduction <add>, %35, %cst_30 [1] : vector<256x64xf32> to vector<256xf32>
    %37 = vector.shape_cast %36 : vector<256xf32> to vector<256x1xf32>
    %38 = vector.extract_strided_slice %20 {offsets = [0, 64], sizes = [1, 64], strides = [1, 1]} : vector<1x128xf32> to vector<1x64xf32>
    %39 = vector.broadcast %38 : vector<1x64xf32> to vector<256x64xf32>
    %40 = arith.mulf %1, %39 : vector<256x64xf32>
    %cst_31 = arith.constant dense<0.000000e+00> : vector<256xf32>
    %41 = vector.multi_reduction <add>, %40, %cst_31 [1] : vector<256x64xf32> to vector<256xf32>
    %42 = vector.shape_cast %41 : vector<256xf32> to vector<256x1xf32>
    %43 = vector.broadcast %21 : vector<1x128xf32> to vector<256x128xf32>
    %44 = arith.mulf %19, %43 : vector<256x128xf32>
    %cst_32 = arith.constant dense<0.000000e+00> : vector<256xf32>
    %45 = vector.multi_reduction <add>, %44, %cst_32 [1] : vector<256x128xf32> to vector<256xf32>
    %46 = vector.shape_cast %45 : vector<256xf32> to vector<256x1xf32>
    %47 = vector.broadcast %22 : vector<1x128xf32> to vector<256x128xf32>
    %48 = arith.mulf %19, %47 : vector<256x128xf32>
    %cst_33 = arith.constant dense<0.000000e+00> : vector<256xf32>
    %49 = vector.multi_reduction <add>, %48, %cst_33 [1] : vector<256x128xf32> to vector<256xf32>
    %50 = vector.shape_cast %49 : vector<256xf32> to vector<256x1xf32>
    %51 = arith.addf %37, %46 : vector<256x1xf32>
    %cst_34 = arith.constant 0.000000e+00 : f32
    %52 = vector.broadcast %cst_34 : f32 to vector<256x1xf32>
    %53 = arith.subf %52, %51 : vector<256x1xf32>
    %54 = math.exp %53 : vector<256x1xf32>
    %cst_35 = arith.constant 1.000000e+00 : f32
    %55 = vector.broadcast %cst_35 : f32 to vector<256x1xf32>
    %56 = arith.addf %55, %54 : vector<256x1xf32>
    %57 = tpu.reciprocal %56 {approx = true} : vector<256x1xf32> -> vector<256x1xf32>
    %58 = arith.addf %42, %50 : vector<256x1xf32>
    %cst_36 = arith.constant 0.000000e+00 : f32
    %59 = vector.broadcast %cst_36 : f32 to vector<256x1xf32>
    %60 = arith.subf %59, %58 : vector<256x1xf32>
    %61 = math.exp %60 : vector<256x1xf32>
    %cst_37 = arith.constant 1.000000e+00 : f32
    %62 = vector.broadcast %cst_37 : f32 to vector<256x1xf32>
    %63 = arith.addf %62, %61 : vector<256x1xf32>
    %64 = tpu.reciprocal %63 {approx = true} : vector<256x1xf32> -> vector<256x1xf32>
    %65 = tpu.iota {dimensions = array<i32: 1>} : vector<256x128xi32>
    %c64_i32 = arith.constant 64 : i32
    %66 = vector.broadcast %c64_i32 : i32 to vector<256x128xi32>
    %67 = arith.cmpi slt, %65, %66 : vector<256x128xi32>
    %68 = vector.shape_cast %57 : vector<256x1xf32> to vector<256x1xf32>
    %69 = vector.broadcast %68 : vector<256x1xf32> to vector<256x128xf32>
    %70 = vector.shape_cast %64 : vector<256x1xf32> to vector<256x1xf32>
    %71 = vector.broadcast %70 : vector<256x1xf32> to vector<256x128xf32>
    %72 = arith.select %67, %69, %71 : vector<256x128xi1>, vector<256x128xf32>
    %73 = arith.truncf %19 : vector<256x128xf32> to vector<256x128xbf16>
    %c0_38 = arith.constant 0 : index
    %c0_39 = arith.constant 0 : index
    %74 = vector.load %arg6[%c0_38, %c0_39] : memref<128x128xbf16, #tpu.memory_space<vmem>>, vector<128x128xbf16>
    %cst_40 = arith.constant dense<0.000000e+00> : vector<256x128xf32>
    %75 = tpu.matmul %73, %74, %cst_40 {dimension_numbers = #tpu.dot_dimension_numbers<[1], [0], [0], [1], [0, 0, 1, 1], [], []>} : vector<256x128xbf16>, vector<128x128xbf16>, vector<256x128xf32> -> vector<256x128xf32>
    %76 = arith.subf %75, %32 : vector<256x128xf32>
    %77 = arith.mulf %72, %76 : vector<256x128xf32>
    %78 = arith.addf %32, %77 : vector<256x128xf32>
    %79 = vector.broadcast %24 : vector<1x128xf32> to vector<256x128xf32>
    %80 = arith.addf %78, %79 : vector<256x128xf32>
    %81 = vector.extract_strided_slice %31 {offsets = [0, 0], sizes = [256, 64], strides = [1, 1]} : vector<256x128xf32> to vector<256x64xf32>
    %82 = arith.truncf %81 : vector<256x64xf32> to vector<256x64xbf16>
    %83 = vector.shape_cast %82 : vector<256x64xbf16> to vector<2x128x64xbf16>
    %84 = vector.extract_strided_slice %80 {offsets = [0, 0], sizes = [256, 64], strides = [1, 1]} : vector<256x128xf32> to vector<256x64xf32>
    %85 = arith.truncf %84 : vector<256x64xf32> to vector<256x64xbf16>
    %86 = vector.shape_cast %85 : vector<256x64xbf16> to vector<2x128x64xbf16>
    %87 = vector.extract_strided_slice %80 {offsets = [0, 64], sizes = [256, 64], strides = [1, 1]} : vector<256x128xf32> to vector<256x64xf32>
    %88 = arith.truncf %87 : vector<256x64xf32> to vector<256x64xbf16>
    %89 = vector.shape_cast %88 : vector<256x64xbf16> to vector<2x128x64xbf16>
    "tpu.trace_start"() <{level = 10 : i32, message = "bqd,bkd->bqk"}> : () -> ()
    %cst_41 = arith.constant dense<0.000000e+00> : vector<2x128x128xf32>
    %90 = tpu.matmul %83, %86, %cst_41 {dimension_numbers = #tpu.dot_dimension_numbers<[2], [2], [1], [1], [0, 0, 0, 1, 1, 1], [0], [0]>} : vector<2x128x64xbf16>, vector<2x128x64xbf16>, vector<2x128x128xf32> -> vector<2x128x128xf32>
    "tpu.trace_stop"() : () -> ()
    %cst_42 = arith.constant dense<0xFF800000> : vector<2x128xf32>
    %91 = vector.multi_reduction <maximumf>, %90, %cst_42 [2] : vector<2x128x128xf32> to vector<2x128xf32>
    %92 = vector.shape_cast %91 : vector<2x128xf32> to vector<2x128x1xf32>
    %93 = vector.broadcast %92 : vector<2x128x1xf32> to vector<2x128x128xf32>
    %94 = arith.subf %90, %93 : vector<2x128x128xf32>
    %95 = math.exp %94 : vector<2x128x128xf32>
    %cst_43 = arith.constant dense<0.000000e+00> : vector<2x128xf32>
    %96 = vector.multi_reduction <add>, %95, %cst_43 [2] : vector<2x128x128xf32> to vector<2x128xf32>
    %97 = vector.shape_cast %96 : vector<2x128xf32> to vector<2x128x1xf32>
    %98 = tpu.reciprocal %97 {approx = true} : vector<2x128x1xf32> -> vector<2x128x1xf32>
    %99 = vector.broadcast %98 : vector<2x128x1xf32> to vector<2x128x128xf32>
    %100 = arith.mulf %95, %99 : vector<2x128x128xf32>
    %101 = arith.truncf %100 : vector<2x128x128xf32> to vector<2x128x128xbf16>
    "tpu.trace_start"() <{level = 10 : i32, message = "bqk,bkd->bqd"}> : () -> ()
    %cst_44 = arith.constant dense<0.000000e+00> : vector<2x128x64xf32>
    %102 = tpu.matmul %101, %89, %cst_44 {dimension_numbers = #tpu.dot_dimension_numbers<[2], [1], [1], [2], [0, 0, 0, 1, 1, 2], [0], [0]>} : vector<2x128x128xbf16>, vector<2x128x64xbf16>, vector<2x128x64xf32> -> vector<2x128x64xf32>
    "tpu.trace_stop"() : () -> ()
    %103 = vector.shape_cast %102 : vector<2x128x64xf32> to vector<256x64xf32>
    %104 = arith.truncf %103 : vector<256x64xf32> to vector<256x64xbf16>
    %c0_45 = arith.constant 0 : index
    %c0_46 = arith.constant 0 : index
    %105 = vector.load %arg7[%c0_45, %c0_46] : memref<64x128xbf16, #tpu.memory_space<vmem>>, vector<64x128xbf16>
    %cst_47 = arith.constant dense<0.000000e+00> : vector<256x128xf32>
    %106 = tpu.matmul %104, %105, %cst_47 {dimension_numbers = #tpu.dot_dimension_numbers<[1], [0], [0], [1], [0, 0, 1, 1], [], []>} : vector<256x64xbf16>, vector<64x128xbf16>, vector<256x128xf32> -> vector<256x128xf32>
    %107 = vector.broadcast %25 : vector<1x128xf32> to vector<256x128xf32>
    %108 = arith.addf %106, %107 : vector<256x128xf32>
    %109 = vector.extract_strided_slice %108 {offsets = [0, 0], sizes = [256, 64], strides = [1, 1]} : vector<256x128xf32> to vector<256x64xf32>
    %110 = vector.extract_strided_slice %108 {offsets = [0, 64], sizes = [256, 64], strides = [1, 1]} : vector<256x128xf32> to vector<256x64xf32>
    %111 = vector.extract_strided_slice %31 {offsets = [0, 64], sizes = [256, 64], strides = [1, 1]} : vector<256x128xf32> to vector<256x64xf32>
    %112 = arith.addf %110, %111 : vector<256x64xf32>
    %cst_48 = arith.constant 0.000000e+00 : f32
    %113 = vector.broadcast %cst_48 : f32 to vector<256x64xf32>
    %114 = arith.subf %113, %112 : vector<256x64xf32>
    %115 = math.exp %114 : vector<256x64xf32>
    %cst_49 = arith.constant 1.000000e+00 : f32
    %116 = vector.broadcast %cst_49 : f32 to vector<256x64xf32>
    %117 = arith.addf %116, %115 : vector<256x64xf32>
    %118 = tpu.reciprocal %117 {approx = true} : vector<256x64xf32> -> vector<256x64xf32>
    %119 = arith.mulf %118, %109 : vector<256x64xf32>
    %120 = arith.addf %1, %119 : vector<256x64xf32>
    %cst_50 = arith.constant dense<0.000000e+00> : vector<256xf32>
    %121 = vector.multi_reduction <add>, %120, %cst_50 [1] : vector<256x64xf32> to vector<256xf32>
    %122 = vector.shape_cast %121 : vector<256xf32> to vector<256x1xf32>
    %cst_51 = arith.constant 6.400000e+01 : f32
    %123 = vector.broadcast %cst_51 : f32 to vector<256x1xf32>
    %124 = arith.divf %122, %123 : vector<256x1xf32>
    %125 = vector.broadcast %124 : vector<256x1xf32> to vector<256x64xf32>
    %126 = arith.subf %120, %125 : vector<256x64xf32>
    %127 = arith.mulf %126, %126 : vector<256x64xf32>
    %cst_52 = arith.constant dense<0.000000e+00> : vector<256xf32>
    %128 = vector.multi_reduction <add>, %127, %cst_52 [1] : vector<256x64xf32> to vector<256xf32>
    %129 = vector.shape_cast %128 : vector<256xf32> to vector<256x1xf32>
    %cst_53 = arith.constant 6.400000e+01 : f32
    %130 = vector.broadcast %cst_53 : f32 to vector<256x1xf32>
    %131 = arith.divf %129, %130 : vector<256x1xf32>
    %132 = vector.broadcast %124 : vector<256x1xf32> to vector<256x64xf32>
    %133 = arith.subf %120, %132 : vector<256x64xf32>
    %cst_54 = arith.constant 9.99999974E-6 : f32
    %134 = vector.broadcast %cst_54 : f32 to vector<256x1xf32>
    %135 = arith.addf %131, %134 : vector<256x1xf32>
    %136 = math.rsqrt %135 : vector<256x1xf32>
    %137 = vector.broadcast %136 : vector<256x1xf32> to vector<256x64xf32>
    %138 = arith.mulf %133, %137 : vector<256x64xf32>
    %139 = vector.extract_strided_slice %26 {offsets = [0, 0], sizes = [1, 64], strides = [1, 1]} : vector<1x128xf32> to vector<1x64xf32>
    %140 = vector.broadcast %139 : vector<1x64xf32> to vector<256x64xf32>
    %141 = arith.mulf %138, %140 : vector<256x64xf32>
    %142 = vector.extract_strided_slice %26 {offsets = [0, 64], sizes = [1, 64], strides = [1, 1]} : vector<1x128xf32> to vector<1x64xf32>
    %143 = vector.broadcast %142 : vector<1x64xf32> to vector<256x64xf32>
    %144 = arith.addf %141, %143 : vector<256x64xf32>
    %145 = vector.shape_cast %144 : vector<256x64xf32> to vector<2x128x64xf32>
    %c0_55 = arith.constant 0 : index
    %c0_56 = arith.constant 0 : index
    %c0_57 = arith.constant 0 : index
    %146 = vector.load %arg9[%c0_55, %c0_56, %c0_57] : memref<2x128x64xf32, #tpu.memory_space<vmem>>, vector<2x128x64xf32>
    tpu.vector_store %arg9[%c0_55, %c0_56, %c0_57], %145 {strides = array<i32>} : memref<2x128x64xf32, #tpu.memory_space<vmem>>, vector<2x128x64xf32>,
    return
  }
  func.func @transform_0(%arg0: i32) -> (i32, i32, i32) {
    %c0_i32 = arith.constant 0 : i32
    %c0_i32_0 = arith.constant 0 : i32
    %c0_i32_1 = arith.constant 0 : i32
    return %arg0, %c0_i32, %c0_i32_0 : i32, i32, i32
  }
  func.func @transform_1(%arg0: i32) -> (i32, i32) {
    %c0_i32 = arith.constant 0 : i32
    %c0_i32_0 = arith.constant 0 : i32
    return %arg0, %c0_i32 : i32, i32
  }
  func.func @transform_2(%arg0: i32) -> (i32, i32) {
    %c0_i32 = arith.constant 0 : i32
    %c0_i32_0 = arith.constant 0 : i32
    %c0_i32_1 = arith.constant 0 : i32
    return %c0_i32, %c0_i32_0 : i32, i32
  }
  func.func @transform_3(%arg0: i32) -> (i32, i32) {
    %c0_i32 = arith.constant 0 : i32
    %c0_i32_0 = arith.constant 0 : i32
    %c0_i32_1 = arith.constant 0 : i32
    return %c0_i32, %c0_i32_0 : i32, i32
  }
  func.func @transform_4(%arg0: i32) -> (i32, i32) {
    %c0_i32 = arith.constant 0 : i32
    %c0_i32_0 = arith.constant 0 : i32
    %c0_i32_1 = arith.constant 0 : i32
    return %c0_i32, %c0_i32_0 : i32, i32
  }
  func.func @transform_5(%arg0: i32) -> (i32, i32) {
    %c0_i32 = arith.constant 0 : i32
    %c0_i32_0 = arith.constant 0 : i32
    %c0_i32_1 = arith.constant 0 : i32
    return %c0_i32, %c0_i32_0 : i32, i32
  }
  func.func @transform_6(%arg0: i32) -> (i32, i32) {
    %c0_i32 = arith.constant 0 : i32
    %c0_i32_0 = arith.constant 0 : i32
    %c0_i32_1 = arith.constant 0 : i32
    return %c0_i32, %c0_i32_0 : i32, i32
  }
  func.func @transform_7(%arg0: i32) -> (i32, i32) {
    %c0_i32 = arith.constant 0 : i32
    %c0_i32_0 = arith.constant 0 : i32
    %c0_i32_1 = arith.constant 0 : i32
    return %c0_i32, %c0_i32_0 : i32, i32
  }
  func.func @transform_8(%arg0: i32) -> (i32, i32, i32) {
    %c0_i32 = arith.constant 0 : i32
    %c0_i32_0 = arith.constant 0 : i32
    %c0_i32_1 = arith.constant 0 : i32
    return %arg0, %c0_i32, %c0_i32_0 : i32, i32, i32
  }
}

</mosaic_0001>

<llo_original>
// kernel: tpu_custom_call.1
$region0: #{tpu_custom_call.1}
  #allocation0 [shape = 'u32[]', space=smem, size = 0x4, offset = 0x4, fixed_abs, tag = 'smem constant byte address 0x4 - core index']
  #allocation1 [shape = 'u32[144,128]{1,0:T(1,128)}', space=vmem, size = 0x12000, scoped, tag = 'internal scratch']
  #allocation2 [shape = 'f32[2,128,128]{2,1,0:T(8,128)}', space=vmem, size = 0x20000, scoped, tag = 'scratch operand']
  %s0 = inlined_call_operand.vmem [shape: f32[2,128,64], index: 0, kind: input, shape index: {}]
  %s1 = inlined_call_operand.vmem [shape: bf16[112,512], index: 1, kind: input, shape index: {}]
  %s2 = inlined_call_operand.vmem [shape: bf16[128,56], index: 2, kind: input, shape index: {}]
  %s3 = inlined_call_operand.vmem [shape: bf16[512,128], index: 3, kind: input, shape index: {}]
  %s4 = inlined_call_operand.hbm [shape: bf16[64,256], index: 4, kind: input, shape index: {}]
  %s5 = inlined_call_operand.hbm [shape: bf16[128,128], index: 5, kind: input, shape index: {}]
  %s6 = inlined_call_operand.hbm [shape: bf16[64,128], index: 6, kind: input, shape index: {}]
  %s7 = inlined_call_operand.hbm [shape: f32[7,128], index: 7, kind: input, shape index: {}]
  %s8 = inlined_call_operand.vmem [shape: f32[2,128,64], index: 8, kind: output, shape index: {}]
  %s9 = sld [smem:[#allocation0]]
  $region58: #{tpu_custom_call.1} parent=0
    _
  %s11 = ssub.s32 1, %s9
  %s12 = scalar_select 0, %s11, %s9
  $region1: #{tpu_custom_call.1} parent=0
    #allocation3 [shape = 'u8[32768]{0}', space=vmem, size = 0x8000, scoped, tag = 'input window, operand 4, single buffered']
    #allocation4 [shape = 's32[1]{0}', space=sflag, size = 0x4, scoped, tag = 'scoped memory for tpu_custom_call.1']
    #allocation5 [shape = 'u8[32768]{0}', space=vmem, size = 0x8000, scoped, tag = 'input window, operand 5, single buffered']
    #allocation6 [shape = 's32[1]{0}', space=sflag, size = 0x4, scoped, tag = 'scoped memory for tpu_custom_call.1']
    #allocation7 [shape = 'u8[16384]{0}', space=vmem, size = 0x4000, scoped, tag = 'input window, operand 6, single buffered']
    #allocation8 [shape = 'u8[4096]{0}', space=vmem, size = 0x1000, scoped, tag = 'input window, operand 7, single buffered']
    #allocation9 [shape = 's32[1]{0}', space=sflag, size = 0x4, scoped, tag = 'scoped memory for tpu_custom_call.1']
    %13 = vsyncpa [#allocation4], 0
    %14 = vsyncpa [#allocation6], 0
    %15 = vsyncpa [#allocation9], 0
    // Predicated region
    $region2: #{tpu_custom_call.1} parent=1 // pred_check
      _
    $region3: #{tpu_custom_call.1} parent=1 // pred_check_branch
      %17 = sbr.rel (0) target = $region5
    $region4: #{tpu_custom_call.1} parent=1 // pred_region
      _
    $region5: #{tpu_custom_call.1} parent=1 // pred_fallthru
      _
    // Predicated region
    $region6: #{tpu_custom_call.1} parent=1 // pred_check
      _
    $region7: #{tpu_custom_call.1} parent=1 // pred_check_branch
      %19 = sbr.rel (0) target = $region9
    $region8: #{tpu_custom_call.1} parent=1 // pred_region
      _
    $region9: #{tpu_custom_call.1} parent=1 // pred_fallthru
      _
    // Predicated region
    $region10: #{tpu_custom_call.1} parent=1 // pred_check
      _
    $region11: #{tpu_custom_call.1} parent=1 // pred_check_branch
      %21 = sbr.rel (0) target = $region13
    $region12: #{tpu_custom_call.1} parent=1 // pred_region
      _
    $region13: #{tpu_custom_call.1} parent=1 // pred_fallthru
      _
    // Predicated region
    $region14: #{tpu_custom_call.1} parent=1 // pred_check
      _
    $region15: #{tpu_custom_call.1} parent=1 // pred_check_branch
      %23 = sbr.rel (0) target = $region17
    $region16: #{tpu_custom_call.1} parent=1 // pred_region
      _
    $region17: #{tpu_custom_call.1} parent=1 // pred_fallthru
      _
    // Predicated region
    $region18: #{tpu_custom_call.1} parent=1 // pred_check
      _
    $region19: #{tpu_custom_call.1} parent=1 // pred_check_branch
      %25 = sbr.rel (0) target = $region21
    $region20: #{tpu_custom_call.1} parent=1 // pred_region
      %s27 = ssub.s32 1024, 1024
      %28 = vsyncadd [#allocation4], %s27
      %s29 = sshll.u32 [#allocation3], 4
      %s30 = int_to_ptr.vmem [resolvable:$true] %s29
      %35 = dma.hbm_to_vmem [thread:$0]  %s4, 1024, %s30, [#allocation4], 128, 128, 8
    $region21: #{tpu_custom_call.1} parent=1 // pred_fallthru
      _
    // Predicated region
    $region22: #{tpu_custom_call.1} parent=1 // pred_check
      _
    $region23: #{tpu_custom_call.1} parent=1 // pred_check_branch
      %37 = sbr.rel (0) target = $region25
    $region24: #{tpu_custom_call.1} parent=1 // pred_region
      %s39 = ssub.s32 1024, 1024
      %40 = vsyncadd [#allocation6], %s39
      %s41 = sshll.u32 [#allocation5], 4
      %s42 = int_to_ptr.vmem [resolvable:$true] %s41
      %47 = dma.hbm_to_vmem [thread:$0]  %s5, 1024, %s42, [#allocation6], 64, 64, 4
    $region25: #{tpu_custom_call.1} parent=1 // pred_fallthru
      _
    // Predicated region
    $region26: #{tpu_custom_call.1} parent=1 // pred_check
      _
    $region27: #{tpu_custom_call.1} parent=1 // pred_check_branch
      %49 = sbr.rel (0) target = $region29
    $region28: #{tpu_custom_call.1} parent=1 // pred_region
      %s51 = ssub.s32 512, 512
      %52 = vsyncadd [#allocation6], %s51
      %s53 = sshll.u32 [#allocation7], 4
      %s54 = int_to_ptr.vmem [resolvable:$true] %s53
      %59 = dma.hbm_to_vmem [thread:$0]  %s6, 512, %s54, [#allocation6], 64, 64, 4
    $region29: #{tpu_custom_call.1} parent=1 // pred_fallthru
      _
    // Predicated region
    $region30: #{tpu_custom_call.1} parent=1 // pred_check
      _
    $region31: #{tpu_custom_call.1} parent=1 // pred_check_branch
      %61 = sbr.rel (0) target = $region33
    $region32: #{tpu_custom_call.1} parent=1 // pred_region
      %s63 = ssub.s32 128, 128
      %64 = vsyncadd [#allocation9], %s63
      %s66 = sshll.u32 [#allocation8], 4
      %s67 = int_to_ptr.vmem [resolvable:$true] %s66
      %69 = dma.hbm_to_vmem [thread:$0]  %s7, 128, %s67, [#allocation9]
    $region33: #{tpu_custom_call.1} parent=1 // pred_fallthru
      _
    // Predicated region
    $region34: #{tpu_custom_call.1} parent=1 // pred_check
      _
    $region35: #{tpu_custom_call.1} parent=1 // pred_check_branch
      %71 = sbr.rel (0) target = $region37
    $region36: #{tpu_custom_call.1} parent=1 // pred_region
      %72 = dma.done [#allocation4], 1024
    $region37: #{tpu_custom_call.1} parent=1 // pred_fallthru
      _
    // Predicated region
    $region38: #{tpu_custom_call.1} parent=1 // pred_check
      _
    $region39: #{tpu_custom_call.1} parent=1 // pred_check_branch
      %74 = sbr.rel (0) target = $region41
    $region40: #{tpu_custom_call.1} parent=1 // pred_region
      %75 = dma.done [#allocation6], 1024
    $region41: #{tpu_custom_call.1} parent=1 // pred_fallthru
      _
    // Predicated region
    $region42: #{tpu_custom_call.1} parent=1 // pred_check
      _
    $region43: #{tpu_custom_call.1} parent=1 // pred_check_branch
      %77 = sbr.rel (0) target = $region45
    $region44: #{tpu_custom_call.1} parent=1 // pred_region
      %78 = dma.done [#allocation6], 512
    $region45: #{tpu_custom_call.1} parent=1 // pred_fallthru
      _
    // Predicated region
    $region46: #{tpu_custom_call.1} parent=1 // pred_check
      _
    $region47: #{tpu_custom_call.1} parent=1 // pred_check_branch
      %80 = sbr.rel (0) target = $region49
    $region48: #{tpu_custom_call.1} parent=1 // pred_region
      %81 = dma.done [#allocation9], 128
    $region49: #{tpu_custom_call.1} parent=1 // pred_fallthru
      _
    %v83 = vld [vmem:[%s0] sm:$0xff]
    %v84 = vld [vmem:[%s0 + $0x8] sm:$0xff]
    %v85 = vld [vmem:[%s0 + $0x10] sm:$0xff]
    %v86 = vld [vmem:[%s0 + $0x18] sm:$0xff]
    %v87 = vld [vmem:[%s0 + $0x20] sm:$0xff]
    %v88 = vld [vmem:[%s0 + $0x28] sm:$0xff]
    %v89 = vld [vmem:[%s0 + $0x30] sm:$0xff]
    %v90 = vld [vmem:[%s0 + $0x38] sm:$0xff]
    %v91 = vld [vmem:[%s0 + $0x40] sm:$0xff]
    %v92 = vld [vmem:[%s0 + $0x48] sm:$0xff]
    %v93 = vld [vmem:[%s0 + $0x50] sm:$0xff]
    %v94 = vld [vmem:[%s0 + $0x58] sm:$0xff]
    %v95 = vld [vmem:[%s0 + $0x60] sm:$0xff]
    %v96 = vld [vmem:[%s0 + $0x68] sm:$0xff]
    %v97 = vld [vmem:[%s0 + $0x70] sm:$0xff]
    %v98 = vld [vmem:[%s0 + $0x78] sm:$0xff]
    %v99 = vld [vmem:[%s0 + $0x80] sm:$0xff]
    %v100 = vld [vmem:[%s0 + $0x88] sm:$0xff]
    %v101 = vld [vmem:[%s0 + $0x90] sm:$0xff]
    %v102 = vld [vmem:[%s0 + $0x98] sm:$0xff]
    %v103 = vld [vmem:[%s0 + $0xa0] sm:$0xff]
    %v104 = vld [vmem:[%s0 + $0xa8] sm:$0xff]
    %v105 = vld [vmem:[%s0 + $0xb0] sm:$0xff]
    %v106 = vld [vmem:[%s0 + $0xb8] sm:$0xff]
    %v107 = vld [vmem:[%s0 + $0xc0] sm:$0xff]
    %v108 = vld [vmem:[%s0 + $0xc8] sm:$0xff]
    %v109 = vld [vmem:[%s0 + $0xd0] sm:$0xff]
    %v110 = vld [vmem:[%s0 + $0xd8] sm:$0xff]
    %v111 = vld [vmem:[%s0 + $0xe0] sm:$0xff]
    %v112 = vld [vmem:[%s0 + $0xe8] sm:$0xff]
    %v113 = vld [vmem:[%s0 + $0xf0] sm:$0xff]
    %v114 = vld [vmem:[%s0 + $0xf8] sm:$0xff]
    %v115 = vpack.c.bf16 %v84, %v83
    %v116 = vpack.c.bf16 %v86, %v85
    %v117 = vpack.c.bf16 %v88, %v87
    %v118 = vpack.c.bf16 %v90, %v89
    %v119 = vpack.c.bf16 %v92, %v91
    %v120 = vpack.c.bf16 %v94, %v93
    %v121 = vpack.c.bf16 %v96, %v95
    %v122 = vpack.c.bf16 %v98, %v97
    %v123 = vpack.c.bf16 %v100, %v99
    %v124 = vpack.c.bf16 %v102, %v101
    %v125 = vpack.c.bf16 %v104, %v103
    %v126 = vpack.c.bf16 %v106, %v105
    %v127 = vpack.c.bf16 %v108, %v107
    %v128 = vpack.c.bf16 %v110, %v109
    %v129 = vpack.c.bf16 %v112, %v111
    %v130 = vpack.c.bf16 %v114, %v113
    %v131 = vld [vmem:[%s1] sm:$0xff]
    %v132 = vld [vmem:[%s1 + $0x8] sm:$0xff]
    %v133 = vld [vmem:[%s1 + $0x10] sm:$0xff]
    %v134 = vld [vmem:[%s1 + $0x18] sm:$0xff]
    %v135 = vld [vmem:[%s1 + $0x20] sm:$0xff]
    %v136 = vld [vmem:[%s1 + $0x28] sm:$0xff]
    %v137 = vld [vmem:[%s1 + $0x30] sm:$0xff]
    %v138 = vld [vmem:[%s1 + $0x38] sm:$0xff]
    %v139 = vld [vmem:[%s1 + $0x40] sm:$0xff]
    %v140 = vld [vmem:[%s1 + $0x48] sm:$0xff]
    %v141 = vld [vmem:[%s1 + $0x50] sm:$0xff]
    %v142 = vld [vmem:[%s1 + $0x58] sm:$0xff]
    %v143 = vld [vmem:[%s1 + $0x60] sm:$0xff]
    %v144 = vld [vmem:[%s1 + $0x68] sm:$0xff]
    %v145 = vld [vmem:[%s1 + $0x70] sm:$0xff]
    %v146 = vld [vmem:[%s1 + $0x78] sm:$0xff]
    %v147 = vld [vmem:[%s1 + $0x80] sm:$0xff]
    %v148 = vld [vmem:[%s1 + $0x88] sm:$0xff]
    %v149 = vld [vmem:[%s1 + $0x90] sm:$0xff]
    %v150 = vld [vmem:[%s1 + $0x98] sm:$0xff]
    %v151 = vld [vmem:[%s1 + $0xa0] sm:$0xff]
    %v152 = vld [vmem:[%s1 + $0xa8] sm:$0xff]
    %v153 = vld [vmem:[%s1 + $0xb0] sm:$0xff]
    %v154 = vld [vmem:[%s1 + $0xb8] sm:$0xff]
    %v155 = vld [vmem:[%s1 + $0xc0] sm:$0xff]
    %v156 = vld [vmem:[%s1 + $0xc8] sm:$0xff]
    %v157 = vld [vmem:[%s1 + $0xd0] sm:$0xff]
    %v158 = vld [vmem:[%s1 + $0xd8] sm:$0xff]
    %v159 = vld [vmem:[%s3] sm:$0xf]
    %v160 = vld [vmem:[%s3 + $0x4] sm:$0xf]
    %v161 = vld [vmem:[%s3 + $0x8] sm:$0xf]
    %v162 = vld [vmem:[%s3 + $0xc] sm:$0xf]
    %v163 = vld [vmem:[%s3 + $0x10] sm:$0xf]
    %v164 = vld [vmem:[%s3 + $0x14] sm:$0xf]
    %v165 = vld [vmem:[%s3 + $0x18] sm:$0xf]
    %v166 = vld [vmem:[%s3 + $0x1c] sm:$0xf]
    %v167 = vld [vmem:[%s3 + $0x20] sm:$0xf]
    %v168 = vld [vmem:[%s3 + $0x24] sm:$0xf]
    %v169 = vld [vmem:[%s3 + $0x28] sm:$0xf]
    %v170 = vld [vmem:[%s3 + $0x2c] sm:$0xf]
    %v171 = vld [vmem:[%s3 + $0x30] sm:$0xf]
    %v172 = vld [vmem:[%s3 + $0x34] sm:$0xf]
    %v173 = vld [vmem:[%s3 + $0x38] sm:$0xf]
    %v174 = vld [vmem:[%s3 + $0x3c] sm:$0xf]
    %v175 = vld [vmem:[%s3 + $0x40] sm:$0xf]
    %v176 = vld [vmem:[%s3 + $0x44] sm:$0xf]
    %v177 = vld [vmem:[%s3 + $0x48] sm:$0xf]
    %v178 = vld [vmem:[%s3 + $0x4c] sm:$0xf]
    %v179 = vld [vmem:[%s3 + $0x50] sm:$0xf]
    %v180 = vld [vmem:[%s3 + $0x54] sm:$0xf]
    %v181 = vld [vmem:[%s3 + $0x58] sm:$0xf]
    %v182 = vld [vmem:[%s3 + $0x5c] sm:$0xf]
    %v183 = vld [vmem:[%s3 + $0x60] sm:$0xf]
    %v184 = vld [vmem:[%s3 + $0x64] sm:$0xf]
    %v185 = vld [vmem:[%s3 + $0x68] sm:$0xf]
    %v186 = vld [vmem:[%s3 + $0x6c] sm:$0xf]
    %v187 = vld [vmem:[%s3 + $0x70] sm:$0xf]
    %v188 = vld [vmem:[%s3 + $0x74] sm:$0xf]
    %v189 = vld [vmem:[%s3 + $0x78] sm:$0xf]
    %v190 = vld [vmem:[%s3 + $0x7c] sm:$0xf]
    %v191 = vld [vmem:[%s3 + $0x80] sm:$0xf]
    %v192 = vld [vmem:[%s3 + $0x84] sm:$0xf]
    %v193 = vld [vmem:[%s3 + $0x88] sm:$0xf]
    %v194 = vld [vmem:[%s3 + $0x8c] sm:$0xf]
    %v195 = vld [vmem:[%s3 + $0x90] sm:$0xf]
    %v196 = vld [vmem:[%s3 + $0x94] sm:$0xf]
    %v197 = vld [vmem:[%s3 + $0x98] sm:$0xf]
    %v198 = vld [vmem:[%s3 + $0x9c] sm:$0xf]
    %v199 = vld [vmem:[%s3 + $0xa0] sm:$0xf]
    %v200 = vld [vmem:[%s3 + $0xa4] sm:$0xf]
    %v201 = vld [vmem:[%s3 + $0xa8] sm:$0xf]
    %v202 = vld [vmem:[%s3 + $0xac] sm:$0xf]
    %v203 = vld [vmem:[%s3 + $0xb0] sm:$0xf]
    %v204 = vld [vmem:[%s3 + $0xb4] sm:$0xf]
    %v205 = vld [vmem:[%s3 + $0xb8] sm:$0xf]
    %v206 = vld [vmem:[%s3 + $0xbc] sm:$0xf]
    %v207 = vld [vmem:[%s3 + $0xc0] sm:$0xf]
    %v208 = vld [vmem:[%s3 + $0xc4] sm:$0xf]
    %v209 = vld [vmem:[%s3 + $0xc8] sm:$0xf]
    %v210 = vld [vmem:[%s3 + $0xcc] sm:$0xf]
    %v211 = vld [vmem:[%s3 + $0xd0] sm:$0xf]
    %v212 = vld [vmem:[%s3 + $0xd4] sm:$0xf]
    %v213 = vld [vmem:[%s3 + $0xd8] sm:$0xf]
    %v214 = vld [vmem:[%s3 + $0xdc] sm:$0xf]
    %v215 = vld [vmem:[%s3 + $0xe0] sm:$0xf]
    %v216 = vld [vmem:[%s3 + $0xe4] sm:$0xf]
    %v217 = vld [vmem:[%s3 + $0xe8] sm:$0xf]
    %v218 = vld [vmem:[%s3 + $0xec] sm:$0xf]
    %v219 = vld [vmem:[%s3 + $0xf0] sm:$0xf]
    %v220 = vld [vmem:[%s3 + $0xf4] sm:$0xf]
    %v221 = vld [vmem:[%s3 + $0xf8] sm:$0xf]
    %v222 = vld [vmem:[%s3 + $0xfc] sm:$0xf]
    %v251 = vunpack.c.l.b16 %v131
    %v252 = vunpack.c.h.b16 %v131
    %v253 = vunpack.c.l.b16 %v132
    %v254 = vunpack.c.h.b16 %v132
    %v255 = vunpack.c.l.b16 %v133
    %v256 = vunpack.c.h.b16 %v133
    %v257 = vunpack.c.l.b16 %v134
    %v258 = vunpack.c.h.b16 %v134
    %v259 = vunpack.c.l.b16 %v135
    %v260 = vunpack.c.h.b16 %v135
    %v261 = vunpack.c.l.b16 %v136
    %v262 = vunpack.c.h.b16 %v136
    %v263 = vunpack.c.l.b16 %v137
    %v264 = vunpack.c.h.b16 %v137
    %v265 = vunpack.c.l.b16 %v138
    %v266 = vunpack.c.h.b16 %v138
    %v267 = vunpack.c.l.b16 %v139
    %v268 = vunpack.c.h.b16 %v139
    %v269 = vunpack.c.l.b16 %v140
    %v270 = vunpack.c.h.b16 %v140
    %v271 = vunpack.c.l.b16 %v141
    %v272 = vunpack.c.h.b16 %v141
    %v273 = vunpack.c.l.b16 %v142
    %v274 = vunpack.c.h.b16 %v142
    %v275 = vunpack.c.l.b16 %v143
    %v276 = vunpack.c.h.b16 %v143
    %v277 = vunpack.c.l.b16 %v144
    %v278 = vunpack.c.h.b16 %v144
    %v279 = vunpack.c.l.b16 %v145
    %v280 = vunpack.c.h.b16 %v145
    %v281 = vunpack.c.l.b16 %v146
    %v282 = vunpack.c.h.b16 %v146
    %v283 = vunpack.c.l.b16 %v147
    %v284 = vunpack.c.h.b16 %v147
    %v285 = vunpack.c.l.b16 %v148
    %v286 = vunpack.c.h.b16 %v148
    %v287 = vunpack.c.l.b16 %v149
    %v288 = vunpack.c.h.b16 %v149
    %v289 = vunpack.c.l.b16 %v150
    %v290 = vunpack.c.h.b16 %v150
    %v291 = vunpack.c.l.b16 %v151
    %v292 = vunpack.c.h.b16 %v151
    %v293 = vunpack.c.l.b16 %v152
    %v294 = vunpack.c.h.b16 %v152
    %v295 = vunpack.c.l.b16 %v153
    %v296 = vunpack.c.h.b16 %v153
    %v297 = vunpack.c.l.b16 %v154
    %v298 = vunpack.c.h.b16 %v154
    %v299 = vunpack.c.l.b16 %v155
    %v300 = vunpack.c.h.b16 %v155
    %v301 = vunpack.c.l.b16 %v156
    %v302 = vunpack.c.h.b16 %v156
    %v303 = vunpack.c.l.b16 %v157
    %v304 = vunpack.c.h.b16 %v157
    %v305 = vunpack.c.l.b16 %v158
    %v306 = vunpack.c.h.b16 %v158
    %v307 = vpack.c.b16 %v255, %v251
    %v308 = vpack.c.b16 %v256, %v252
    %v309 = vpack.c.b16 %v257, %v253
    %v310 = vpack.c.b16 %v258, %v254
    %v311 = vpack.c.b16 %v263, %v259
    %v312 = vpack.c.b16 %v264, %v260
    %v313 = vpack.c.b16 %v265, %v261
    %v314 = vpack.c.b16 %v266, %v262
    %v315 = vpack.c.b16 %v271, %v267
    %v316 = vpack.c.b16 %v272, %v268
    %v317 = vpack.c.b16 %v273, %v269
    %v318 = vpack.c.b16 %v274, %v270
    %v319 = vpack.c.b16 %v279, %v275
    %v320 = vpack.c.b16 %v280, %v276
    %v321 = vpack.c.b16 %v281, %v277
    %v322 = vpack.c.b16 %v282, %v278
    %v323 = vpack.c.b16 %v287, %v283
    %v324 = vpack.c.b16 %v288, %v284
    %v325 = vpack.c.b16 %v289, %v285
    %v326 = vpack.c.b16 %v290, %v286
    %v327 = vpack.c.b16 %v295, %v291
    %v328 = vpack.c.b16 %v296, %v292
    %v329 = vpack.c.b16 %v297, %v293
    %v330 = vpack.c.b16 %v298, %v294
    %v331 = vpack.c.b16 %v303, %v299
    %v332 = vpack.c.b16 %v304, %v300
    %v333 = vpack.c.b16 %v305, %v301
    %v334 = vpack.c.b16 %v306, %v302
    %v427 = vunpack.c.l.b16 %v159
    %v428 = vunpack.c.l.b16 %v160
    %v429 = vunpack.c.l.b16 %v161
    %v430 = vunpack.c.l.b16 %v162
    %v431 = vunpack.c.l.b16 %v163
    %v432 = vunpack.c.l.b16 %v164
    %v433 = vunpack.c.l.b16 %v165
    %v434 = vunpack.c.l.b16 %v166
    %v435 = vunpack.c.l.b16 %v167
    %v436 = vunpack.c.l.b16 %v168
    %v437 = vunpack.c.l.b16 %v169
    %v438 = vunpack.c.l.b16 %v170
    %v439 = vunpack.c.l.b16 %v171
    %v440 = vunpack.c.l.b16 %v172
    %v441 = vunpack.c.l.b16 %v173
    %v442 = vunpack.c.l.b16 %v174
    %v443 = vunpack.c.l.b16 %v175
    %v444 = vunpack.c.l.b16 %v176
    %v445 = vunpack.c.l.b16 %v177
    %v446 = vunpack.c.l.b16 %v178
    %v447 = vunpack.c.l.b16 %v179
    %v448 = vunpack.c.l.b16 %v180
    %v449 = vunpack.c.l.b16 %v181
    %v450 = vunpack.c.l.b16 %v182
    %v451 = vunpack.c.l.b16 %v183
    %v452 = vunpack.c.l.b16 %v184
    %v453 = vunpack.c.l.b16 %v185
    %v454 = vunpack.c.l.b16 %v186
    %v455 = vunpack.c.l.b16 %v187
    %v456 = vunpack.c.l.b16 %v188
    %v457 = vunpack.c.l.b16 %v189
    %v458 = vunpack.c.l.b16 %v190
    %v459 = vunpack.c.l.b16 %v191
    %v460 = vunpack.c.l.b16 %v192
    %v461 = vunpack.c.l.b16 %v193
    %v462 = vunpack.c.l.b16 %v194
    %v463 = vunpack.c.l.b16 %v195
    %v464 = vunpack.c.l.b16 %v196
    %v465 = vunpack.c.l.b16 %v197
    %v466 = vunpack.c.l.b16 %v198
    %v467 = vunpack.c.l.b16 %v199
    %v468 = vunpack.c.l.b16 %v200
    %v469 = vunpack.c.l.b16 %v201
    %v470 = vunpack.c.l.b16 %v202
    %v471 = vunpack.c.l.b16 %v203
    %v472 = vunpack.c.l.b16 %v204
    %v473 = vunpack.c.l.b16 %v205
    %v474 = vunpack.c.l.b16 %v206
    %v475 = vunpack.c.l.b16 %v207
    %v476 = vunpack.c.l.b16 %v208
    %v477 = vunpack.c.l.b16 %v209
    %v478 = vunpack.c.l.b16 %v210
    %v479 = vunpack.c.l.b16 %v211
    %v480 = vunpack.c.l.b16 %v212
    %v481 = vunpack.c.l.b16 %v213
    %v482 = vunpack.c.l.b16 %v214
    %v483 = vunpack.c.l.b16 %v215
    %v484 = vunpack.c.l.b16 %v216
    %v485 = vunpack.c.l.b16 %v217
    %v486 = vunpack.c.l.b16 %v218
    %v487 = vunpack.c.l.b16 %v219
    %v488 = vunpack.c.l.b16 %v220
    %v489 = vunpack.c.l.b16 %v221
    %v490 = vunpack.c.l.b16 %v222
    %v491 = vpack.c.b16 %v428, %v427
    %v492 = vpack.c.b16 %v430, %v429
    %v493 = vpack.c.b16 %v432, %v431
    %v494 = vpack.c.b16 %v434, %v433
    %v495 = vpack.c.b16 %v436, %v435
    %v496 = vpack.c.b16 %v438, %v437
    %v497 = vpack.c.b16 %v440, %v439
    %v498 = vpack.c.b16 %v442, %v441
    %v499 = vpack.c.b16 %v444, %v443
    %v500 = vpack.c.b16 %v446, %v445
    %v501 = vpack.c.b16 %v448, %v447
    %v502 = vpack.c.b16 %v450, %v449
    %v503 = vpack.c.b16 %v452, %v451
    %v504 = vpack.c.b16 %v454, %v453
    %v505 = vpack.c.b16 %v456, %v455
    %v506 = vpack.c.b16 %v458, %v457
    %v507 = vpack.c.b16 %v460, %v459
    %v508 = vpack.c.b16 %v462, %v461
    %v509 = vpack.c.b16 %v464, %v463
    %v510 = vpack.c.b16 %v466, %v465
    %v511 = vpack.c.b16 %v468, %v467
    %v512 = vpack.c.b16 %v470, %v469
    %v513 = vpack.c.b16 %v472, %v471
    %v514 = vpack.c.b16 %v474, %v473
    %v515 = vpack.c.b16 %v476, %v475
    %v516 = vpack.c.b16 %v478, %v477
    %v517 = vpack.c.b16 %v480, %v479
    %v518 = vpack.c.b16 %v482, %v481
    %v519 = vpack.c.b16 %v484, %v483
    %v520 = vpack.c.b16 %v486, %v485
    %v521 = vpack.c.b16 %v488, %v487
    %v522 = vpack.c.b16 %v490, %v489
    %555 = vmatprep.subr.bf16.mxu0 0
    %556 = vmatpush1.bf16.msra.mxu0 %v498
    %557 = vmatprep.subr.bf16.mxu0 0
    %558 = vmatpush1.bf16.msra.mxu0 %v497
    %559 = vmatprep.subr.bf16.mxu0 0
    %560 = vmatpush1.bf16.msra.mxu0 %v496
    %561 = vmatprep.subr.bf16.mxu0 0
    %562 = vmatpush1.bf16.msra.mxu0 %v495
    %563 = vmatprep.subr.bf16.mxu0 0
    %564 = vmatpush1.bf16.msra.mxu0 %v494
    %565 = vmatprep.subr.bf16.mxu0 0
    %566 = vmatpush1.bf16.msra.mxu0 %v493
    %567 = vmatprep.subr.bf16.mxu0 0
    %568 = vmatpush1.bf16.msra.mxu0 %v492
    %569 = vmatprep.subr.bf16.mxu0 0
    %570 = vmatpush1.bf16.msra.mxu0 %v491
    %571 = vmatprep.subr.bf16.mxu0 0
    %572 = vmatpush2.bf16.msra.mxu0 %v506
    %573 = vmatprep.subr.bf16.mxu0 0
    %574 = vmatpush2.bf16.msra.mxu0 %v505
    %575 = vmatprep.subr.bf16.mxu0 0
    %576 = vmatpush2.bf16.msra.mxu0 %v504
    %577 = vmatprep.subr.bf16.mxu0 0
    %578 = vmatpush2.bf16.msra.mxu0 %v503
    %579 = vmatprep.subr.bf16.mxu0 0
    %580 = vmatpush2.bf16.msra.mxu0 %v502
    %581 = vmatprep.subr.bf16.mxu0 0
    %582 = vmatpush2.bf16.msra.mxu0 %v501
    %583 = vmatprep.subr.bf16.mxu0 0
    %584 = vmatpush2.bf16.msra.mxu0 %v500
    %585 = vmatprep.subr.bf16.mxu0 0
    %586 = vmatpush2.bf16.msra.mxu0 %v499
    %587 = vmatprep.mubr.bf16.mxu0 %v308
    %588 = vmatmul.mubr.bf16.gmra.mxu0 %v307
    %v589 = vpop.f32.mrf.mxu0
    %v590 = vadd.f32 0.0, %v589
    %v591 = vpop.f32.mrf.mxu0
    %v592 = vpop.f32.mrf.mxu0
    %v593 = vadd.f32 0.0, %v592
    %v594 = vpop.f32.mrf.mxu0
    %595 = vmatprep.mubr.bf16.mxu0 %v312
    %596 = vmatmul.mubr.bf16.gmra.mxu0 %v311
    %v597 = vpop.f32.mrf.mxu0
    %v598 = vadd.f32 0.0, %v597
    %v599 = vpop.f32.mrf.mxu0
    %v600 = vpop.f32.mrf.mxu0
    %v601 = vadd.f32 0.0, %v600
    %v602 = vpop.f32.mrf.mxu0
    %603 = vmatprep.mubr.bf16.mxu0 %v316
    %604 = vmatmul.mubr.bf16.gmra.mxu0 %v315
    %v605 = vpop.f32.mrf.mxu0
    %v606 = vadd.f32 0.0, %v605
    %v607 = vpop.f32.mrf.mxu0
    %v608 = vpop.f32.mrf.mxu0
    %v609 = vadd.f32 0.0, %v608
    %v610 = vpop.f32.mrf.mxu0
    %611 = vmatprep.mubr.bf16.mxu0 %v320
    %612 = vmatmul.mubr.bf16.gmra.mxu0 %v319
    %v613 = vpop.f32.mrf.mxu0
    %v614 = vadd.f32 0.0, %v613
    %v615 = vpop.f32.mrf.mxu0
    %v616 = vpop.f32.mrf.mxu0
    %v617 = vadd.f32 0.0, %v616
    %v618 = vpop.f32.mrf.mxu0
    %619 = vmatprep.mubr.bf16.mxu0 %v324
    %620 = vmatmul.mubr.bf16.gmra.mxu0 %v323
    %v621 = vpop.f32.mrf.mxu0
    %v622 = vadd.f32 0.0, %v621
    %v623 = vpop.f32.mrf.mxu0
    %v624 = vpop.f32.mrf.mxu0
    %v625 = vadd.f32 0.0, %v624
    %v626 = vpop.f32.mrf.mxu0
    %627 = vmatprep.mubr.bf16.mxu0 %v328
    %628 = vmatmul.mubr.bf16.gmra.mxu0 %v327
    %v629 = vpop.f32.mrf.mxu0
    %v630 = vadd.f32 0.0, %v629
    %v631 = vpop.f32.mrf.mxu0
    %v632 = vpop.f32.mrf.mxu0
    %v633 = vadd.f32 0.0, %v632
    %v634 = vpop.f32.mrf.mxu0
    %635 = vmatprep.mubr.bf16.mxu0 %v332
    %636 = vmatmul.mubr.bf16.gmra.mxu0 %v331
    %v637 = vpop.f32.mrf.mxu0
    %v638 = vadd.f32 0.0, %v637
    %v639 = vpop.f32.mrf.mxu0
    %v640 = vpop.f32.mrf.mxu0
    %v641 = vadd.f32 0.0, %v640
    %v642 = vpop.f32.mrf.mxu0
    %643 = vdwg.mxu0
    %644 = vmatprep.subr.bf16.mxu0 0
    %645 = vmatpush1.bf16.msra.mxu0 %v514
    %646 = vmatprep.subr.bf16.mxu0 0
    %647 = vmatpush1.bf16.msra.mxu0 %v513
    %648 = vmatprep.subr.bf16.mxu0 0
    %649 = vmatpush1.bf16.msra.mxu0 %v512
    %650 = vmatprep.subr.bf16.mxu0 0
    %651 = vmatpush1.bf16.msra.mxu0 %v511
    %652 = vmatprep.subr.bf16.mxu0 0
    %653 = vmatpush1.bf16.msra.mxu0 %v510
    %654 = vmatprep.subr.bf16.mxu0 0
    %655 = vmatpush1.bf16.msra.mxu0 %v509
    %656 = vmatprep.subr.bf16.mxu0 0
    %657 = vmatpush1.bf16.msra.mxu0 %v508
    %658 = vmatprep.subr.bf16.mxu0 0
    %659 = vmatpush1.bf16.msra.mxu0 %v507
    %660 = vmatprep.subr.bf16.mxu0 0
    %661 = vmatpush2.bf16.msra.mxu0 %v522
    %662 = vmatprep.subr.bf16.mxu0 0
    %663 = vmatpush2.bf16.msra.mxu0 %v521
    %664 = vmatprep.subr.bf16.mxu0 0
    %665 = vmatpush2.bf16.msra.mxu0 %v520
    %666 = vmatprep.subr.bf16.mxu0 0
    %667 = vmatpush2.bf16.msra.mxu0 %v519
    %668 = vmatprep.subr.bf16.mxu0 0
    %669 = vmatpush2.bf16.msra.mxu0 %v518
    %670 = vmatprep.subr.bf16.mxu0 0
    %671 = vmatpush2.bf16.msra.mxu0 %v517
    %672 = vmatprep.subr.bf16.mxu0 0
    %673 = vmatpush2.bf16.msra.mxu0 %v516
    %674 = vmatprep.subr.bf16.mxu0 0
    %675 = vmatpush2.bf16.msra.mxu0 %v515
    %676 = vmatprep.mubr.bf16.mxu0 %v310
    %677 = vmatmul.mubr.bf16.gmra.mxu0 %v309
    %v678 = vpop.f32.mrf.mxu0
    %v679 = vadd.f32 %v590, %v678
    %v680 = vpop.f32.mrf.mxu0
    %v681 = vpop.f32.mrf.mxu0
    %v682 = vadd.f32 %v593, %v681
    %v683 = vpop.f32.mrf.mxu0
    %684 = vmatprep.mubr.bf16.mxu0 %v314
    %685 = vmatmul.mubr.bf16.gmra.mxu0 %v313
    %v686 = vpop.f32.mrf.mxu0
    %v687 = vadd.f32 %v598, %v686
    %v688 = vpop.f32.mrf.mxu0
    %v689 = vpop.f32.mrf.mxu0
    %v690 = vadd.f32 %v601, %v689
    %v691 = vpop.f32.mrf.mxu0
    %692 = vmatprep.mubr.bf16.mxu0 %v318
    %693 = vmatmul.mubr.bf16.gmra.mxu0 %v317
    %v694 = vpop.f32.mrf.mxu0
    %v695 = vadd.f32 %v606, %v694
    %v696 = vpop.f32.mrf.mxu0
    %v697 = vpop.f32.mrf.mxu0
    %v698 = vadd.f32 %v609, %v697
    %v699 = vpop.f32.mrf.mxu0
    %700 = vmatprep.mubr.bf16.mxu0 %v322
    %701 = vmatmul.mubr.bf16.gmra.mxu0 %v321
    %v702 = vpop.f32.mrf.mxu0
    %v703 = vadd.f32 %v614, %v702
    %v704 = vpop.f32.mrf.mxu0
    %v705 = vpop.f32.mrf.mxu0
    %v706 = vadd.f32 %v617, %v705
    %v707 = vpop.f32.mrf.mxu0
    %708 = vmatprep.mubr.bf16.mxu0 %v326
    %709 = vmatmul.mubr.bf16.gmra.mxu0 %v325
    %v710 = vpop.f32.mrf.mxu0
    %v711 = vadd.f32 %v622, %v710
    %v712 = vpop.f32.mrf.mxu0
    %v713 = vpop.f32.mrf.mxu0
    %v714 = vadd.f32 %v625, %v713
    %v715 = vpop.f32.mrf.mxu0
    %716 = vmatprep.mubr.bf16.mxu0 %v330
    %717 = vmatmul.mubr.bf16.gmra.mxu0 %v329
    %v718 = vpop.f32.mrf.mxu0
    %v719 = vadd.f32 %v630, %v718
    %v720 = vpop.f32.mrf.mxu0
    %v721 = vpop.f32.mrf.mxu0
    %v722 = vadd.f32 %v633, %v721
    %v723 = vpop.f32.mrf.mxu0
    %724 = vmatprep.mubr.bf16.mxu0 %v334
    %725 = vmatmul.mubr.bf16.gmra.mxu0 %v333
    %v726 = vpop.f32.mrf.mxu0
    %v727 = vadd.f32 %v638, %v726
    %v728 = vpop.f32.mrf.mxu0
    %v729 = vpop.f32.mrf.mxu0
    %v730 = vadd.f32 %v641, %v729
    %v731 = vpop.f32.mrf.mxu0
    %732 = vdwg.mxu0
    %v733 = vpack.c.bf16 %v682, %v679
    %v734 = vpack.c.bf16 %v690, %v687
    %v735 = vpack.c.bf16 %v698, %v695
    %v736 = vpack.c.bf16 %v706, %v703
    %v737 = vpack.c.bf16 %v714, %v711
    %v738 = vpack.c.bf16 %v722, %v719
    %v739 = vpack.c.bf16 %v730, %v727
    %v740 = vld [vmem:[%s2] sm:$0xf]
    %v741 = vld [vmem:[%s2 + $0x4] sm:$0xf]
    %v742 = vld [vmem:[%s2 + $0x8] sm:$0xf]
    %v743 = vld [vmem:[%s2 + $0xc] sm:$0xf]
    %v744 = vld [vmem:[%s2 + $0x10] sm:$0xf]
    %v745 = vld [vmem:[%s2 + $0x14] sm:$0xf]
    %v746 = vld [vmem:[%s2 + $0x18] sm:$0xf]
    %v747 = vld [vmem:[%s2 + $0x1c] sm:$0xf]
    %v748 = vld [vmem:[%s2 + $0x20] sm:$0xf]
    %v749 = vld [vmem:[%s2 + $0x24] sm:$0xf]
    %v750 = vld [vmem:[%s2 + $0x28] sm:$0xf]
    %v751 = vld [vmem:[%s2 + $0x2c] sm:$0xf]
    %v752 = vld [vmem:[%s2 + $0x30] sm:$0xf]
    %v753 = vld [vmem:[%s2 + $0x34] sm:$0xf]
    %v754 = vld [vmem:[%s2 + $0x38] sm:$0xf]
    %v755 = vld [vmem:[%s2 + $0x3c] sm:$0xf]
    %v772 = vunpack.c.l.b16 %v740
    %v773 = vunpack.c.l.b16 %v741
    %v774 = vunpack.c.l.b16 %v742
    %v775 = vunpack.c.l.b16 %v743
    %v776 = vunpack.c.l.b16 %v744
    %v777 = vunpack.c.l.b16 %v745
    %v778 = vunpack.c.l.b16 %v746
    %v779 = vunpack.c.l.b16 %v747
    %v780 = vunpack.c.l.b16 %v748
    %v781 = vunpack.c.l.b16 %v749
    %v782 = vunpack.c.l.b16 %v750
    %v783 = vunpack.c.l.b16 %v751
    %v784 = vunpack.c.l.b16 %v752
    %v785 = vunpack.c.l.b16 %v753
    %v786 = vunpack.c.l.b16 %v754
    %v787 = vunpack.c.l.b16 %v755
    %v788 = vpack.c.b16 %v773, %v772
    %v789 = vpack.c.b16 %v775, %v774
    %v790 = vpack.c.b16 %v777, %v776
    %v791 = vpack.c.b16 %v779, %v778
    %v792 = vpack.c.b16 %v781, %v780
    %v793 = vpack.c.b16 %v783, %v782
    %v794 = vpack.c.b16 %v785, %v784
    %v795 = vpack.c.b16 %v787, %v786
    %vm796 = vcmask 457728
    %v798 = vsel %vm796, %v788, 0
    %v801 = vsel %vm796, %v789, 0
    %v804 = vsel %vm796, %v790, 0
    %v807 = vsel %vm796, %v791, 0
    %v810 = vsel %vm796, %v792, 0
    %v813 = vsel %vm796, %v793, 0
    %v816 = vsel %vm796, %v794, 0
    %v819 = vsel %vm796, %v795, 0
    %vm821 = vcmask 1043456
    %v823 = vsel %vm821, %v736, 0
    %825 = vmatprep.subr.bf16.mxu0 0
    %826 = vmatpush1.bf16.msra.mxu0 0
    %827 = vmatprep.subr.bf16.mxu0 0
    %828 = vmatpush1.bf16.msra.mxu0 0
    %829 = vmatprep.subr.bf16.mxu0 0
    %830 = vmatpush1.bf16.msra.mxu0 0
    %831 = vmatprep.subr.bf16.mxu0 0
    %832 = vmatpush1.bf16.msra.mxu0 0
    %833 = vmatprep.subr.bf16.mxu0 0
    %834 = vmatpush1.bf16.msra.mxu0 %v823
    %835 = vmatprep.subr.bf16.mxu0 0
    %836 = vmatpush1.bf16.msra.mxu0 %v735
    %837 = vmatprep.subr.bf16.mxu0 0
    %838 = vmatpush1.bf16.msra.mxu0 %v734
    %839 = vmatprep.subr.bf16.mxu0 0
    %840 = vmatpush1.bf16.msra.mxu0 %v733
    %841 = vmatprep.subr.bf16.mxu0 0
    %842 = vmatpush2.bf16.msra.mxu0 0
    %843 = vmatprep.subr.bf16.mxu0 0
    %844 = vmatpush2.bf16.msra.mxu0 0
    %845 = vmatprep.subr.bf16.mxu0 0
    %846 = vmatpush2.bf16.msra.mxu0 0
    %847 = vmatprep.subr.bf16.mxu0 0
    %848 = vmatpush2.bf16.msra.mxu0 0
    %849 = vmatprep.subr.bf16.mxu0 0
    %850 = vmatpush2.bf16.msra.mxu0 0
    %851 = vmatprep.subr.bf16.mxu0 0
    %852 = vmatpush2.bf16.msra.mxu0 0
    %853 = vmatprep.subr.bf16.mxu0 0
    %854 = vmatpush2.bf16.msra.mxu0 0
    %855 = vmatprep.subr.bf16.mxu0 0
    %856 = vmatpush2.bf16.msra.mxu0 0
    %857 = vmatprep.mubr.bf16.mxu0 0
    %858 = vmatmul.mubr.bf16.gmra.mxu0 %v798
    %v859 = vpop.f32.mrf.mxu0
    %v860 = vadd.f32 0.0, %v859
    %v861 = vpop.f32.mrf.mxu0
    %v862 = vpop.f32.mrf.mxu0
    %v863 = vadd.f32 0.0, %v862
    %v864 = vpop.f32.mrf.mxu0
    %865 = vmatprep.mubr.bf16.mxu0 0
    %866 = vmatmul.mubr.bf16.gmra.mxu0 %v801
    %v867 = vpop.f32.mrf.mxu0
    %v868 = vadd.f32 0.0, %v867
    %v869 = vpop.f32.mrf.mxu0
    %v870 = vpop.f32.mrf.mxu0
    %v871 = vadd.f32 0.0, %v870
    %v872 = vpop.f32.mrf.mxu0
    %873 = vmatprep.mubr.bf16.mxu0 0
    %874 = vmatmul.mubr.bf16.gmra.mxu0 %v804
    %v875 = vpop.f32.mrf.mxu0
    %v876 = vadd.f32 0.0, %v875
    %v877 = vpop.f32.mrf.mxu0
    %v878 = vpop.f32.mrf.mxu0
    %v879 = vadd.f32 0.0, %v878
    %v880 = vpop.f32.mrf.mxu0
    %881 = vmatprep.mubr.bf16.mxu0 0
    %882 = vmatmul.mubr.bf16.gmra.mxu0 %v807
    %v883 = vpop.f32.mrf.mxu0
    %v884 = vadd.f32 0.0, %v883
    %v885 = vpop.f32.mrf.mxu0
    %v886 = vpop.f32.mrf.mxu0
    %v887 = vadd.f32 0.0, %v886
    %v888 = vpop.f32.mrf.mxu0
    %889 = vmatprep.mubr.bf16.mxu0 0
    %890 = vmatmul.mubr.bf16.gmra.mxu0 %v810
    %v891 = vpop.f32.mrf.mxu0
    %v892 = vadd.f32 0.0, %v891
    %v893 = vpop.f32.mrf.mxu0
    %v894 = vpop.f32.mrf.mxu0
    %v895 = vadd.f32 0.0, %v894
    %v896 = vpop.f32.mrf.mxu0
    %897 = vmatprep.mubr.bf16.mxu0 0
    %898 = vmatmul.mubr.bf16.gmra.mxu0 %v813
    %v899 = vpop.f32.mrf.mxu0
    %v900 = vadd.f32 0.0, %v899
    %v901 = vpop.f32.mrf.mxu0
    %v902 = vpop.f32.mrf.mxu0
    %v903 = vadd.f32 0.0, %v902
    %v904 = vpop.f32.mrf.mxu0
    %905 = vmatprep.mubr.bf16.mxu0 0
    %906 = vmatmul.mubr.bf16.gmra.mxu0 %v816
    %v907 = vpop.f32.mrf.mxu0
    %v908 = vadd.f32 0.0, %v907
    %v909 = vpop.f32.mrf.mxu0
    %v910 = vpop.f32.mrf.mxu0
    %v911 = vadd.f32 0.0, %v910
    %v912 = vpop.f32.mrf.mxu0
    %913 = vmatprep.mubr.bf16.mxu0 0
    %914 = vmatmul.mubr.bf16.gmra.mxu0 %v819
    %v915 = vpop.f32.mrf.mxu0
    %v916 = vadd.f32 0.0, %v915
    %v917 = vpop.f32.mrf.mxu0
    %v918 = vpop.f32.mrf.mxu0
    %v919 = vadd.f32 0.0, %v918
    %v920 = vpop.f32.mrf.mxu0
    %921 = vdwg.mxu0
    %922 = vst [vmem:[#allocation2] sm:$0xff] %v860
    %923 = vst [vmem:[#allocation2 + $0x8] sm:$0xff] %v863
    %924 = vst [vmem:[#allocation2 + $0x10] sm:$0xff] %v868
    %925 = vst [vmem:[#allocation2 + $0x18] sm:$0xff] %v871
    %926 = vst [vmem:[#allocation2 + $0x20] sm:$0xff] %v876
    %927 = vst [vmem:[#allocation2 + $0x28] sm:$0xff] %v879
    %928 = vst [vmem:[#allocation2 + $0x30] sm:$0xff] %v884
    %929 = vst [vmem:[#allocation2 + $0x38] sm:$0xff] %v887
    %930 = vst [vmem:[#allocation2 + $0x40] sm:$0xff] %v892
    %931 = vst [vmem:[#allocation2 + $0x48] sm:$0xff] %v895
    %932 = vst [vmem:[#allocation2 + $0x50] sm:$0xff] %v900
    %933 = vst [vmem:[#allocation2 + $0x58] sm:$0xff] %v903
    %934 = vst [vmem:[#allocation2 + $0x60] sm:$0xff] %v908
    %935 = vst [vmem:[#allocation2 + $0x68] sm:$0xff] %v911
    %936 = vst [vmem:[#allocation2 + $0x70] sm:$0xff] %v916
    %937 = vst [vmem:[#allocation2 + $0x78] sm:$0xff] %v919
    %vm942 = vcmask 1043456
    %v943 = vrot.slane %v736, 4
    %v944 = vrot.slane %v737, 4
    %v945 = vsel %vm942, %v943, %v944
    %v946 = vrot.slane %v738, 4
    %v947 = vsel %vm942, %v944, %v946
    %v948 = vrot.slane %v739, 4
    %v949 = vsel %vm942, %v946, %v948
    %v954 = vsel %vm821, %v948, 0
    %956 = vmatprep.subr.bf16.mxu0 0
    %957 = vmatpush1.bf16.msra.mxu0 0
    %958 = vmatprep.subr.bf16.mxu0 0
    %959 = vmatpush1.bf16.msra.mxu0 0
    %960 = vmatprep.subr.bf16.mxu0 0
    %961 = vmatpush1.bf16.msra.mxu0 0
    %962 = vmatprep.subr.bf16.mxu0 0
    %963 = vmatpush1.bf16.msra.mxu0 0
    %964 = vmatprep.subr.bf16.mxu0 0
    %965 = vmatpush1.bf16.msra.mxu0 %v954
    %966 = vmatprep.subr.bf16.mxu0 0
    %967 = vmatpush1.bf16.msra.mxu0 %v949
    %968 = vmatprep.subr.bf16.mxu0 0
    %969 = vmatpush1.bf16.msra.mxu0 %v947
    %970 = vmatprep.subr.bf16.mxu0 0
    %971 = vmatpush1.bf16.msra.mxu0 %v945
    %972 = vmatprep.subr.bf16.mxu0 0
    %973 = vmatpush2.bf16.msra.mxu0 0
    %974 = vmatprep.subr.bf16.mxu0 0
    %975 = vmatpush2.bf16.msra.mxu0 0
    %976 = vmatprep.subr.bf16.mxu0 0
    %977 = vmatpush2.bf16.msra.mxu0 0
    %978 = vmatprep.subr.bf16.mxu0 0
    %979 = vmatpush2.bf16.msra.mxu0 0
    %980 = vmatprep.subr.bf16.mxu0 0
    %981 = vmatpush2.bf16.msra.mxu0 0
    %982 = vmatprep.subr.bf16.mxu0 0
    %983 = vmatpush2.bf16.msra.mxu0 0
    %984 = vmatprep.subr.bf16.mxu0 0
    %985 = vmatpush2.bf16.msra.mxu0 0
    %986 = vmatprep.subr.bf16.mxu0 0
    %987 = vmatpush2.bf16.msra.mxu0 0
    %988 = vmatprep.mubr.bf16.mxu0 0
    %989 = vmatmul.mubr.bf16.gmra.mxu0 %v798
    %v990 = vpop.f32.mrf.mxu0
    %v991 = vadd.f32 0.0, %v990
    %v992 = vpop.f32.mrf.mxu0
    %v993 = vpop.f32.mrf.mxu0
    %v994 = vadd.f32 0.0, %v993
    %v995 = vpop.f32.mrf.mxu0
    %996 = vmatprep.mubr.bf16.mxu0 0
    %997 = vmatmul.mubr.bf16.gmra.mxu0 %v801
    %v998 = vpop.f32.mrf.mxu0
    %v999 = vadd.f32 0.0, %v998
    %v1000 = vpop.f32.mrf.mxu0
    %v1001 = vpop.f32.mrf.mxu0
    %v1002 = vadd.f32 0.0, %v1001
    %v1003 = vpop.f32.mrf.mxu0
    %1004 = vmatprep.mubr.bf16.mxu0 0
    %1005 = vmatmul.mubr.bf16.gmra.mxu0 %v804
    %v1006 = vpop.f32.mrf.mxu0
    %v1007 = vadd.f32 0.0, %v1006
    %v1008 = vpop.f32.mrf.mxu0
    %v1009 = vpop.f32.mrf.mxu0
    %v1010 = vadd.f32 0.0, %v1009
    %v1011 = vpop.f32.mrf.mxu0
    %1012 = vmatprep.mubr.bf16.mxu0 0
    %1013 = vmatmul.mubr.bf16.gmra.mxu0 %v807
    %v1014 = vpop.f32.mrf.mxu0
    %v1015 = vadd.f32 0.0, %v1014
    %v1016 = vpop.f32.mrf.mxu0
    %v1017 = vpop.f32.mrf.mxu0
    %v1018 = vadd.f32 0.0, %v1017
    %v1019 = vpop.f32.mrf.mxu0
    %1020 = vmatprep.mubr.bf16.mxu0 0
    %1021 = vmatmul.mubr.bf16.gmra.mxu0 %v810
    %v1022 = vpop.f32.mrf.mxu0
    %v1023 = vadd.f32 0.0, %v1022
    %v1024 = vpop.f32.mrf.mxu0
    %v1025 = vpop.f32.mrf.mxu0
    %v1026 = vadd.f32 0.0, %v1025
    %v1027 = vpop.f32.mrf.mxu0
    %1028 = vmatprep.mubr.bf16.mxu0 0
    %1029 = vmatmul.mubr.bf16.gmra.mxu0 %v813
    %v1030 = vpop.f32.mrf.mxu0
    %v1031 = vadd.f32 0.0, %v1030
    %v1032 = vpop.f32.mrf.mxu0
    %v1033 = vpop.f32.mrf.mxu0
    %v1034 = vadd.f32 0.0, %v1033
    %v1035 = vpop.f32.mrf.mxu0
    %1036 = vmatprep.mubr.bf16.mxu0 0
    %1037 = vmatmul.mubr.bf16.gmra.mxu0 %v816
    %v1038 = vpop.f32.mrf.mxu0
    %v1039 = vadd.f32 0.0, %v1038
    %v1040 = vpop.f32.mrf.mxu0
    %v1041 = vpop.f32.mrf.mxu0
    %v1042 = vadd.f32 0.0, %v1041
    %v1043 = vpop.f32.mrf.mxu0
    %1044 = vmatprep.mubr.bf16.mxu0 0
    %1045 = vmatmul.mubr.bf16.gmra.mxu0 %v819
    %v1046 = vpop.f32.mrf.mxu0
    %v1047 = vadd.f32 0.0, %v1046
    %v1048 = vpop.f32.mrf.mxu0
    %v1049 = vpop.f32.mrf.mxu0
    %v1050 = vadd.f32 0.0, %v1049
    %v1051 = vpop.f32.mrf.mxu0
    %1052 = vdwg.mxu0
    %s1053 = scalar_lea.vmem [#allocation2], 128
    %1054 = vst [vmem:[%s1053] sm:$0xff] %v991
    %1055 = vst [vmem:[%s1053 + $0x8] sm:$0xff] %v994
    %1056 = vst [vmem:[%s1053 + $0x10] sm:$0xff] %v999
    %1057 = vst [vmem:[%s1053 + $0x18] sm:$0xff] %v1002
    %1058 = vst [vmem:[%s1053 + $0x20] sm:$0xff] %v1007
    %1059 = vst [vmem:[%s1053 + $0x28] sm:$0xff] %v1010
    %1060 = vst [vmem:[%s1053 + $0x30] sm:$0xff] %v1015
    %1061 = vst [vmem:[%s1053 + $0x38] sm:$0xff] %v1018
    %1062 = vst [vmem:[%s1053 + $0x40] sm:$0xff] %v1023
    %1063 = vst [vmem:[%s1053 + $0x48] sm:$0xff] %v1026
    %1064 = vst [vmem:[%s1053 + $0x50] sm:$0xff] %v1031
    %1065 = vst [vmem:[%s1053 + $0x58] sm:$0xff] %v1034
    %1066 = vst [vmem:[%s1053 + $0x60] sm:$0xff] %v1039
    %1067 = vst [vmem:[%s1053 + $0x68] sm:$0xff] %v1042
    %1068 = vst [vmem:[%s1053 + $0x70] sm:$0xff] %v1047
    %1069 = vst [vmem:[%s1053 + $0x78] sm:$0xff] %v1050
    %v1070 = vld [vmem:[#allocation2] sm:$0xff]
    %v1071 = vld [vmem:[#allocation2 + $0x8] sm:$0xff]
    %v1072 = vld [vmem:[#allocation2 + $0x10] sm:$0xff]
    %v1073 = vld [vmem:[#allocation2 + $0x18] sm:$0xff]
    %v1074 = vld [vmem:[#allocation2 + $0x20] sm:$0xff]
    %v1075 = vld [vmem:[#allocation2 + $0x28] sm:$0xff]
    %v1076 = vld [vmem:[#allocation2 + $0x30] sm:$0xff]
    %v1077 = vld [vmem:[#allocation2 + $0x38] sm:$0xff]
    %v1078 = vld [vmem:[#allocation2 + $0x40] sm:$0xff]
    %v1079 = vld [vmem:[#allocation2 + $0x48] sm:$0xff]
    %v1080 = vld [vmem:[#allocation2 + $0x50] sm:$0xff]
    %v1081 = vld [vmem:[#allocation2 + $0x58] sm:$0xff]
    %v1082 = vld [vmem:[#allocation2 + $0x60] sm:$0xff]
    %v1083 = vld [vmem:[#allocation2 + $0x68] sm:$0xff]
    %v1084 = vld [vmem:[#allocation2 + $0x70] sm:$0xff]
    %v1085 = vld [vmem:[#allocation2 + $0x78] sm:$0xff]
    %v1086 = vld [vmem:[#allocation2 + $0x80] sm:$0xff]
    %v1087 = vld [vmem:[#allocation2 + $0x88] sm:$0xff]
    %v1088 = vld [vmem:[#allocation2 + $0x90] sm:$0xff]
    %v1089 = vld [vmem:[#allocation2 + $0x98] sm:$0xff]
    %v1090 = vld [vmem:[#allocation2 + $0xa0] sm:$0xff]
    %v1091 = vld [vmem:[#allocation2 + $0xa8] sm:$0xff]
    %v1092 = vld [vmem:[#allocation2 + $0xb0] sm:$0xff]
    %v1093 = vld [vmem:[#allocation2 + $0xb8] sm:$0xff]
    %v1094 = vld [vmem:[#allocation2 + $0xc0] sm:$0xff]
    %v1095 = vld [vmem:[#allocation2 + $0xc8] sm:$0xff]
    %v1096 = vld [vmem:[#allocation2 + $0xd0] sm:$0xff]
    %v1097 = vld [vmem:[#allocation2 + $0xd8] sm:$0xff]
    %v1098 = vld [vmem:[#allocation2 + $0xe0] sm:$0xff]
    %v1099 = vld [vmem:[#allocation2 + $0xe8] sm:$0xff]
    %v1100 = vld [vmem:[#allocation2 + $0xf0] sm:$0xff]
    %v1101 = vld [vmem:[#allocation2 + $0xf8] sm:$0xff]
    %v1102 = vld [vmem:[#allocation8] sm:$0x1]
    %v1103 = vld [vmem:[#allocation8 + $0x1] sm:$0x1]
    %v1104 = vld [vmem:[#allocation8 + $0x2] sm:$0x1]
    %v1105 = vld [vmem:[#allocation8 + $0x3] sm:$0x1]
    %v1106 = vld [vmem:[#allocation8 + $0x4] sm:$0x1]
    %v1107 = vld [vmem:[#allocation8 + $0x5] sm:$0x1]
    %v1108 = vld [vmem:[#allocation8 + $0x6] sm:$0x1]
    %v1109 = vld [vmem:[#allocation3] sm:$0xff]
    %v1110 = vld [vmem:[#allocation3 + $0x8] sm:$0xff]
    %v1111 = vld [vmem:[#allocation3 + $0x10] sm:$0xff]
    %v1112 = vld [vmem:[#allocation3 + $0x18] sm:$0xff]
    %v1113 = vld [vmem:[#allocation3 + $0x20] sm:$0xff]
    %v1114 = vld [vmem:[#allocation3 + $0x28] sm:$0xff]
    %v1115 = vld [vmem:[#allocation3 + $0x30] sm:$0xff]
    %v1116 = vld [vmem:[#allocation3 + $0x38] sm:$0xff]
    %v1125 = vunpack.c.l.b16 %v1109
    %v1126 = vunpack.c.h.b16 %v1109
    %v1127 = vunpack.c.l.b16 %v1110
    %v1128 = vunpack.c.h.b16 %v1110
    %v1129 = vunpack.c.l.b16 %v1111
    %v1130 = vunpack.c.h.b16 %v1111
    %v1131 = vunpack.c.l.b16 %v1112
    %v1132 = vunpack.c.h.b16 %v1112
    %v1133 = vunpack.c.l.b16 %v1113
    %v1134 = vunpack.c.h.b16 %v1113
    %v1135 = vunpack.c.l.b16 %v1114
    %v1136 = vunpack.c.h.b16 %v1114
    %v1137 = vunpack.c.l.b16 %v1115
    %v1138 = vunpack.c.h.b16 %v1115
    %v1139 = vunpack.c.l.b16 %v1116
    %v1140 = vunpack.c.h.b16 %v1116
    %v1141 = vpack.c.b16 %v1127, %v1125
    %v1142 = vpack.c.b16 %v1128, %v1126
    %v1143 = vpack.c.b16 %v1131, %v1129
    %v1144 = vpack.c.b16 %v1132, %v1130
    %v1145 = vpack.c.b16 %v1135, %v1133
    %v1146 = vpack.c.b16 %v1136, %v1134
    %v1147 = vpack.c.b16 %v1139, %v1137
    %v1148 = vpack.c.b16 %v1140, %v1138
    %vm1157 = vcmask 523264
    %v1159 = vsel %vm1157, %v115, 0
    %v1162 = vsel %vm1157, %v116, 0
    %v1165 = vsel %vm1157, %v117, 0
    %v1168 = vsel %vm1157, %v118, 0
    %v1171 = vsel %vm1157, %v119, 0
    %v1174 = vsel %vm1157, %v120, 0
    %v1177 = vsel %vm1157, %v121, 0
    %v1180 = vsel %vm1157, %v122, 0
    %v1183 = vsel %vm1157, %v123, 0
    %v1186 = vsel %vm1157, %v124, 0
    %v1189 = vsel %vm1157, %v125, 0
    %v1192 = vsel %vm1157, %v126, 0
    %v1195 = vsel %vm1157, %v127, 0
    %v1198 = vsel %vm1157, %v128, 0
    %v1201 = vsel %vm1157, %v129, 0
    %v1204 = vsel %vm1157, %v130, 0
    %1206 = vmatprep.subr.bf16.mxu0 0
    %1207 = vmatpush1.bf16.msra.mxu0 0
    %1208 = vmatprep.subr.bf16.mxu0 0
    %1209 = vmatpush1.bf16.msra.mxu0 0
    %1210 = vmatprep.subr.bf16.mxu0 0
    %1211 = vmatpush1.bf16.msra.mxu0 0
    %1212 = vmatprep.subr.bf16.mxu0 0
    %1213 = vmatpush1.bf16.msra.mxu0 0
    %1214 = vmatprep.subr.bf16.mxu0 %v1148
    %1215 = vmatpush1.bf16.msra.mxu0 %v1147
    %1216 = vmatprep.subr.bf16.mxu0 %v1146
    %1217 = vmatpush1.bf16.msra.mxu0 %v1145
    %1218 = vmatprep.subr.bf16.mxu0 %v1144
    %1219 = vmatpush1.bf16.msra.mxu0 %v1143
    %1220 = vmatprep.subr.bf16.mxu0 %v1142
    %1221 = vmatpush1.bf16.msra.mxu0 %v1141
    %1222 = vmatprep.subr.bf16.mxu0 0
    %1223 = vmatpush2.bf16.msra.mxu0 0
    %1224 = vmatprep.subr.bf16.mxu0 0
    %1225 = vmatpush2.bf16.msra.mxu0 0
    %1226 = vmatprep.subr.bf16.mxu0 0
    %1227 = vmatpush2.bf16.msra.mxu0 0
    %1228 = vmatprep.subr.bf16.mxu0 0
    %1229 = vmatpush2.bf16.msra.mxu0 0
    %1230 = vmatprep.subr.bf16.mxu0 0
    %1231 = vmatpush2.bf16.msra.mxu0 0
    %1232 = vmatprep.subr.bf16.mxu0 0
    %1233 = vmatpush2.bf16.msra.mxu0 0
    %1234 = vmatprep.subr.bf16.mxu0 0
    %1235 = vmatpush2.bf16.msra.mxu0 0
    %1236 = vmatprep.subr.bf16.mxu0 0
    %1237 = vmatpush2.bf16.msra.mxu0 0
    %1238 = vmatprep.mubr.bf16.mxu0 0
    %1239 = vmatmul.mubr.bf16.gmra.mxu0 %v1159
    %v1240 = vpop.f32.mrf.mxu0
    %v1241 = vadd.f32 0.0, %v1240
    %v1242 = vpop.f32.mrf.mxu0
    %v1243 = vadd.f32 0.0, %v1242
    %v1244 = vpop.f32.mrf.mxu0
    %v1245 = vadd.f32 0.0, %v1244
    %v1246 = vpop.f32.mrf.mxu0
    %v1247 = vadd.f32 0.0, %v1246
    %1248 = vmatprep.mubr.bf16.mxu0 0
    %1249 = vmatmul.mubr.bf16.gmra.mxu0 %v1162
    %v1250 = vpop.f32.mrf.mxu0
    %v1251 = vadd.f32 0.0, %v1250
    %v1252 = vpop.f32.mrf.mxu0
    %v1253 = vadd.f32 0.0, %v1252
    %v1254 = vpop.f32.mrf.mxu0
    %v1255 = vadd.f32 0.0, %v1254
    %v1256 = vpop.f32.mrf.mxu0
    %v1257 = vadd.f32 0.0, %v1256
    %1258 = vmatprep.mubr.bf16.mxu0 0
    %1259 = vmatmul.mubr.bf16.gmra.mxu0 %v1165
    %v1260 = vpop.f32.mrf.mxu0
    %v1261 = vadd.f32 0.0, %v1260
    %v1262 = vpop.f32.mrf.mxu0
    %v1263 = vadd.f32 0.0, %v1262
    %v1264 = vpop.f32.mrf.mxu0
    %v1265 = vadd.f32 0.0, %v1264
    %v1266 = vpop.f32.mrf.mxu0
    %v1267 = vadd.f32 0.0, %v1266
    %1268 = vmatprep.mubr.bf16.mxu0 0
    %1269 = vmatmul.mubr.bf16.gmra.mxu0 %v1168
    %v1270 = vpop.f32.mrf.mxu0
    %v1271 = vadd.f32 0.0, %v1270
    %v1272 = vpop.f32.mrf.mxu0
    %v1273 = vadd.f32 0.0, %v1272
    %v1274 = vpop.f32.mrf.mxu0
    %v1275 = vadd.f32 0.0, %v1274
    %v1276 = vpop.f32.mrf.mxu0
    %v1277 = vadd.f32 0.0, %v1276
    %1278 = vmatprep.mubr.bf16.mxu0 0
    %1279 = vmatmul.mubr.bf16.gmra.mxu0 %v1171
    %v1280 = vpop.f32.mrf.mxu0
    %v1281 = vadd.f32 0.0, %v1280
    %v1282 = vpop.f32.mrf.mxu0
    %v1283 = vadd.f32 0.0, %v1282
    %v1284 = vpop.f32.mrf.mxu0
    %v1285 = vadd.f32 0.0, %v1284
    %v1286 = vpop.f32.mrf.mxu0
    %v1287 = vadd.f32 0.0, %v1286
    %1288 = vmatprep.mubr.bf16.mxu0 0
    %1289 = vmatmul.mubr.bf16.gmra.mxu0 %v1174
    %v1290 = vpop.f32.mrf.mxu0
    %v1291 = vadd.f32 0.0, %v1290
    %v1292 = vpop.f32.mrf.mxu0
    %v1293 = vadd.f32 0.0, %v1292
    %v1294 = vpop.f32.mrf.mxu0
    %v1295 = vadd.f32 0.0, %v1294
    %v1296 = vpop.f32.mrf.mxu0
    %v1297 = vadd.f32 0.0, %v1296
    %1298 = vmatprep.mubr.bf16.mxu0 0
    %1299 = vmatmul.mubr.bf16.gmra.mxu0 %v1177
    %v1300 = vpop.f32.mrf.mxu0
    %v1301 = vadd.f32 0.0, %v1300
    %v1302 = vpop.f32.mrf.mxu0
    %v1303 = vadd.f32 0.0, %v1302
    %v1304 = vpop.f32.mrf.mxu0
    %v1305 = vadd.f32 0.0, %v1304
    %v1306 = vpop.f32.mrf.mxu0
    %v1307 = vadd.f32 0.0, %v1306
    %1308 = vmatprep.mubr.bf16.mxu0 0
    %1309 = vmatmul.mubr.bf16.gmra.mxu0 %v1180
    %v1310 = vpop.f32.mrf.mxu0
    %v1311 = vadd.f32 0.0, %v1310
    %v1312 = vpop.f32.mrf.mxu0
    %v1313 = vadd.f32 0.0, %v1312
    %v1314 = vpop.f32.mrf.mxu0
    %v1315 = vadd.f32 0.0, %v1314
    %v1316 = vpop.f32.mrf.mxu0
    %v1317 = vadd.f32 0.0, %v1316
    %1318 = vmatprep.mubr.bf16.mxu0 0
    %1319 = vmatmul.mubr.bf16.gmra.mxu0 %v1183
    %v1320 = vpop.f32.mrf.mxu0
    %v1321 = vadd.f32 0.0, %v1320
    %v1322 = vpop.f32.mrf.mxu0
    %v1323 = vadd.f32 0.0, %v1322
    %v1324 = vpop.f32.mrf.mxu0
    %v1325 = vadd.f32 0.0, %v1324
    %v1326 = vpop.f32.mrf.mxu0
    %v1327 = vadd.f32 0.0, %v1326
    %1328 = vmatprep.mubr.bf16.mxu0 0
    %1329 = vmatmul.mubr.bf16.gmra.mxu0 %v1186
    %v1330 = vpop.f32.mrf.mxu0
    %v1331 = vadd.f32 0.0, %v1330
    %v1332 = vpop.f32.mrf.mxu0
    %v1333 = vadd.f32 0.0, %v1332
    %v1334 = vpop.f32.mrf.mxu0
    %v1335 = vadd.f32 0.0, %v1334
    %v1336 = vpop.f32.mrf.mxu0
    %v1337 = vadd.f32 0.0, %v1336
    %1338 = vmatprep.mubr.bf16.mxu0 0
    %1339 = vmatmul.mubr.bf16.gmra.mxu0 %v1189
    %v1340 = vpop.f32.mrf.mxu0
    %v1341 = vadd.f32 0.0, %v1340
    %v1342 = vpop.f32.mrf.mxu0
    %v1343 = vadd.f32 0.0, %v1342
    %v1344 = vpop.f32.mrf.mxu0
    %v1345 = vadd.f32 0.0, %v1344
    %v1346 = vpop.f32.mrf.mxu0
    %v1347 = vadd.f32 0.0, %v1346
    %1348 = vmatprep.mubr.bf16.mxu0 0
    %1349 = vmatmul.mubr.bf16.gmra.mxu0 %v1192
    %v1350 = vpop.f32.mrf.mxu0
    %v1351 = vadd.f32 0.0, %v1350
    %v1352 = vpop.f32.mrf.mxu0
    %v1353 = vadd.f32 0.0, %v1352
    %v1354 = vpop.f32.mrf.mxu0
    %v1355 = vadd.f32 0.0, %v1354
    %v1356 = vpop.f32.mrf.mxu0
    %v1357 = vadd.f32 0.0, %v1356
    %1358 = vmatprep.mubr.bf16.mxu0 0
    %1359 = vmatmul.mubr.bf16.gmra.mxu0 %v1195
    %v1360 = vpop.f32.mrf.mxu0
    %v1361 = vadd.f32 0.0, %v1360
    %v1362 = vpop.f32.mrf.mxu0
    %v1363 = vadd.f32 0.0, %v1362
    %v1364 = vpop.f32.mrf.mxu0
    %v1365 = vadd.f32 0.0, %v1364
    %v1366 = vpop.f32.mrf.mxu0
    %v1367 = vadd.f32 0.0, %v1366
    %1368 = vmatprep.mubr.bf16.mxu0 0
    %1369 = vmatmul.mubr.bf16.gmra.mxu0 %v1198
    %v1370 = vpop.f32.mrf.mxu0
    %v1371 = vadd.f32 0.0, %v1370
    %v1372 = vpop.f32.mrf.mxu0
    %v1373 = vadd.f32 0.0, %v1372
    %v1374 = vpop.f32.mrf.mxu0
    %v1375 = vadd.f32 0.0, %v1374
    %v1376 = vpop.f32.mrf.mxu0
    %v1377 = vadd.f32 0.0, %v1376
    %1378 = vmatprep.mubr.bf16.mxu0 0
    %1379 = vmatmul.mubr.bf16.gmra.mxu0 %v1201
    %v1380 = vpop.f32.mrf.mxu0
    %v1381 = vadd.f32 0.0, %v1380
    %v1382 = vpop.f32.mrf.mxu0
    %v1383 = vadd.f32 0.0, %v1382
    %v1384 = vpop.f32.mrf.mxu0
    %v1385 = vadd.f32 0.0, %v1384
    %v1386 = vpop.f32.mrf.mxu0
    %v1387 = vadd.f32 0.0, %v1386
    %1388 = vmatprep.mubr.bf16.mxu0 0
    %1389 = vmatmul.mubr.bf16.gmra.mxu0 %v1204
    %v1390 = vpop.f32.mrf.mxu0
    %v1391 = vadd.f32 0.0, %v1390
    %v1392 = vpop.f32.mrf.mxu0
    %v1393 = vadd.f32 0.0, %v1392
    %v1394 = vpop.f32.mrf.mxu0
    %v1395 = vadd.f32 0.0, %v1394
    %v1396 = vpop.f32.mrf.mxu0
    %v1397 = vadd.f32 0.0, %v1396
    %1398 = vdwg.mxu0
    %v1399 = vlaneseq
    %v1400 = vshrl.u32 %v1399, 7
    %v1401 = vsub.s32 0, %v1400
    %v1402 = vrot.slane %v1105, %v1401
    %v1403 = vadd.f32 %v1241, %v1402
    %v1404 = vadd.f32 %v1245, %v1402
    %v1405 = vadd.f32 %v1251, %v1402
    %v1406 = vadd.f32 %v1255, %v1402
    %v1407 = vadd.f32 %v1261, %v1402
    %v1408 = vadd.f32 %v1265, %v1402
    %v1409 = vadd.f32 %v1271, %v1402
    %v1410 = vadd.f32 %v1275, %v1402
    %v1411 = vadd.f32 %v1281, %v1402
    %v1412 = vadd.f32 %v1285, %v1402
    %v1413 = vadd.f32 %v1291, %v1402
    %v1414 = vadd.f32 %v1295, %v1402
    %v1415 = vadd.f32 %v1301, %v1402
    %v1416 = vadd.f32 %v1305, %v1402
    %v1417 = vadd.f32 %v1311, %v1402
    %v1418 = vadd.f32 %v1315, %v1402
    %v1419 = vadd.f32 %v1321, %v1402
    %v1420 = vadd.f32 %v1325, %v1402
    %v1421 = vadd.f32 %v1331, %v1402
    %v1422 = vadd.f32 %v1335, %v1402
    %v1423 = vadd.f32 %v1341, %v1402
    %v1424 = vadd.f32 %v1345, %v1402
    %v1425 = vadd.f32 %v1351, %v1402
    %v1426 = vadd.f32 %v1355, %v1402
    %v1427 = vadd.f32 %v1361, %v1402
    %v1428 = vadd.f32 %v1365, %v1402
    %v1429 = vadd.f32 %v1371, %v1402
    %v1430 = vadd.f32 %v1375, %v1402
    %v1431 = vadd.f32 %v1381, %v1402
    %v1432 = vadd.f32 %v1385, %v1402
    %v1433 = vadd.f32 %v1391, %v1402
    %v1434 = vadd.f32 %v1395, %v1402
    %v1435 = vlaneseq
    %v1436 = vshrl.u32 %v1435, 7
    %v1437 = vsub.s32 0, %v1436
    %v1438 = vrot.slane %v1102, %v1437
    %v1439 = vmul.f32 %v83, %v1438
    %v1440 = vmul.f32 %v84, %v1438
    %v1441 = vmul.f32 %v85, %v1438
    %v1442 = vmul.f32 %v86, %v1438
    %v1443 = vmul.f32 %v87, %v1438
    %v1444 = vmul.f32 %v88, %v1438
    %v1445 = vmul.f32 %v89, %v1438
    %v1446 = vmul.f32 %v90, %v1438
    %v1447 = vmul.f32 %v91, %v1438
    %v1448 = vmul.f32 %v92, %v1438
    %v1449 = vmul.f32 %v93, %v1438
    %v1450 = vmul.f32 %v94, %v1438
    %v1451 = vmul.f32 %v95, %v1438
    %v1452 = vmul.f32 %v96, %v1438
    %v1453 = vmul.f32 %v97, %v1438
    %v1454 = vmul.f32 %v98, %v1438
    %v1455 = vmul.f32 %v99, %v1438
    %v1456 = vmul.f32 %v100, %v1438
    %v1457 = vmul.f32 %v101, %v1438
    %v1458 = vmul.f32 %v102, %v1438
    %v1459 = vmul.f32 %v103, %v1438
    %v1460 = vmul.f32 %v104, %v1438
    %v1461 = vmul.f32 %v105, %v1438
    %v1462 = vmul.f32 %v106, %v1438
    %v1463 = vmul.f32 %v107, %v1438
    %v1464 = vmul.f32 %v108, %v1438
    %v1465 = vmul.f32 %v109, %v1438
    %v1466 = vmul.f32 %v110, %v1438
    %v1467 = vmul.f32 %v111, %v1438
    %v1468 = vmul.f32 %v112, %v1438
    %v1469 = vmul.f32 %v113, %v1438
    %v1470 = vmul.f32 %v114, %v1438
    %v1471 = vsel %vm1157, %v1439, 0.0
    %1472 = vadd.xlane.f32.xlu0 %v1471
    %v1473 = vpop.xlane.xlu0 %1472
    %v1474 = vsel %vm1157, %v1440, 0.0
    %1475 = vadd.xlane.f32.xlu0 %v1474
    %v1476 = vpop.xlane.xlu0 %1475
    %v1477 = vsel %vm1157, %v1441, 0.0
    %1478 = vadd.xlane.f32.xlu0 %v1477
    %v1479 = vpop.xlane.xlu0 %1478
    %v1480 = vsel %vm1157, %v1442, 0.0
    %1481 = vadd.xlane.f32.xlu0 %v1480
    %v1482 = vpop.xlane.xlu0 %1481
    %v1483 = vsel %vm1157, %v1443, 0.0
    %1484 = vadd.xlane.f32.xlu0 %v1483
    %v1485 = vpop.xlane.xlu0 %1484
    %v1486 = vsel %vm1157, %v1444, 0.0
    %1487 = vadd.xlane.f32.xlu0 %v1486
    %v1488 = vpop.xlane.xlu0 %1487
    %v1489 = vsel %vm1157, %v1445, 0.0
    %1490 = vadd.xlane.f32.xlu0 %v1489
    %v1491 = vpop.xlane.xlu0 %1490
    %v1492 = vsel %vm1157, %v1446, 0.0
    %1493 = vadd.xlane.f32.xlu0 %v1492
    %v1494 = vpop.xlane.xlu0 %1493
    %v1495 = vsel %vm1157, %v1447, 0.0
    %1496 = vadd.xlane.f32.xlu0 %v1495
    %v1497 = vpop.xlane.xlu0 %1496
    %v1498 = vsel %vm1157, %v1448, 0.0
    %1499 = vadd.xlane.f32.xlu0 %v1498
    %v1500 = vpop.xlane.xlu0 %1499
    %v1501 = vsel %vm1157, %v1449, 0.0
    %1502 = vadd.xlane.f32.xlu0 %v1501
    %v1503 = vpop.xlane.xlu0 %1502
    %v1504 = vsel %vm1157, %v1450, 0.0
    %1505 = vadd.xlane.f32.xlu0 %v1504
    %v1506 = vpop.xlane.xlu0 %1505
    %v1507 = vsel %vm1157, %v1451, 0.0
    %1508 = vadd.xlane.f32.xlu0 %v1507
    %v1509 = vpop.xlane.xlu0 %1508
    %v1510 = vsel %vm1157, %v1452, 0.0
    %1511 = vadd.xlane.f32.xlu0 %v1510
    %v1512 = vpop.xlane.xlu0 %1511
    %v1513 = vsel %vm1157, %v1453, 0.0
    %1514 = vadd.xlane.f32.xlu0 %v1513
    %v1515 = vpop.xlane.xlu0 %1514
    %v1516 = vsel %vm1157, %v1454, 0.0
    %1517 = vadd.xlane.f32.xlu0 %v1516
    %v1518 = vpop.xlane.xlu0 %1517
    %v1519 = vsel %vm1157, %v1455, 0.0
    %1520 = vadd.xlane.f32.xlu0 %v1519
    %v1521 = vpop.xlane.xlu0 %1520
    %v1522 = vsel %vm1157, %v1456, 0.0
    %1523 = vadd.xlane.f32.xlu0 %v1522
    %v1524 = vpop.xlane.xlu0 %1523
    %v1525 = vsel %vm1157, %v1457, 0.0
    %1526 = vadd.xlane.f32.xlu0 %v1525
    %v1527 = vpop.xlane.xlu0 %1526
    %v1528 = vsel %vm1157, %v1458, 0.0
    %1529 = vadd.xlane.f32.xlu0 %v1528
    %v1530 = vpop.xlane.xlu0 %1529
    %v1531 = vsel %vm1157, %v1459, 0.0
    %1532 = vadd.xlane.f32.xlu0 %v1531
    %v1533 = vpop.xlane.xlu0 %1532
    %v1534 = vsel %vm1157, %v1460, 0.0
    %1535 = vadd.xlane.f32.xlu0 %v1534
    %v1536 = vpop.xlane.xlu0 %1535
    %v1537 = vsel %vm1157, %v1461, 0.0
    %1538 = vadd.xlane.f32.xlu0 %v1537
    %v1539 = vpop.xlane.xlu0 %1538
    %v1540 = vsel %vm1157, %v1462, 0.0
    %1541 = vadd.xlane.f32.xlu0 %v1540
    %v1542 = vpop.xlane.xlu0 %1541
    %v1543 = vsel %vm1157, %v1463, 0.0
    %1544 = vadd.xlane.f32.xlu0 %v1543
    %v1545 = vpop.xlane.xlu0 %1544
    %v1546 = vsel %vm1157, %v1464, 0.0
    %1547 = vadd.xlane.f32.xlu0 %v1546
    %v1548 = vpop.xlane.xlu0 %1547
    %v1549 = vsel %vm1157, %v1465, 0.0
    %1550 = vadd.xlane.f32.xlu0 %v1549
    %v1551 = vpop.xlane.xlu0 %1550
    %v1552 = vsel %vm1157, %v1466, 0.0
    %1553 = vadd.xlane.f32.xlu0 %v1552
    %v1554 = vpop.xlane.xlu0 %1553
    %v1555 = vsel %vm1157, %v1467, 0.0
    %1556 = vadd.xlane.f32.xlu0 %v1555
    %v1557 = vpop.xlane.xlu0 %1556
    %v1558 = vsel %vm1157, %v1468, 0.0
    %1559 = vadd.xlane.f32.xlu0 %v1558
    %v1560 = vpop.xlane.xlu0 %1559
    %v1561 = vsel %vm1157, %v1469, 0.0
    %1562 = vadd.xlane.f32.xlu0 %v1561
    %v1563 = vpop.xlane.xlu0 %1562
    %v1564 = vsel %vm1157, %v1470, 0.0
    %1565 = vadd.xlane.f32.xlu0 %v1564
    %v1566 = vpop.xlane.xlu0 %1565
    %1568 = vrot.lane.b32.xlu0 %v1438, 64
    %v1569 = vpop.permute.xlu0 %1568
    %v1571 = vmul.f32 %v83, %v1569
    %v1572 = vmul.f32 %v84, %v1569
    %v1573 = vmul.f32 %v85, %v1569
    %v1574 = vmul.f32 %v86, %v1569
    %v1575 = vmul.f32 %v87, %v1569
    %v1576 = vmul.f32 %v88, %v1569
    %v1577 = vmul.f32 %v89, %v1569
    %v1578 = vmul.f32 %v90, %v1569
    %v1579 = vmul.f32 %v91, %v1569
    %v1580 = vmul.f32 %v92, %v1569
    %v1581 = vmul.f32 %v93, %v1569
    %v1582 = vmul.f32 %v94, %v1569
    %v1583 = vmul.f32 %v95, %v1569
    %v1584 = vmul.f32 %v96, %v1569
    %v1585 = vmul.f32 %v97, %v1569
    %v1586 = vmul.f32 %v98, %v1569
    %v1587 = vmul.f32 %v99, %v1569
    %v1588 = vmul.f32 %v100, %v1569
    %v1589 = vmul.f32 %v101, %v1569
    %v1590 = vmul.f32 %v102, %v1569
    %v1591 = vmul.f32 %v103, %v1569
    %v1592 = vmul.f32 %v104, %v1569
    %v1593 = vmul.f32 %v105, %v1569
    %v1594 = vmul.f32 %v106, %v1569
    %v1595 = vmul.f32 %v107, %v1569
    %v1596 = vmul.f32 %v108, %v1569
    %v1597 = vmul.f32 %v109, %v1569
    %v1598 = vmul.f32 %v110, %v1569
    %v1599 = vmul.f32 %v111, %v1569
    %v1600 = vmul.f32 %v112, %v1569
    %v1601 = vmul.f32 %v113, %v1569
    %v1602 = vmul.f32 %v114, %v1569
    %v1603 = vsel %vm1157, %v1571, 0.0
    %1604 = vadd.xlane.f32.xlu0 %v1603
    %v1605 = vpop.xlane.xlu0 %1604
    %v1606 = vsel %vm1157, %v1572, 0.0
    %1607 = vadd.xlane.f32.xlu0 %v1606
    %v1608 = vpop.xlane.xlu0 %1607
    %v1609 = vsel %vm1157, %v1573, 0.0
    %1610 = vadd.xlane.f32.xlu0 %v1609
    %v1611 = vpop.xlane.xlu0 %1610
    %v1612 = vsel %vm1157, %v1574, 0.0
    %1613 = vadd.xlane.f32.xlu0 %v1612
    %v1614 = vpop.xlane.xlu0 %1613
    %v1615 = vsel %vm1157, %v1575, 0.0
    %1616 = vadd.xlane.f32.xlu0 %v1615
    %v1617 = vpop.xlane.xlu0 %1616
    %v1618 = vsel %vm1157, %v1576, 0.0
    %1619 = vadd.xlane.f32.xlu0 %v1618
    %v1620 = vpop.xlane.xlu0 %1619
    %v1621 = vsel %vm1157, %v1577, 0.0
    %1622 = vadd.xlane.f32.xlu0 %v1621
    %v1623 = vpop.xlane.xlu0 %1622
    %v1624 = vsel %vm1157, %v1578, 0.0
    %1625 = vadd.xlane.f32.xlu0 %v1624
    %v1626 = vpop.xlane.xlu0 %1625
    %v1627 = vsel %vm1157, %v1579, 0.0
    %1628 = vadd.xlane.f32.xlu0 %v1627
    %v1629 = vpop.xlane.xlu0 %1628
    %v1630 = vsel %vm1157, %v1580, 0.0
    %1631 = vadd.xlane.f32.xlu0 %v1630
    %v1632 = vpop.xlane.xlu0 %1631
    %v1633 = vsel %vm1157, %v1581, 0.0
    %1634 = vadd.xlane.f32.xlu0 %v1633
    %v1635 = vpop.xlane.xlu0 %1634
    %v1636 = vsel %vm1157, %v1582, 0.0
    %1637 = vadd.xlane.f32.xlu0 %v1636
    %v1638 = vpop.xlane.xlu0 %1637
    %v1639 = vsel %vm1157, %v1583, 0.0
    %1640 = vadd.xlane.f32.xlu0 %v1639
    %v1641 = vpop.xlane.xlu0 %1640
    %v1642 = vsel %vm1157, %v1584, 0.0
    %1643 = vadd.xlane.f32.xlu0 %v1642
    %v1644 = vpop.xlane.xlu0 %1643
    %v1645 = vsel %vm1157, %v1585, 0.0
    %1646 = vadd.xlane.f32.xlu0 %v1645
    %v1647 = vpop.xlane.xlu0 %1646
    %v1648 = vsel %vm1157, %v1586, 0.0
    %1649 = vadd.xlane.f32.xlu0 %v1648
    %v1650 = vpop.xlane.xlu0 %1649
    %v1651 = vsel %vm1157, %v1587, 0.0
    %1652 = vadd.xlane.f32.xlu0 %v1651
    %v1653 = vpop.xlane.xlu0 %1652
    %v1654 = vsel %vm1157, %v1588, 0.0
    %1655 = vadd.xlane.f32.xlu0 %v1654
    %v1656 = vpop.xlane.xlu0 %1655
    %v1657 = vsel %vm1157, %v1589, 0.0
    %1658 = vadd.xlane.f32.xlu0 %v1657
    %v1659 = vpop.xlane.xlu0 %1658
    %v1660 = vsel %vm1157, %v1590, 0.0
    %1661 = vadd.xlane.f32.xlu0 %v1660
    %v1662 = vpop.xlane.xlu0 %1661
    %v1663 = vsel %vm1157, %v1591, 0.0
    %1664 = vadd.xlane.f32.xlu0 %v1663
    %v1665 = vpop.xlane.xlu0 %1664
    %v1666 = vsel %vm1157, %v1592, 0.0
    %1667 = vadd.xlane.f32.xlu0 %v1666
    %v1668 = vpop.xlane.xlu0 %1667
    %v1669 = vsel %vm1157, %v1593, 0.0
    %1670 = vadd.xlane.f32.xlu0 %v1669
    %v1671 = vpop.xlane.xlu0 %1670
    %v1672 = vsel %vm1157, %v1594, 0.0
    %1673 = vadd.xlane.f32.xlu0 %v1672
    %v1674 = vpop.xlane.xlu0 %1673
    %v1675 = vsel %vm1157, %v1595, 0.0
    %1676 = vadd.xlane.f32.xlu0 %v1675
    %v1677 = vpop.xlane.xlu0 %1676
    %v1678 = vsel %vm1157, %v1596, 0.0
    %1679 = vadd.xlane.f32.xlu0 %v1678
    %v1680 = vpop.xlane.xlu0 %1679
    %v1681 = vsel %vm1157, %v1597, 0.0
    %1682 = vadd.xlane.f32.xlu0 %v1681
    %v1683 = vpop.xlane.xlu0 %1682
    %v1684 = vsel %vm1157, %v1598, 0.0
    %1685 = vadd.xlane.f32.xlu0 %v1684
    %v1686 = vpop.xlane.xlu0 %1685
    %v1687 = vsel %vm1157, %v1599, 0.0
    %1688 = vadd.xlane.f32.xlu0 %v1687
    %v1689 = vpop.xlane.xlu0 %1688
    %v1690 = vsel %vm1157, %v1600, 0.0
    %1691 = vadd.xlane.f32.xlu0 %v1690
    %v1692 = vpop.xlane.xlu0 %1691
    %v1693 = vsel %vm1157, %v1601, 0.0
    %1694 = vadd.xlane.f32.xlu0 %v1693
    %v1695 = vpop.xlane.xlu0 %1694
    %v1696 = vsel %vm1157, %v1602, 0.0
    %1697 = vadd.xlane.f32.xlu0 %v1696
    %v1698 = vpop.xlane.xlu0 %1697
    %v1699 = vlaneseq
    %v1700 = vshrl.u32 %v1699, 7
    %v1701 = vsub.s32 0, %v1700
    %v1702 = vrot.slane %v1103, %v1701
    %v1703 = vmul.f32 %v1070, %v1702
    %v1704 = vmul.f32 %v1071, %v1702
    %v1705 = vmul.f32 %v1072, %v1702
    %v1706 = vmul.f32 %v1073, %v1702
    %v1707 = vmul.f32 %v1074, %v1702
    %v1708 = vmul.f32 %v1075, %v1702
    %v1709 = vmul.f32 %v1076, %v1702
    %v1710 = vmul.f32 %v1077, %v1702
    %v1711 = vmul.f32 %v1078, %v1702
    %v1712 = vmul.f32 %v1079, %v1702
    %v1713 = vmul.f32 %v1080, %v1702
    %v1714 = vmul.f32 %v1081, %v1702
    %v1715 = vmul.f32 %v1082, %v1702
    %v1716 = vmul.f32 %v1083, %v1702
    %v1717 = vmul.f32 %v1084, %v1702
    %v1718 = vmul.f32 %v1085, %v1702
    %v1719 = vmul.f32 %v1086, %v1702
    %v1720 = vmul.f32 %v1087, %v1702
    %v1721 = vmul.f32 %v1088, %v1702
    %v1722 = vmul.f32 %v1089, %v1702
    %v1723 = vmul.f32 %v1090, %v1702
    %v1724 = vmul.f32 %v1091, %v1702
    %v1725 = vmul.f32 %v1092, %v1702
    %v1726 = vmul.f32 %v1093, %v1702
    %v1727 = vmul.f32 %v1094, %v1702
    %v1728 = vmul.f32 %v1095, %v1702
    %v1729 = vmul.f32 %v1096, %v1702
    %v1730 = vmul.f32 %v1097, %v1702
    %v1731 = vmul.f32 %v1098, %v1702
    %v1732 = vmul.f32 %v1099, %v1702
    %v1733 = vmul.f32 %v1100, %v1702
    %v1734 = vmul.f32 %v1101, %v1702
    %1735 = vadd.xlane.f32.xlu0 %v1703
    %v1736 = vpop.xlane.xlu0 %1735
    %1737 = vadd.xlane.f32.xlu0 %v1704
    %v1738 = vpop.xlane.xlu0 %1737
    %1739 = vadd.xlane.f32.xlu0 %v1705
    %v1740 = vpop.xlane.xlu0 %1739
    %1741 = vadd.xlane.f32.xlu0 %v1706
    %v1742 = vpop.xlane.xlu0 %1741
    %1743 = vadd.xlane.f32.xlu0 %v1707
    %v1744 = vpop.xlane.xlu0 %1743
    %1745 = vadd.xlane.f32.xlu0 %v1708
    %v1746 = vpop.xlane.xlu0 %1745
    %1747 = vadd.xlane.f32.xlu0 %v1709
    %v1748 = vpop.xlane.xlu0 %1747
    %1749 = vadd.xlane.f32.xlu0 %v1710
    %v1750 = vpop.xlane.xlu0 %1749
    %1751 = vadd.xlane.f32.xlu0 %v1711
    %v1752 = vpop.xlane.xlu0 %1751
    %1753 = vadd.xlane.f32.xlu0 %v1712
    %v1754 = vpop.xlane.xlu0 %1753
    %1755 = vadd.xlane.f32.xlu0 %v1713
    %v1756 = vpop.xlane.xlu0 %1755
    %1757 = vadd.xlane.f32.xlu0 %v1714
    %v1758 = vpop.xlane.xlu0 %1757
    %1759 = vadd.xlane.f32.xlu0 %v1715
    %v1760 = vpop.xlane.xlu0 %1759
    %1761 = vadd.xlane.f32.xlu0 %v1716
    %v1762 = vpop.xlane.xlu0 %1761
    %1763 = vadd.xlane.f32.xlu0 %v1717
    %v1764 = vpop.xlane.xlu0 %1763
    %1765 = vadd.xlane.f32.xlu0 %v1718
    %v1766 = vpop.xlane.xlu0 %1765
    %1767 = vadd.xlane.f32.xlu0 %v1719
    %v1768 = vpop.xlane.xlu0 %1767
    %1769 = vadd.xlane.f32.xlu0 %v1720
    %v1770 = vpop.xlane.xlu0 %1769
    %1771 = vadd.xlane.f32.xlu0 %v1721
    %v1772 = vpop.xlane.xlu0 %1771
    %1773 = vadd.xlane.f32.xlu0 %v1722
    %v1774 = vpop.xlane.xlu0 %1773
    %1775 = vadd.xlane.f32.xlu0 %v1723
    %v1776 = vpop.xlane.xlu0 %1775
    %1777 = vadd.xlane.f32.xlu0 %v1724
    %v1778 = vpop.xlane.xlu0 %1777
    %1779 = vadd.xlane.f32.xlu0 %v1725
    %v1780 = vpop.xlane.xlu0 %1779
    %1781 = vadd.xlane.f32.xlu0 %v1726
    %v1782 = vpop.xlane.xlu0 %1781
    %1783 = vadd.xlane.f32.xlu0 %v1727
    %v1784 = vpop.xlane.xlu0 %1783
    %1785 = vadd.xlane.f32.xlu0 %v1728
    %v1786 = vpop.xlane.xlu0 %1785
    %1787 = vadd.xlane.f32.xlu0 %v1729
    %v1788 = vpop.xlane.xlu0 %1787
    %1789 = vadd.xlane.f32.xlu0 %v1730
    %v1790 = vpop.xlane.xlu0 %1789
    %1791 = vadd.xlane.f32.xlu0 %v1731
    %v1792 = vpop.xlane.xlu0 %1791
    %1793 = vadd.xlane.f32.xlu0 %v1732
    %v1794 = vpop.xlane.xlu0 %1793
    %1795 = vadd.xlane.f32.xlu0 %v1733
    %v1796 = vpop.xlane.xlu0 %1795
    %1797 = vadd.xlane.f32.xlu0 %v1734
    %v1798 = vpop.xlane.xlu0 %1797
    %v1799 = vlaneseq
    %v1800 = vshrl.u32 %v1799, 7
    %v1801 = vsub.s32 0, %v1800
    %v1802 = vrot.slane %v1104, %v1801
    %v1803 = vmul.f32 %v1070, %v1802
    %v1804 = vmul.f32 %v1071, %v1802
    %v1805 = vmul.f32 %v1072, %v1802
    %v1806 = vmul.f32 %v1073, %v1802
    %v1807 = vmul.f32 %v1074, %v1802
    %v1808 = vmul.f32 %v1075, %v1802
    %v1809 = vmul.f32 %v1076, %v1802
    %v1810 = vmul.f32 %v1077, %v1802
    %v1811 = vmul.f32 %v1078, %v1802
    %v1812 = vmul.f32 %v1079, %v1802
    %v1813 = vmul.f32 %v1080, %v1802
    %v1814 = vmul.f32 %v1081, %v1802
    %v1815 = vmul.f32 %v1082, %v1802
    %v1816 = vmul.f32 %v1083, %v1802
    %v1817 = vmul.f32 %v1084, %v1802
    %v1818 = vmul.f32 %v1085, %v1802
    %v1819 = vmul.f32 %v1086, %v1802
    %v1820 = vmul.f32 %v1087, %v1802
    %v1821 = vmul.f32 %v1088, %v1802
    %v1822 = vmul.f32 %v1089, %v1802
    %v1823 = vmul.f32 %v1090, %v1802
    %v1824 = vmul.f32 %v1091, %v1802
    %v1825 = vmul.f32 %v1092, %v1802
    %v1826 = vmul.f32 %v1093, %v1802
    %v1827 = vmul.f32 %v1094, %v1802
    %v1828 = vmul.f32 %v1095, %v1802
    %v1829 = vmul.f32 %v1096, %v1802
    %v1830 = vmul.f32 %v1097, %v1802
    %v1831 = vmul.f32 %v1098, %v1802
    %v1832 = vmul.f32 %v1099, %v1802
    %v1833 = vmul.f32 %v1100, %v1802
    %v1834 = vmul.f32 %v1101, %v1802
    %1835 = vadd.xlane.f32.xlu0 %v1803
    %v1836 = vpop.xlane.xlu0 %1835
    %1837 = vadd.xlane.f32.xlu0 %v1804
    %v1838 = vpop.xlane.xlu0 %1837
    %1839 = vadd.xlane.f32.xlu0 %v1805
    %v1840 = vpop.xlane.xlu0 %1839
    %1841 = vadd.xlane.f32.xlu0 %v1806
    %v1842 = vpop.xlane.xlu0 %1841
    %1843 = vadd.xlane.f32.xlu0 %v1807
    %v1844 = vpop.xlane.xlu0 %1843
    %1845 = vadd.xlane.f32.xlu0 %v1808
    %v1846 = vpop.xlane.xlu0 %1845
    %1847 = vadd.xlane.f32.xlu0 %v1809
    %v1848 = vpop.xlane.xlu0 %1847
    %1849 = vadd.xlane.f32.xlu0 %v1810
    %v1850 = vpop.xlane.xlu0 %1849
    %1851 = vadd.xlane.f32.xlu0 %v1811
    %v1852 = vpop.xlane.xlu0 %1851
    %1853 = vadd.xlane.f32.xlu0 %v1812
    %v1854 = vpop.xlane.xlu0 %1853
    %1855 = vadd.xlane.f32.xlu0 %v1813
    %v1856 = vpop.xlane.xlu0 %1855
    %1857 = vadd.xlane.f32.xlu0 %v1814
    %v1858 = vpop.xlane.xlu0 %1857
    %1859 = vadd.xlane.f32.xlu0 %v1815
    %v1860 = vpop.xlane.xlu0 %1859
    %1861 = vadd.xlane.f32.xlu0 %v1816
    %v1862 = vpop.xlane.xlu0 %1861
    %1863 = vadd.xlane.f32.xlu0 %v1817
    %v1864 = vpop.xlane.xlu0 %1863
    %1865 = vadd.xlane.f32.xlu0 %v1818
    %v1866 = vpop.xlane.xlu0 %1865
    %1867 = vadd.xlane.f32.xlu0 %v1819
    %v1868 = vpop.xlane.xlu0 %1867
    %1869 = vadd.xlane.f32.xlu0 %v1820
    %v1870 = vpop.xlane.xlu0 %1869
    %1871 = vadd.xlane.f32.xlu0 %v1821
    %v1872 = vpop.xlane.xlu0 %1871
    %1873 = vadd.xlane.f32.xlu0 %v1822
    %v1874 = vpop.xlane.xlu0 %1873
    %1875 = vadd.xlane.f32.xlu0 %v1823
    %v1876 = vpop.xlane.xlu0 %1875
    %1877 = vadd.xlane.f32.xlu0 %v1824
    %v1878 = vpop.xlane.xlu0 %1877
    %1879 = vadd.xlane.f32.xlu0 %v1825
    %v1880 = vpop.xlane.xlu0 %1879
    %1881 = vadd.xlane.f32.xlu0 %v1826
    %v1882 = vpop.xlane.xlu0 %1881
    %1883 = vadd.xlane.f32.xlu0 %v1827
    %v1884 = vpop.xlane.xlu0 %1883
    %1885 = vadd.xlane.f32.xlu0 %v1828
    %v1886 = vpop.xlane.xlu0 %1885
    %1887 = vadd.xlane.f32.xlu0 %v1829
    %v1888 = vpop.xlane.xlu0 %1887
    %1889 = vadd.xlane.f32.xlu0 %v1830
    %v1890 = vpop.xlane.xlu0 %1889
    %1891 = vadd.xlane.f32.xlu0 %v1831
    %v1892 = vpop.xlane.xlu0 %1891
    %1893 = vadd.xlane.f32.xlu0 %v1832
    %v1894 = vpop.xlane.xlu0 %1893
    %1895 = vadd.xlane.f32.xlu0 %v1833
    %v1896 = vpop.xlane.xlu0 %1895
    %1897 = vadd.xlane.f32.xlu0 %v1834
    %v1898 = vpop.xlane.xlu0 %1897
    %v1899 = vadd.f32 %v1473, %v1736
    %v1900 = vadd.f32 %v1476, %v1738
    %v1901 = vadd.f32 %v1479, %v1740
    %v1902 = vadd.f32 %v1482, %v1742
    %v1903 = vadd.f32 %v1485, %v1744
    %v1904 = vadd.f32 %v1488, %v1746
    %v1905 = vadd.f32 %v1491, %v1748
    %v1906 = vadd.f32 %v1494, %v1750
    %v1907 = vadd.f32 %v1497, %v1752
    %v1908 = vadd.f32 %v1500, %v1754
    %v1909 = vadd.f32 %v1503, %v1756
    %v1910 = vadd.f32 %v1506, %v1758
    %v1911 = vadd.f32 %v1509, %v1760
    %v1912 = vadd.f32 %v1512, %v1762
    %v1913 = vadd.f32 %v1515, %v1764
    %v1914 = vadd.f32 %v1518, %v1766
    %v1915 = vadd.f32 %v1521, %v1768
    %v1916 = vadd.f32 %v1524, %v1770
    %v1917 = vadd.f32 %v1527, %v1772
    %v1918 = vadd.f32 %v1530, %v1774
    %v1919 = vadd.f32 %v1533, %v1776
    %v1920 = vadd.f32 %v1536, %v1778
    %v1921 = vadd.f32 %v1539, %v1780
    %v1922 = vadd.f32 %v1542, %v1782
    %v1923 = vadd.f32 %v1545, %v1784
    %v1924 = vadd.f32 %v1548, %v1786
    %v1925 = vadd.f32 %v1551, %v1788
    %v1926 = vadd.f32 %v1554, %v1790
    %v1927 = vadd.f32 %v1557, %v1792
    %v1928 = vadd.f32 %v1560, %v1794
    %v1929 = vadd.f32 %v1563, %v1796
    %v1930 = vadd.f32 %v1566, %v1798
    %v1931 = vsub.f32 0.0, %v1899
    %v1932 = vsub.f32 0.0, %v1900
    %v1933 = vsub.f32 0.0, %v1901
    %v1934 = vsub.f32 0.0, %v1902
    %v1935 = vsub.f32 0.0, %v1903
    %v1936 = vsub.f32 0.0, %v1904
    %v1937 = vsub.f32 0.0, %v1905
    %v1938 = vsub.f32 0.0, %v1906
    %v1939 = vsub.f32 0.0, %v1907
    %v1940 = vsub.f32 0.0, %v1908
    %v1941 = vsub.f32 0.0, %v1909
    %v1942 = vsub.f32 0.0, %v1910
    %v1943 = vsub.f32 0.0, %v1911
    %v1944 = vsub.f32 0.0, %v1912
    %v1945 = vsub.f32 0.0, %v1913
    %v1946 = vsub.f32 0.0, %v1914
    %v1947 = vsub.f32 0.0, %v1915
    %v1948 = vsub.f32 0.0, %v1916
    %v1949 = vsub.f32 0.0, %v1917
    %v1950 = vsub.f32 0.0, %v1918
    %v1951 = vsub.f32 0.0, %v1919
    %v1952 = vsub.f32 0.0, %v1920
    %v1953 = vsub.f32 0.0, %v1921
    %v1954 = vsub.f32 0.0, %v1922
    %v1955 = vsub.f32 0.0, %v1923
    %v1956 = vsub.f32 0.0, %v1924
    %v1957 = vsub.f32 0.0, %v1925
    %v1958 = vsub.f32 0.0, %v1926
    %v1959 = vsub.f32 0.0, %v1927
    %v1960 = vsub.f32 0.0, %v1928
    %v1961 = vsub.f32 0.0, %v1929
    %v1962 = vsub.f32 0.0, %v1930
    %v1963 = vmul.f32 %v1931, 1.442695
    %v1964 = vpow.pop %v1963
    %v1965 = vmul.f32 %v1932, 1.442695
    %v1966 = vpow.pop %v1965
    %v1967 = vmul.f32 %v1933, 1.442695
    %v1968 = vpow.pop %v1967
    %v1969 = vmul.f32 %v1934, 1.442695
    %v1970 = vpow.pop %v1969
    %v1971 = vmul.f32 %v1935, 1.442695
    %v1972 = vpow.pop %v1971
    %v1973 = vmul.f32 %v1936, 1.442695
    %v1974 = vpow.pop %v1973
    %v1975 = vmul.f32 %v1937, 1.442695
    %v1976 = vpow.pop %v1975
    %v1977 = vmul.f32 %v1938, 1.442695
    %v1978 = vpow.pop %v1977
    %v1979 = vmul.f32 %v1939, 1.442695
    %v1980 = vpow.pop %v1979
    %v1981 = vmul.f32 %v1940, 1.442695
    %v1982 = vpow.pop %v1981
    %v1983 = vmul.f32 %v1941, 1.442695
    %v1984 = vpow.pop %v1983
    %v1985 = vmul.f32 %v1942, 1.442695
    %v1986 = vpow.pop %v1985
    %v1987 = vmul.f32 %v1943, 1.442695
    %v1988 = vpow.pop %v1987
    %v1989 = vmul.f32 %v1944, 1.442695
    %v1990 = vpow.pop %v1989
    %v1991 = vmul.f32 %v1945, 1.442695
    %v1992 = vpow.pop %v1991
    %v1993 = vmul.f32 %v1946, 1.442695
    %v1994 = vpow.pop %v1993
    %v1995 = vmul.f32 %v1947, 1.442695
    %v1996 = vpow.pop %v1995
    %v1997 = vmul.f32 %v1948, 1.442695
    %v1998 = vpow.pop %v1997
    %v1999 = vmul.f32 %v1949, 1.442695
    %v2000 = vpow.pop %v1999
    %v2001 = vmul.f32 %v1950, 1.442695
    %v2002 = vpow.pop %v2001
    %v2003 = vmul.f32 %v1951, 1.442695
    %v2004 = vpow.pop %v2003
    %v2005 = vmul.f32 %v1952, 1.442695
    %v2006 = vpow.pop %v2005
    %v2007 = vmul.f32 %v1953, 1.442695
    %v2008 = vpow.pop %v2007
    %v2009 = vmul.f32 %v1954, 1.442695
    %v2010 = vpow.pop %v2009
    %v2011 = vmul.f32 %v1955, 1.442695
    %v2012 = vpow.pop %v2011
    %v2013 = vmul.f32 %v1956, 1.442695
    %v2014 = vpow.pop %v2013
    %v2015 = vmul.f32 %v1957, 1.442695
    %v2016 = vpow.pop %v2015
    %v2017 = vmul.f32 %v1958, 1.442695
    %v2018 = vpow.pop %v2017
    %v2019 = vmul.f32 %v1959, 1.442695
    %v2020 = vpow.pop %v2019
    %v2021 = vmul.f32 %v1960, 1.442695
    %v2022 = vpow.pop %v2021
    %v2023 = vmul.f32 %v1961, 1.442695
    %v2024 = vpow.pop %v2023
    %v2025 = vmul.f32 %v1962, 1.442695
    %v2026 = vpow.pop %v2025
    %v2027 = vadd.f32 %v1964, 1.0
    %v2028 = vadd.f32 %v1966, 1.0
    %v2029 = vadd.f32 %v1968, 1.0
    %v2030 = vadd.f32 %v1970, 1.0
    %v2031 = vadd.f32 %v1972, 1.0
    %v2032 = vadd.f32 %v1974, 1.0
    %v2033 = vadd.f32 %v1976, 1.0
    %v2034 = vadd.f32 %v1978, 1.0
    %v2035 = vadd.f32 %v1980, 1.0
    %v2036 = vadd.f32 %v1982, 1.0
    %v2037 = vadd.f32 %v1984, 1.0
    %v2038 = vadd.f32 %v1986, 1.0
    %v2039 = vadd.f32 %v1988, 1.0
    %v2040 = vadd.f32 %v1990, 1.0
    %v2041 = vadd.f32 %v1992, 1.0
    %v2042 = vadd.f32 %v1994, 1.0
    %v2043 = vadd.f32 %v1996, 1.0
    %v2044 = vadd.f32 %v1998, 1.0
    %v2045 = vadd.f32 %v2000, 1.0
    %v2046 = vadd.f32 %v2002, 1.0
    %v2047 = vadd.f32 %v2004, 1.0
    %v2048 = vadd.f32 %v2006, 1.0
    %v2049 = vadd.f32 %v2008, 1.0
    %v2050 = vadd.f32 %v2010, 1.0
    %v2051 = vadd.f32 %v2012, 1.0
    %v2052 = vadd.f32 %v2014, 1.0
    %v2053 = vadd.f32 %v2016, 1.0
    %v2054 = vadd.f32 %v2018, 1.0
    %v2055 = vadd.f32 %v2020, 1.0
    %v2056 = vadd.f32 %v2022, 1.0
    %v2057 = vadd.f32 %v2024, 1.0
    %v2058 = vadd.f32 %v2026, 1.0
    %v2059 = vrcp.pop %v2027
    %v2060 = vrcp.pop %v2028
    %v2061 = vrcp.pop %v2029
    %v2062 = vrcp.pop %v2030
    %v2063 = vrcp.pop %v2031
    %v2064 = vrcp.pop %v2032
    %v2065 = vrcp.pop %v2033
    %v2066 = vrcp.pop %v2034
    %v2067 = vrcp.pop %v2035
    %v2068 = vrcp.pop %v2036
    %v2069 = vrcp.pop %v2037
    %v2070 = vrcp.pop %v2038
    %v2071 = vrcp.pop %v2039
    %v2072 = vrcp.pop %v2040
    %v2073 = vrcp.pop %v2041
    %v2074 = vrcp.pop %v2042
    %v2075 = vrcp.pop %v2043
    %v2076 = vrcp.pop %v2044
    %v2077 = vrcp.pop %v2045
    %v2078 = vrcp.pop %v2046
    %v2079 = vrcp.pop %v2047
    %v2080 = vrcp.pop %v2048
    %v2081 = vrcp.pop %v2049
    %v2082 = vrcp.pop %v2050
    %v2083 = vrcp.pop %v2051
    %v2084 = vrcp.pop %v2052
    %v2085 = vrcp.pop %v2053
    %v2086 = vrcp.pop %v2054
    %v2087 = vrcp.pop %v2055
    %v2088 = vrcp.pop %v2056
    %v2089 = vrcp.pop %v2057
    %v2090 = vrcp.pop %v2058
    %v2091 = vadd.f32 %v1605, %v1836
    %v2092 = vadd.f32 %v1608, %v1838
    %v2093 = vadd.f32 %v1611, %v1840
    %v2094 = vadd.f32 %v1614, %v1842
    %v2095 = vadd.f32 %v1617, %v1844
    %v2096 = vadd.f32 %v1620, %v1846
    %v2097 = vadd.f32 %v1623, %v1848
    %v2098 = vadd.f32 %v1626, %v1850
    %v2099 = vadd.f32 %v1629, %v1852
    %v2100 = vadd.f32 %v1632, %v1854
    %v2101 = vadd.f32 %v1635, %v1856
    %v2102 = vadd.f32 %v1638, %v1858
    %v2103 = vadd.f32 %v1641, %v1860
    %v2104 = vadd.f32 %v1644, %v1862
    %v2105 = vadd.f32 %v1647, %v1864
    %v2106 = vadd.f32 %v1650, %v1866
    %v2107 = vadd.f32 %v1653, %v1868
    %v2108 = vadd.f32 %v1656, %v1870
    %v2109 = vadd.f32 %v1659, %v1872
    %v2110 = vadd.f32 %v1662, %v1874
    %v2111 = vadd.f32 %v1665, %v1876
    %v2112 = vadd.f32 %v1668, %v1878
    %v2113 = vadd.f32 %v1671, %v1880
    %v2114 = vadd.f32 %v1674, %v1882
    %v2115 = vadd.f32 %v1677, %v1884
    %v2116 = vadd.f32 %v1680, %v1886
    %v2117 = vadd.f32 %v1683, %v1888
    %v2118 = vadd.f32 %v1686, %v1890
    %v2119 = vadd.f32 %v1689, %v1892
    %v2120 = vadd.f32 %v1692, %v1894
    %v2121 = vadd.f32 %v1695, %v1896
    %v2122 = vadd.f32 %v1698, %v1898
    %v2123 = vsub.f32 0.0, %v2091
    %v2124 = vsub.f32 0.0, %v2092
    %v2125 = vsub.f32 0.0, %v2093
    %v2126 = vsub.f32 0.0, %v2094
    %v2127 = vsub.f32 0.0, %v2095
    %v2128 = vsub.f32 0.0, %v2096
    %v2129 = vsub.f32 0.0, %v2097
    %v2130 = vsub.f32 0.0, %v2098
    %v2131 = vsub.f32 0.0, %v2099
    %v2132 = vsub.f32 0.0, %v2100
    %v2133 = vsub.f32 0.0, %v2101
    %v2134 = vsub.f32 0.0, %v2102
    %v2135 = vsub.f32 0.0, %v2103
    %v2136 = vsub.f32 0.0, %v2104
    %v2137 = vsub.f32 0.0, %v2105
    %v2138 = vsub.f32 0.0, %v2106
    %v2139 = vsub.f32 0.0, %v2107
    %v2140 = vsub.f32 0.0, %v2108
    %v2141 = vsub.f32 0.0, %v2109
    %v2142 = vsub.f32 0.0, %v2110
    %v2143 = vsub.f32 0.0, %v2111
    %v2144 = vsub.f32 0.0, %v2112
    %v2145 = vsub.f32 0.0, %v2113
    %v2146 = vsub.f32 0.0, %v2114
    %v2147 = vsub.f32 0.0, %v2115
    %v2148 = vsub.f32 0.0, %v2116
    %v2149 = vsub.f32 0.0, %v2117
    %v2150 = vsub.f32 0.0, %v2118
    %v2151 = vsub.f32 0.0, %v2119
    %v2152 = vsub.f32 0.0, %v2120
    %v2153 = vsub.f32 0.0, %v2121
    %v2154 = vsub.f32 0.0, %v2122
    %v2155 = vmul.f32 %v2123, 1.442695
    %v2156 = vpow.pop %v2155
    %v2157 = vmul.f32 %v2124, 1.442695
    %v2158 = vpow.pop %v2157
    %v2159 = vmul.f32 %v2125, 1.442695
    %v2160 = vpow.pop %v2159
    %v2161 = vmul.f32 %v2126, 1.442695
    %v2162 = vpow.pop %v2161
    %v2163 = vmul.f32 %v2127, 1.442695
    %v2164 = vpow.pop %v2163
    %v2165 = vmul.f32 %v2128, 1.442695
    %v2166 = vpow.pop %v2165
    %v2167 = vmul.f32 %v2129, 1.442695
    %v2168 = vpow.pop %v2167
    %v2169 = vmul.f32 %v2130, 1.442695
    %v2170 = vpow.pop %v2169
    %v2171 = vmul.f32 %v2131, 1.442695
    %v2172 = vpow.pop %v2171
    %v2173 = vmul.f32 %v2132, 1.442695
    %v2174 = vpow.pop %v2173
    %v2175 = vmul.f32 %v2133, 1.442695
    %v2176 = vpow.pop %v2175
    %v2177 = vmul.f32 %v2134, 1.442695
    %v2178 = vpow.pop %v2177
    %v2179 = vmul.f32 %v2135, 1.442695
    %v2180 = vpow.pop %v2179
    %v2181 = vmul.f32 %v2136, 1.442695
    %v2182 = vpow.pop %v2181
    %v2183 = vmul.f32 %v2137, 1.442695
    %v2184 = vpow.pop %v2183
    %v2185 = vmul.f32 %v2138, 1.442695
    %v2186 = vpow.pop %v2185
    %v2187 = vmul.f32 %v2139, 1.442695
    %v2188 = vpow.pop %v2187
    %v2189 = vmul.f32 %v2140, 1.442695
    %v2190 = vpow.pop %v2189
    %v2191 = vmul.f32 %v2141, 1.442695
    %v2192 = vpow.pop %v2191
    %v2193 = vmul.f32 %v2142, 1.442695
    %v2194 = vpow.pop %v2193
    %v2195 = vmul.f32 %v2143, 1.442695
    %v2196 = vpow.pop %v2195
    %v2197 = vmul.f32 %v2144, 1.442695
    %v2198 = vpow.pop %v2197
    %v2199 = vmul.f32 %v2145, 1.442695
    %v2200 = vpow.pop %v2199
    %v2201 = vmul.f32 %v2146, 1.442695
    %v2202 = vpow.pop %v2201
    %v2203 = vmul.f32 %v2147, 1.442695
    %v2204 = vpow.pop %v2203
    %v2205 = vmul.f32 %v2148, 1.442695
    %v2206 = vpow.pop %v2205
    %v2207 = vmul.f32 %v2149, 1.442695
    %v2208 = vpow.pop %v2207
    %v2209 = vmul.f32 %v2150, 1.442695
    %v2210 = vpow.pop %v2209
    %v2211 = vmul.f32 %v2151, 1.442695
    %v2212 = vpow.pop %v2211
    %v2213 = vmul.f32 %v2152, 1.442695
    %v2214 = vpow.pop %v2213
    %v2215 = vmul.f32 %v2153, 1.442695
    %v2216 = vpow.pop %v2215
    %v2217 = vmul.f32 %v2154, 1.442695
    %v2218 = vpow.pop %v2217
    %v2219 = vadd.f32 %v2156, 1.0
    %v2220 = vadd.f32 %v2158, 1.0
    %v2221 = vadd.f32 %v2160, 1.0
    %v2222 = vadd.f32 %v2162, 1.0
    %v2223 = vadd.f32 %v2164, 1.0
    %v2224 = vadd.f32 %v2166, 1.0
    %v2225 = vadd.f32 %v2168, 1.0
    %v2226 = vadd.f32 %v2170, 1.0
    %v2227 = vadd.f32 %v2172, 1.0
    %v2228 = vadd.f32 %v2174, 1.0
    %v2229 = vadd.f32 %v2176, 1.0
    %v2230 = vadd.f32 %v2178, 1.0
    %v2231 = vadd.f32 %v2180, 1.0
    %v2232 = vadd.f32 %v2182, 1.0
    %v2233 = vadd.f32 %v2184, 1.0
    %v2234 = vadd.f32 %v2186, 1.0
    %v2235 = vadd.f32 %v2188, 1.0
    %v2236 = vadd.f32 %v2190, 1.0
    %v2237 = vadd.f32 %v2192, 1.0
    %v2238 = vadd.f32 %v2194, 1.0
    %v2239 = vadd.f32 %v2196, 1.0
    %v2240 = vadd.f32 %v2198, 1.0
    %v2241 = vadd.f32 %v2200, 1.0
    %v2242 = vadd.f32 %v2202, 1.0
    %v2243 = vadd.f32 %v2204, 1.0
    %v2244 = vadd.f32 %v2206, 1.0
    %v2245 = vadd.f32 %v2208, 1.0
    %v2246 = vadd.f32 %v2210, 1.0
    %v2247 = vadd.f32 %v2212, 1.0
    %v2248 = vadd.f32 %v2214, 1.0
    %v2249 = vadd.f32 %v2216, 1.0
    %v2250 = vadd.f32 %v2218, 1.0
    %v2251 = vrcp.pop %v2219
    %v2252 = vrcp.pop %v2220
    %v2253 = vrcp.pop %v2221
    %v2254 = vrcp.pop %v2222
    %v2255 = vrcp.pop %v2223
    %v2256 = vrcp.pop %v2224
    %v2257 = vrcp.pop %v2225
    %v2258 = vrcp.pop %v2226
    %v2259 = vrcp.pop %v2227
    %v2260 = vrcp.pop %v2228
    %v2261 = vrcp.pop %v2229
    %v2262 = vrcp.pop %v2230
    %v2263 = vrcp.pop %v2231
    %v2264 = vrcp.pop %v2232
    %v2265 = vrcp.pop %v2233
    %v2266 = vrcp.pop %v2234
    %v2267 = vrcp.pop %v2235
    %v2268 = vrcp.pop %v2236
    %v2269 = vrcp.pop %v2237
    %v2270 = vrcp.pop %v2238
    %v2271 = vrcp.pop %v2239
    %v2272 = vrcp.pop %v2240
    %v2273 = vrcp.pop %v2241
    %v2274 = vrcp.pop %v2242
    %v2275 = vrcp.pop %v2243
    %v2276 = vrcp.pop %v2244
    %v2277 = vrcp.pop %v2245
    %v2278 = vrcp.pop %v2246
    %v2279 = vrcp.pop %v2247
    %v2280 = vrcp.pop %v2248
    %v2281 = vrcp.pop %v2249
    %v2282 = vrcp.pop %v2250
    %v2283 = vlaneseq
    %v2284 = vand.u32 %v2283, 127
    %vm2285 = vcmp.lt.s32.totalorder %v2284, 64
    %v2286 = vsel %vm2285, %v2059, %v2251
    %v2287 = vsel %vm2285, %v2060, %v2252
    %v2288 = vsel %vm2285, %v2061, %v2253
    %v2289 = vsel %vm2285, %v2062, %v2254
    %v2290 = vsel %vm2285, %v2063, %v2255
    %v2291 = vsel %vm2285, %v2064, %v2256
    %v2292 = vsel %vm2285, %v2065, %v2257
    %v2293 = vsel %vm2285, %v2066, %v2258
    %v2294 = vsel %vm2285, %v2067, %v2259
    %v2295 = vsel %vm2285, %v2068, %v2260
    %v2296 = vsel %vm2285, %v2069, %v2261
    %v2297 = vsel %vm2285, %v2070, %v2262
    %v2298 = vsel %vm2285, %v2071, %v2263
    %v2299 = vsel %vm2285, %v2072, %v2264
    %v2300 = vsel %vm2285, %v2073, %v2265
    %v2301 = vsel %vm2285, %v2074, %v2266
    %v2302 = vsel %vm2285, %v2075, %v2267
    %v2303 = vsel %vm2285, %v2076, %v2268
    %v2304 = vsel %vm2285, %v2077, %v2269
    %v2305 = vsel %vm2285, %v2078, %v2270
    %v2306 = vsel %vm2285, %v2079, %v2271
    %v2307 = vsel %vm2285, %v2080, %v2272
    %v2308 = vsel %vm2285, %v2081, %v2273
    %v2309 = vsel %vm2285, %v2082, %v2274
    %v2310 = vsel %vm2285, %v2083, %v2275
    %v2311 = vsel %vm2285, %v2084, %v2276
    %v2312 = vsel %vm2285, %v2085, %v2277
    %v2313 = vsel %vm2285, %v2086, %v2278
    %v2314 = vsel %vm2285, %v2087, %v2279
    %v2315 = vsel %vm2285, %v2088, %v2280
    %v2316 = vsel %vm2285, %v2089, %v2281
    %v2317 = vsel %vm2285, %v2090, %v2282
    %v2318 = vpack.c.bf16 %v1071, %v1070
    %v2319 = vpack.c.bf16 %v1073, %v1072
    %v2320 = vpack.c.bf16 %v1075, %v1074
    %v2321 = vpack.c.bf16 %v1077, %v1076
    %v2322 = vpack.c.bf16 %v1079, %v1078
    %v2323 = vpack.c.bf16 %v1081, %v1080
    %v2324 = vpack.c.bf16 %v1083, %v1082
    %v2325 = vpack.c.bf16 %v1085, %v1084
    %v2326 = vpack.c.bf16 %v1087, %v1086
    %v2327 = vpack.c.bf16 %v1089, %v1088
    %v2328 = vpack.c.bf16 %v1091, %v1090
    %v2329 = vpack.c.bf16 %v1093, %v1092
    %v2330 = vpack.c.bf16 %v1095, %v1094
    %v2331 = vpack.c.bf16 %v1097, %v1096
    %v2332 = vpack.c.bf16 %v1099, %v1098
    %v2333 = vpack.c.bf16 %v1101, %v1100
    %v2334 = vld [vmem:[#allocation5] sm:$0xf]
    %v2335 = vld [vmem:[#allocation5 + $0x4] sm:$0xf]
    %v2336 = vld [vmem:[#allocation5 + $0x8] sm:$0xf]
    %v2337 = vld [vmem:[#allocation5 + $0xc] sm:$0xf]
    %v2338 = vld [vmem:[#allocation5 + $0x10] sm:$0xf]
    %v2339 = vld [vmem:[#allocation5 + $0x14] sm:$0xf]
    %v2340 = vld [vmem:[#allocation5 + $0x18] sm:$0xf]
    %v2341 = vld [vmem:[#allocation5 + $0x1c] sm:$0xf]
    %v2342 = vld [vmem:[#allocation5 + $0x20] sm:$0xf]
    %v2343 = vld [vmem:[#allocation5 + $0x24] sm:$0xf]
    %v2344 = vld [vmem:[#allocation5 + $0x28] sm:$0xf]
    %v2345 = vld [vmem:[#allocation5 + $0x2c] sm:$0xf]
    %v2346 = vld [vmem:[#allocation5 + $0x30] sm:$0xf]
    %v2347 = vld [vmem:[#allocation5 + $0x34] sm:$0xf]
    %v2348 = vld [vmem:[#allocation5 + $0x38] sm:$0xf]
    %v2349 = vld [vmem:[#allocation5 + $0x3c] sm:$0xf]
    %v2366 = vunpack.c.l.b16 %v2334
    %v2367 = vunpack.c.l.b16 %v2335
    %v2368 = vunpack.c.l.b16 %v2336
    %v2369 = vunpack.c.l.b16 %v2337
    %v2370 = vunpack.c.l.b16 %v2338
    %v2371 = vunpack.c.l.b16 %v2339
    %v2372 = vunpack.c.l.b16 %v2340
    %v2373 = vunpack.c.l.b16 %v2341
    %v2374 = vunpack.c.l.b16 %v2342
    %v2375 = vunpack.c.l.b16 %v2343
    %v2376 = vunpack.c.l.b16 %v2344
    %v2377 = vunpack.c.l.b16 %v2345
    %v2378 = vunpack.c.l.b16 %v2346
    %v2379 = vunpack.c.l.b16 %v2347
    %v2380 = vunpack.c.l.b16 %v2348
    %v2381 = vunpack.c.l.b16 %v2349
    %v2382 = vpack.c.b16 %v2367, %v2366
    %v2383 = vpack.c.b16 %v2369, %v2368
    %v2384 = vpack.c.b16 %v2371, %v2370
    %v2385 = vpack.c.b16 %v2373, %v2372
    %v2386 = vpack.c.b16 %v2375, %v2374
    %v2387 = vpack.c.b16 %v2377, %v2376
    %v2388 = vpack.c.b16 %v2379, %v2378
    %v2389 = vpack.c.b16 %v2381, %v2380
    %2398 = vmatprep.subr.bf16.mxu0 0
    %2399 = vmatpush1.bf16.msra.mxu0 %v2389
    %2400 = vmatprep.subr.bf16.mxu0 0
    %2401 = vmatpush1.bf16.msra.mxu0 %v2388
    %2402 = vmatprep.subr.bf16.mxu0 0
    %2403 = vmatpush1.bf16.msra.mxu0 %v2387
    %2404 = vmatprep.subr.bf16.mxu0 0
    %2405 = vmatpush1.bf16.msra.mxu0 %v2386
    %2406 = vmatprep.subr.bf16.mxu0 0
    %2407 = vmatpush1.bf16.msra.mxu0 %v2385
    %2408 = vmatprep.subr.bf16.mxu0 0
    %2409 = vmatpush1.bf16.msra.mxu0 %v2384
    %2410 = vmatprep.subr.bf16.mxu0 0
    %2411 = vmatpush1.bf16.msra.mxu0 %v2383
    %2412 = vmatprep.subr.bf16.mxu0 0
    %2413 = vmatpush1.bf16.msra.mxu0 %v2382
    %2414 = vmatprep.subr.bf16.mxu0 0
    %2415 = vmatpush2.bf16.msra.mxu0 0
    %2416 = vmatprep.subr.bf16.mxu0 0
    %2417 = vmatpush2.bf16.msra.mxu0 0
    %2418 = vmatprep.subr.bf16.mxu0 0
    %2419 = vmatpush2.bf16.msra.mxu0 0
    %2420 = vmatprep.subr.bf16.mxu0 0
    %2421 = vmatpush2.bf16.msra.mxu0 0
    %2422 = vmatprep.subr.bf16.mxu0 0
    %2423 = vmatpush2.bf16.msra.mxu0 0
    %2424 = vmatprep.subr.bf16.mxu0 0
    %2425 = vmatpush2.bf16.msra.mxu0 0
    %2426 = vmatprep.subr.bf16.mxu0 0
    %2427 = vmatpush2.bf16.msra.mxu0 0
    %2428 = vmatprep.subr.bf16.mxu0 0
    %2429 = vmatpush2.bf16.msra.mxu0 0
    %2430 = vmatprep.mubr.bf16.mxu0 0
    %2431 = vmatmul.mubr.bf16.gmra.mxu0 %v2318
    %v2432 = vpop.f32.mrf.mxu0
    %v2433 = vadd.f32 0.0, %v2432
    %v2434 = vpop.f32.mrf.mxu0
    %v2435 = vpop.f32.mrf.mxu0
    %v2436 = vadd.f32 0.0, %v2435
    %v2437 = vpop.f32.mrf.mxu0
    %2438 = vmatprep.mubr.bf16.mxu0 0
    %2439 = vmatmul.mubr.bf16.gmra.mxu0 %v2319
    %v2440 = vpop.f32.mrf.mxu0
    %v2441 = vadd.f32 0.0, %v2440
    %v2442 = vpop.f32.mrf.mxu0
    %v2443 = vpop.f32.mrf.mxu0
    %v2444 = vadd.f32 0.0, %v2443
    %v2445 = vpop.f32.mrf.mxu0
    %2446 = vmatprep.mubr.bf16.mxu0 0
    %2447 = vmatmul.mubr.bf16.gmra.mxu0 %v2320
    %v2448 = vpop.f32.mrf.mxu0
    %v2449 = vadd.f32 0.0, %v2448
    %v2450 = vpop.f32.mrf.mxu0
    %v2451 = vpop.f32.mrf.mxu0
    %v2452 = vadd.f32 0.0, %v2451
    %v2453 = vpop.f32.mrf.mxu0
    %2454 = vmatprep.mubr.bf16.mxu0 0
    %2455 = vmatmul.mubr.bf16.gmra.mxu0 %v2321
    %v2456 = vpop.f32.mrf.mxu0
    %v2457 = vadd.f32 0.0, %v2456
    %v2458 = vpop.f32.mrf.mxu0
    %v2459 = vpop.f32.mrf.mxu0
    %v2460 = vadd.f32 0.0, %v2459
    %v2461 = vpop.f32.mrf.mxu0
    %2462 = vmatprep.mubr.bf16.mxu0 0
    %2463 = vmatmul.mubr.bf16.gmra.mxu0 %v2322
    %v2464 = vpop.f32.mrf.mxu0
    %v2465 = vadd.f32 0.0, %v2464
    %v2466 = vpop.f32.mrf.mxu0
    %v2467 = vpop.f32.mrf.mxu0
    %v2468 = vadd.f32 0.0, %v2467
    %v2469 = vpop.f32.mrf.mxu0
    %2470 = vmatprep.mubr.bf16.mxu0 0
    %2471 = vmatmul.mubr.bf16.gmra.mxu0 %v2323
    %v2472 = vpop.f32.mrf.mxu0
    %v2473 = vadd.f32 0.0, %v2472
    %v2474 = vpop.f32.mrf.mxu0
    %v2475 = vpop.f32.mrf.mxu0
    %v2476 = vadd.f32 0.0, %v2475
    %v2477 = vpop.f32.mrf.mxu0
    %2478 = vmatprep.mubr.bf16.mxu0 0
    %2479 = vmatmul.mubr.bf16.gmra.mxu0 %v2324
    %v2480 = vpop.f32.mrf.mxu0
    %v2481 = vadd.f32 0.0, %v2480
    %v2482 = vpop.f32.mrf.mxu0
    %v2483 = vpop.f32.mrf.mxu0
    %v2484 = vadd.f32 0.0, %v2483
    %v2485 = vpop.f32.mrf.mxu0
    %2486 = vmatprep.mubr.bf16.mxu0 0
    %2487 = vmatmul.mubr.bf16.gmra.mxu0 %v2325
    %v2488 = vpop.f32.mrf.mxu0
    %v2489 = vadd.f32 0.0, %v2488
    %v2490 = vpop.f32.mrf.mxu0
    %v2491 = vpop.f32.mrf.mxu0
    %v2492 = vadd.f32 0.0, %v2491
    %v2493 = vpop.f32.mrf.mxu0
    %2494 = vmatprep.mubr.bf16.mxu0 0
    %2495 = vmatmul.mubr.bf16.gmra.mxu0 %v2326
    %v2496 = vpop.f32.mrf.mxu0
    %v2497 = vadd.f32 0.0, %v2496
    %v2498 = vpop.f32.mrf.mxu0
    %v2499 = vpop.f32.mrf.mxu0
    %v2500 = vadd.f32 0.0, %v2499
    %v2501 = vpop.f32.mrf.mxu0
    %2502 = vmatprep.mubr.bf16.mxu0 0
    %2503 = vmatmul.mubr.bf16.gmra.mxu0 %v2327
    %v2504 = vpop.f32.mrf.mxu0
    %v2505 = vadd.f32 0.0, %v2504
    %v2506 = vpop.f32.mrf.mxu0
    %v2507 = vpop.f32.mrf.mxu0
    %v2508 = vadd.f32 0.0, %v2507
    %v2509 = vpop.f32.mrf.mxu0
    %2510 = vmatprep.mubr.bf16.mxu0 0
    %2511 = vmatmul.mubr.bf16.gmra.mxu0 %v2328
    %v2512 = vpop.f32.mrf.mxu0
    %v2513 = vadd.f32 0.0, %v2512
    %v2514 = vpop.f32.mrf.mxu0
    %v2515 = vpop.f32.mrf.mxu0
    %v2516 = vadd.f32 0.0, %v2515
    %v2517 = vpop.f32.mrf.mxu0
    %2518 = vmatprep.mubr.bf16.mxu0 0
    %2519 = vmatmul.mubr.bf16.gmra.mxu0 %v2329
    %v2520 = vpop.f32.mrf.mxu0
    %v2521 = vadd.f32 0.0, %v2520
    %v2522 = vpop.f32.mrf.mxu0
    %v2523 = vpop.f32.mrf.mxu0
    %v2524 = vadd.f32 0.0, %v2523
    %v2525 = vpop.f32.mrf.mxu0
    %2526 = vmatprep.mubr.bf16.mxu0 0
    %2527 = vmatmul.mubr.bf16.gmra.mxu0 %v2330
    %v2528 = vpop.f32.mrf.mxu0
    %v2529 = vadd.f32 0.0, %v2528
    %v2530 = vpop.f32.mrf.mxu0
    %v2531 = vpop.f32.mrf.mxu0
    %v2532 = vadd.f32 0.0, %v2531
    %v2533 = vpop.f32.mrf.mxu0
    %2534 = vmatprep.mubr.bf16.mxu0 0
    %2535 = vmatmul.mubr.bf16.gmra.mxu0 %v2331
    %v2536 = vpop.f32.mrf.mxu0
    %v2537 = vadd.f32 0.0, %v2536
    %v2538 = vpop.f32.mrf.mxu0
    %v2539 = vpop.f32.mrf.mxu0
    %v2540 = vadd.f32 0.0, %v2539
    %v2541 = vpop.f32.mrf.mxu0
    %2542 = vmatprep.mubr.bf16.mxu0 0
    %2543 = vmatmul.mubr.bf16.gmra.mxu0 %v2332
    %v2544 = vpop.f32.mrf.mxu0
    %v2545 = vadd.f32 0.0, %v2544
    %v2546 = vpop.f32.mrf.mxu0
    %v2547 = vpop.f32.mrf.mxu0
    %v2548 = vadd.f32 0.0, %v2547
    %v2549 = vpop.f32.mrf.mxu0
    %2550 = vmatprep.mubr.bf16.mxu0 0
    %2551 = vmatmul.mubr.bf16.gmra.mxu0 %v2333
    %v2552 = vpop.f32.mrf.mxu0
    %v2553 = vadd.f32 0.0, %v2552
    %v2554 = vpop.f32.mrf.mxu0
    %v2555 = vpop.f32.mrf.mxu0
    %v2556 = vadd.f32 0.0, %v2555
    %v2557 = vpop.f32.mrf.mxu0
    %2558 = vdwg.mxu0
    %v2559 = vsub.f32 %v2433, %v1243
    %v2560 = vsub.f32 %v2436, %v1247
    %v2561 = vsub.f32 %v2441, %v1253
    %v2562 = vsub.f32 %v2444, %v1257
    %v2563 = vsub.f32 %v2449, %v1263
    %v2564 = vsub.f32 %v2452, %v1267
    %v2565 = vsub.f32 %v2457, %v1273
    %v2566 = vsub.f32 %v2460, %v1277
    %v2567 = vsub.f32 %v2465, %v1283
    %v2568 = vsub.f32 %v2468, %v1287
    %v2569 = vsub.f32 %v2473, %v1293
    %v2570 = vsub.f32 %v2476, %v1297
    %v2571 = vsub.f32 %v2481, %v1303
    %v2572 = vsub.f32 %v2484, %v1307
    %v2573 = vsub.f32 %v2489, %v1313
    %v2574 = vsub.f32 %v2492, %v1317
    %v2575 = vsub.f32 %v2497, %v1323
    %v2576 = vsub.f32 %v2500, %v1327
    %v2577 = vsub.f32 %v2505, %v1333
    %v2578 = vsub.f32 %v2508, %v1337
    %v2579 = vsub.f32 %v2513, %v1343
    %v2580 = vsub.f32 %v2516, %v1347
    %v2581 = vsub.f32 %v2521, %v1353
    %v2582 = vsub.f32 %v2524, %v1357
    %v2583 = vsub.f32 %v2529, %v1363
    %v2584 = vsub.f32 %v2532, %v1367
    %v2585 = vsub.f32 %v2537, %v1373
    %v2586 = vsub.f32 %v2540, %v1377
    %v2587 = vsub.f32 %v2545, %v1383
    %v2588 = vsub.f32 %v2548, %v1387
    %v2589 = vsub.f32 %v2553, %v1393
    %v2590 = vsub.f32 %v2556, %v1397
    %v2591 = vmul.f32 %v2286, %v2559
    %v2592 = vmul.f32 %v2287, %v2560
    %v2593 = vmul.f32 %v2288, %v2561
    %v2594 = vmul.f32 %v2289, %v2562
    %v2595 = vmul.f32 %v2290, %v2563
    %v2596 = vmul.f32 %v2291, %v2564
    %v2597 = vmul.f32 %v2292, %v2565
    %v2598 = vmul.f32 %v2293, %v2566
    %v2599 = vmul.f32 %v2294, %v2567
    %v2600 = vmul.f32 %v2295, %v2568
    %v2601 = vmul.f32 %v2296, %v2569
    %v2602 = vmul.f32 %v2297, %v2570
    %v2603 = vmul.f32 %v2298, %v2571
    %v2604 = vmul.f32 %v2299, %v2572
    %v2605 = vmul.f32 %v2300, %v2573
    %v2606 = vmul.f32 %v2301, %v2574
    %v2607 = vmul.f32 %v2302, %v2575
    %v2608 = vmul.f32 %v2303, %v2576
    %v2609 = vmul.f32 %v2304, %v2577
    %v2610 = vmul.f32 %v2305, %v2578
    %v2611 = vmul.f32 %v2306, %v2579
    %v2612 = vmul.f32 %v2307, %v2580
    %v2613 = vmul.f32 %v2308, %v2581
    %v2614 = vmul.f32 %v2309, %v2582
    %v2615 = vmul.f32 %v2310, %v2583
    %v2616 = vmul.f32 %v2311, %v2584
    %v2617 = vmul.f32 %v2312, %v2585
    %v2618 = vmul.f32 %v2313, %v2586
    %v2619 = vmul.f32 %v2314, %v2587
    %v2620 = vmul.f32 %v2315, %v2588
    %v2621 = vmul.f32 %v2316, %v2589
    %v2622 = vmul.f32 %v2317, %v2590
    %v2623 = vadd.f32 %v1243, %v2591
    %v2624 = vadd.f32 %v1247, %v2592
    %v2625 = vadd.f32 %v1253, %v2593
    %v2626 = vadd.f32 %v1257, %v2594
    %v2627 = vadd.f32 %v1263, %v2595
    %v2628 = vadd.f32 %v1267, %v2596
    %v2629 = vadd.f32 %v1273, %v2597
    %v2630 = vadd.f32 %v1277, %v2598
    %v2631 = vadd.f32 %v1283, %v2599
    %v2632 = vadd.f32 %v1287, %v2600
    %v2633 = vadd.f32 %v1293, %v2601
    %v2634 = vadd.f32 %v1297, %v2602
    %v2635 = vadd.f32 %v1303, %v2603
    %v2636 = vadd.f32 %v1307, %v2604
    %v2637 = vadd.f32 %v1313, %v2605
    %v2638 = vadd.f32 %v1317, %v2606
    %v2639 = vadd.f32 %v1323, %v2607
    %v2640 = vadd.f32 %v1327, %v2608
    %v2641 = vadd.f32 %v1333, %v2609
    %v2642 = vadd.f32 %v1337, %v2610
    %v2643 = vadd.f32 %v1343, %v2611
    %v2644 = vadd.f32 %v1347, %v2612
    %v2645 = vadd.f32 %v1353, %v2613
    %v2646 = vadd.f32 %v1357, %v2614
    %v2647 = vadd.f32 %v1363, %v2615
    %v2648 = vadd.f32 %v1367, %v2616
    %v2649 = vadd.f32 %v1373, %v2617
    %v2650 = vadd.f32 %v1377, %v2618
    %v2651 = vadd.f32 %v1383, %v2619
    %v2652 = vadd.f32 %v1387, %v2620
    %v2653 = vadd.f32 %v1393, %v2621
    %v2654 = vadd.f32 %v1397, %v2622
    %v2655 = vlaneseq
    %v2656 = vshrl.u32 %v2655, 7
    %v2657 = vsub.s32 0, %v2656
    %v2658 = vrot.slane %v1106, %v2657
    %v2659 = vadd.f32 %v2623, %v2658
    %v2660 = vadd.f32 %v2624, %v2658
    %v2661 = vadd.f32 %v2625, %v2658
    %v2662 = vadd.f32 %v2626, %v2658
    %v2663 = vadd.f32 %v2627, %v2658
    %v2664 = vadd.f32 %v2628, %v2658
    %v2665 = vadd.f32 %v2629, %v2658
    %v2666 = vadd.f32 %v2630, %v2658
    %v2667 = vadd.f32 %v2631, %v2658
    %v2668 = vadd.f32 %v2632, %v2658
    %v2669 = vadd.f32 %v2633, %v2658
    %v2670 = vadd.f32 %v2634, %v2658
    %v2671 = vadd.f32 %v2635, %v2658
    %v2672 = vadd.f32 %v2636, %v2658
    %v2673 = vadd.f32 %v2637, %v2658
    %v2674 = vadd.f32 %v2638, %v2658
    %v2675 = vadd.f32 %v2639, %v2658
    %v2676 = vadd.f32 %v2640, %v2658
    %v2677 = vadd.f32 %v2641, %v2658
    %v2678 = vadd.f32 %v2642, %v2658
    %v2679 = vadd.f32 %v2643, %v2658
    %v2680 = vadd.f32 %v2644, %v2658
    %v2681 = vadd.f32 %v2645, %v2658
    %v2682 = vadd.f32 %v2646, %v2658
    %v2683 = vadd.f32 %v2647, %v2658
    %v2684 = vadd.f32 %v2648, %v2658
    %v2685 = vadd.f32 %v2649, %v2658
    %v2686 = vadd.f32 %v2650, %v2658
    %v2687 = vadd.f32 %v2651, %v2658
    %v2688 = vadd.f32 %v2652, %v2658
    %v2689 = vadd.f32 %v2653, %v2658
    %v2690 = vadd.f32 %v2654, %v2658
    %v2691 = vpack.c.bf16 %v1404, %v1403
    %v2692 = vpack.c.bf16 %v1406, %v1405
    %v2693 = vpack.c.bf16 %v1408, %v1407
    %v2694 = vpack.c.bf16 %v1410, %v1409
    %v2695 = vpack.c.bf16 %v1412, %v1411
    %v2696 = vpack.c.bf16 %v1414, %v1413
    %v2697 = vpack.c.bf16 %v1416, %v1415
    %v2698 = vpack.c.bf16 %v1418, %v1417
    %v2699 = vpack.c.bf16 %v1420, %v1419
    %v2700 = vpack.c.bf16 %v1422, %v1421
    %v2701 = vpack.c.bf16 %v1424, %v1423
    %v2702 = vpack.c.bf16 %v1426, %v1425
    %v2703 = vpack.c.bf16 %v1428, %v1427
    %v2704 = vpack.c.bf16 %v1430, %v1429
    %v2705 = vpack.c.bf16 %v1432, %v1431
    %v2706 = vpack.c.bf16 %v1434, %v1433
    %v2707 = vpack.c.bf16 %v2660, %v2659
    %v2708 = vpack.c.bf16 %v2662, %v2661
    %v2709 = vpack.c.bf16 %v2664, %v2663
    %v2710 = vpack.c.bf16 %v2666, %v2665
    %v2711 = vpack.c.bf16 %v2668, %v2667
    %v2712 = vpack.c.bf16 %v2670, %v2669
    %v2713 = vpack.c.bf16 %v2672, %v2671
    %v2714 = vpack.c.bf16 %v2674, %v2673
    %v2715 = vpack.c.bf16 %v2676, %v2675
    %v2716 = vpack.c.bf16 %v2678, %v2677
    %v2717 = vpack.c.bf16 %v2680, %v2679
    %v2718 = vpack.c.bf16 %v2682, %v2681
    %v2719 = vpack.c.bf16 %v2684, %v2683
    %v2720 = vpack.c.bf16 %v2686, %v2685
    %v2721 = vpack.c.bf16 %v2688, %v2687
    %v2722 = vpack.c.bf16 %v2690, %v2689
    %v2724 = vsel %vm1157, %v2691, 0
    %v2727 = vsel %vm1157, %v2692, 0
    %v2730 = vsel %vm1157, %v2693, 0
    %v2733 = vsel %vm1157, %v2694, 0
    %v2736 = vsel %vm1157, %v2695, 0
    %v2739 = vsel %vm1157, %v2696, 0
    %v2742 = vsel %vm1157, %v2697, 0
    %v2745 = vsel %vm1157, %v2698, 0
    %v2748 = vsel %vm1157, %v2707, 0
    %v2751 = vsel %vm1157, %v2708, 0
    %v2754 = vsel %vm1157, %v2709, 0
    %v2757 = vsel %vm1157, %v2710, 0
    %v2760 = vsel %vm1157, %v2711, 0
    %v2763 = vsel %vm1157, %v2712, 0
    %v2766 = vsel %vm1157, %v2713, 0
    %v2769 = vsel %vm1157, %v2714, 0
    %2771 = vmatprep.subr.bf16.mxu0 0
    %2772 = vmatpush1.bf16.xpose.msra.mxu0 %v2769
    %2773 = vmatprep.subr.bf16.mxu0 0
    %2774 = vmatpush1.bf16.xpose.msra.mxu0 %v2766
    %2775 = vmatprep.subr.bf16.mxu0 0
    %2776 = vmatpush1.bf16.xpose.msra.mxu0 %v2763
    %2777 = vmatprep.subr.bf16.mxu0 0
    %2778 = vmatpush1.bf16.xpose.msra.mxu0 %v2760
    %2779 = vmatprep.subr.bf16.mxu0 0
    %2780 = vmatpush1.bf16.xpose.msra.mxu0 %v2757
    %2781 = vmatprep.subr.bf16.mxu0 0
    %2782 = vmatpush1.bf16.xpose.msra.mxu0 %v2754
    %2783 = vmatprep.subr.bf16.mxu0 0
    %2784 = vmatpush1.bf16.xpose.msra.mxu0 %v2751
    %2785 = vmatprep.subr.bf16.mxu0 0
    %2786 = vmatpush1.bf16.xpose.msra.mxu0 %v2748
    %2787 = vmatprep.subr.bf16.mxu0 0
    %2788 = vmatpush2.bf16.xpose.msra.mxu0 0
    %2789 = vmatprep.subr.bf16.mxu0 0
    %2790 = vmatpush2.bf16.xpose.msra.mxu0 0
    %2791 = vmatprep.subr.bf16.mxu0 0
    %2792 = vmatpush2.bf16.xpose.msra.mxu0 0
    %2793 = vmatprep.subr.bf16.mxu0 0
    %2794 = vmatpush2.bf16.xpose.msra.mxu0 0
    %2795 = vmatprep.subr.bf16.mxu0 0
    %2796 = vmatpush2.bf16.xpose.msra.mxu0 0
    %2797 = vmatprep.subr.bf16.mxu0 0
    %2798 = vmatpush2.bf16.xpose.msra.mxu0 0
    %2799 = vmatprep.subr.bf16.mxu0 0
    %2800 = vmatpush2.bf16.xpose.msra.mxu0 0
    %2801 = vmatprep.subr.bf16.mxu0 0
    %2802 = vmatpush2.bf16.xpose.msra.mxu0 0
    %2803 = vmatprep.mubr.bf16.mxu0 0
    %2804 = vmatmul.mubr.bf16.gmra.mxu0 %v2724
    %v2805 = vpop.f32.mrf.mxu0
    %v2806 = vadd.f32 0.0, %v2805
    %v2807 = vpop.f32.mrf.mxu0
    %v2808 = vpop.f32.mrf.mxu0
    %v2809 = vadd.f32 0.0, %v2808
    %v2810 = vpop.f32.mrf.mxu0
    %2811 = vmatprep.mubr.bf16.mxu0 0
    %2812 = vmatmul.mubr.bf16.gmra.mxu0 %v2727
    %v2813 = vpop.f32.mrf.mxu0
    %v2814 = vadd.f32 0.0, %v2813
    %v2815 = vpop.f32.mrf.mxu0
    %v2816 = vpop.f32.mrf.mxu0
    %v2817 = vadd.f32 0.0, %v2816
    %v2818 = vpop.f32.mrf.mxu0
    %2819 = vmatprep.mubr.bf16.mxu0 0
    %2820 = vmatmul.mubr.bf16.gmra.mxu0 %v2730
    %v2821 = vpop.f32.mrf.mxu0
    %v2822 = vadd.f32 0.0, %v2821
    %v2823 = vpop.f32.mrf.mxu0
    %v2824 = vpop.f32.mrf.mxu0
    %v2825 = vadd.f32 0.0, %v2824
    %v2826 = vpop.f32.mrf.mxu0
    %2827 = vmatprep.mubr.bf16.mxu0 0
    %2828 = vmatmul.mubr.bf16.gmra.mxu0 %v2733
    %v2829 = vpop.f32.mrf.mxu0
    %v2830 = vadd.f32 0.0, %v2829
    %v2831 = vpop.f32.mrf.mxu0
    %v2832 = vpop.f32.mrf.mxu0
    %v2833 = vadd.f32 0.0, %v2832
    %v2834 = vpop.f32.mrf.mxu0
    %2835 = vmatprep.mubr.bf16.mxu0 0
    %2836 = vmatmul.mubr.bf16.gmra.mxu0 %v2736
    %v2837 = vpop.f32.mrf.mxu0
    %v2838 = vadd.f32 0.0, %v2837
    %v2839 = vpop.f32.mrf.mxu0
    %v2840 = vpop.f32.mrf.mxu0
    %v2841 = vadd.f32 0.0, %v2840
    %v2842 = vpop.f32.mrf.mxu0
    %2843 = vmatprep.mubr.bf16.mxu0 0
    %2844 = vmatmul.mubr.bf16.gmra.mxu0 %v2739
    %v2845 = vpop.f32.mrf.mxu0
    %v2846 = vadd.f32 0.0, %v2845
    %v2847 = vpop.f32.mrf.mxu0
    %v2848 = vpop.f32.mrf.mxu0
    %v2849 = vadd.f32 0.0, %v2848
    %v2850 = vpop.f32.mrf.mxu0
    %2851 = vmatprep.mubr.bf16.mxu0 0
    %2852 = vmatmul.mubr.bf16.gmra.mxu0 %v2742
    %v2853 = vpop.f32.mrf.mxu0
    %v2854 = vadd.f32 0.0, %v2853
    %v2855 = vpop.f32.mrf.mxu0
    %v2856 = vpop.f32.mrf.mxu0
    %v2857 = vadd.f32 0.0, %v2856
    %v2858 = vpop.f32.mrf.mxu0
    %2859 = vmatprep.mubr.bf16.mxu0 0
    %2860 = vmatmul.mubr.bf16.gmra.mxu0 %v2745
    %v2861 = vpop.f32.mrf.mxu0
    %v2862 = vadd.f32 0.0, %v2861
    %v2863 = vpop.f32.mrf.mxu0
    %v2864 = vpop.f32.mrf.mxu0
    %v2865 = vadd.f32 0.0, %v2864
    %v2866 = vpop.f32.mrf.mxu0
    %2867 = vdwg.mxu0
    %v2869 = vsel %vm1157, %v2699, 0
    %v2872 = vsel %vm1157, %v2700, 0
    %v2875 = vsel %vm1157, %v2701, 0
    %v2878 = vsel %vm1157, %v2702, 0
    %v2881 = vsel %vm1157, %v2703, 0
    %v2884 = vsel %vm1157, %v2704, 0
    %v2887 = vsel %vm1157, %v2705, 0
    %v2890 = vsel %vm1157, %v2706, 0
    %v2893 = vsel %vm1157, %v2715, 0
    %v2896 = vsel %vm1157, %v2716, 0
    %v2899 = vsel %vm1157, %v2717, 0
    %v2902 = vsel %vm1157, %v2718, 0
    %v2905 = vsel %vm1157, %v2719, 0
    %v2908 = vsel %vm1157, %v2720, 0
    %v2911 = vsel %vm1157, %v2721, 0
    %v2914 = vsel %vm1157, %v2722, 0
    %2916 = vmatprep.subr.bf16.mxu0 0
    %2917 = vmatpush1.bf16.xpose.msra.mxu0 %v2914
    %2918 = vmatprep.subr.bf16.mxu0 0
    %2919 = vmatpush1.bf16.xpose.msra.mxu0 %v2911
    %2920 = vmatprep.subr.bf16.mxu0 0
    %2921 = vmatpush1.bf16.xpose.msra.mxu0 %v2908
    %2922 = vmatprep.subr.bf16.mxu0 0
    %2923 = vmatpush1.bf16.xpose.msra.mxu0 %v2905
    %2924 = vmatprep.subr.bf16.mxu0 0
    %2925 = vmatpush1.bf16.xpose.msra.mxu0 %v2902
    %2926 = vmatprep.subr.bf16.mxu0 0
    %2927 = vmatpush1.bf16.xpose.msra.mxu0 %v2899
    %2928 = vmatprep.subr.bf16.mxu0 0
    %2929 = vmatpush1.bf16.xpose.msra.mxu0 %v2896
    %2930 = vmatprep.subr.bf16.mxu0 0
    %2931 = vmatpush1.bf16.xpose.msra.mxu0 %v2893
    %2932 = vmatprep.subr.bf16.mxu0 0
    %2933 = vmatpush2.bf16.xpose.msra.mxu0 0
    %2934 = vmatprep.subr.bf16.mxu0 0
    %2935 = vmatpush2.bf16.xpose.msra.mxu0 0
    %2936 = vmatprep.subr.bf16.mxu0 0
    %2937 = vmatpush2.bf16.xpose.msra.mxu0 0
    %2938 = vmatprep.subr.bf16.mxu0 0
    %2939 = vmatpush2.bf16.xpose.msra.mxu0 0
    %2940 = vmatprep.subr.bf16.mxu0 0
    %2941 = vmatpush2.bf16.xpose.msra.mxu0 0
    %2942 = vmatprep.subr.bf16.mxu0 0
    %2943 = vmatpush2.bf16.xpose.msra.mxu0 0
    %2944 = vmatprep.subr.bf16.mxu0 0
    %2945 = vmatpush2.bf16.xpose.msra.mxu0 0
    %2946 = vmatprep.subr.bf16.mxu0 0
    %2947 = vmatpush2.bf16.xpose.msra.mxu0 0
    %2948 = vmatprep.mubr.bf16.mxu0 0
    %2949 = vmatmul.mubr.bf16.gmra.mxu0 %v2869
    %v2950 = vpop.f32.mrf.mxu0
    %v2951 = vadd.f32 0.0, %v2950
    %v2952 = vpop.f32.mrf.mxu0
    %v2953 = vpop.f32.mrf.mxu0
    %v2954 = vadd.f32 0.0, %v2953
    %v2955 = vpop.f32.mrf.mxu0
    %2956 = vmatprep.mubr.bf16.mxu0 0
    %2957 = vmatmul.mubr.bf16.gmra.mxu0 %v2872
    %v2958 = vpop.f32.mrf.mxu0
    %v2959 = vadd.f32 0.0, %v2958
    %v2960 = vpop.f32.mrf.mxu0
    %v2961 = vpop.f32.mrf.mxu0
    %v2962 = vadd.f32 0.0, %v2961
    %v2963 = vpop.f32.mrf.mxu0
    %2964 = vmatprep.mubr.bf16.mxu0 0
    %2965 = vmatmul.mubr.bf16.gmra.mxu0 %v2875
    %v2966 = vpop.f32.mrf.mxu0
    %v2967 = vadd.f32 0.0, %v2966
    %v2968 = vpop.f32.mrf.mxu0
    %v2969 = vpop.f32.mrf.mxu0
    %v2970 = vadd.f32 0.0, %v2969
    %v2971 = vpop.f32.mrf.mxu0
    %2972 = vmatprep.mubr.bf16.mxu0 0
    %2973 = vmatmul.mubr.bf16.gmra.mxu0 %v2878
    %v2974 = vpop.f32.mrf.mxu0
    %v2975 = vadd.f32 0.0, %v2974
    %v2976 = vpop.f32.mrf.mxu0
    %v2977 = vpop.f32.mrf.mxu0
    %v2978 = vadd.f32 0.0, %v2977
    %v2979 = vpop.f32.mrf.mxu0
    %2980 = vmatprep.mubr.bf16.mxu0 0
    %2981 = vmatmul.mubr.bf16.gmra.mxu0 %v2881
    %v2982 = vpop.f32.mrf.mxu0
    %v2983 = vadd.f32 0.0, %v2982
    %v2984 = vpop.f32.mrf.mxu0
    %v2985 = vpop.f32.mrf.mxu0
    %v2986 = vadd.f32 0.0, %v2985
    %v2987 = vpop.f32.mrf.mxu0
    %2988 = vmatprep.mubr.bf16.mxu0 0
    %2989 = vmatmul.mubr.bf16.gmra.mxu0 %v2884
    %v2990 = vpop.f32.mrf.mxu0
    %v2991 = vadd.f32 0.0, %v2990
    %v2992 = vpop.f32.mrf.mxu0
    %v2993 = vpop.f32.mrf.mxu0
    %v2994 = vadd.f32 0.0, %v2993
    %v2995 = vpop.f32.mrf.mxu0
    %2996 = vmatprep.mubr.bf16.mxu0 0
    %2997 = vmatmul.mubr.bf16.gmra.mxu0 %v2887
    %v2998 = vpop.f32.mrf.mxu0
    %v2999 = vadd.f32 0.0, %v2998
    %v3000 = vpop.f32.mrf.mxu0
    %v3001 = vpop.f32.mrf.mxu0
    %v3002 = vadd.f32 0.0, %v3001
    %v3003 = vpop.f32.mrf.mxu0
    %3004 = vmatprep.mubr.bf16.mxu0 0
    %3005 = vmatmul.mubr.bf16.gmra.mxu0 %v2890
    %v3006 = vpop.f32.mrf.mxu0
    %v3007 = vadd.f32 0.0, %v3006
    %v3008 = vpop.f32.mrf.mxu0
    %v3009 = vpop.f32.mrf.mxu0
    %v3010 = vadd.f32 0.0, %v3009
    %v3011 = vpop.f32.mrf.mxu0
    %3012 = vdwg.mxu0
    %3013 = vmax.xlane.f32.xlu0 %v2806
    %v3014 = vpop.xlane.xlu0 %3013
    %3015 = vmax.xlane.f32.xlu0 %v2809
    %v3016 = vpop.xlane.xlu0 %3015
    %3017 = vmax.xlane.f32.xlu0 %v2814
    %v3018 = vpop.xlane.xlu0 %3017
    %3019 = vmax.xlane.f32.xlu0 %v2817
    %v3020 = vpop.xlane.xlu0 %3019
    %3021 = vmax.xlane.f32.xlu0 %v2822
    %v3022 = vpop.xlane.xlu0 %3021
    %3023 = vmax.xlane.f32.xlu0 %v2825
    %v3024 = vpop.xlane.xlu0 %3023
    %3025 = vmax.xlane.f32.xlu0 %v2830
    %v3026 = vpop.xlane.xlu0 %3025
    %3027 = vmax.xlane.f32.xlu0 %v2833
    %v3028 = vpop.xlane.xlu0 %3027
    %3029 = vmax.xlane.f32.xlu0 %v2838
    %v3030 = vpop.xlane.xlu0 %3029
    %3031 = vmax.xlane.f32.xlu0 %v2841
    %v3032 = vpop.xlane.xlu0 %3031
    %3033 = vmax.xlane.f32.xlu0 %v2846
    %v3034 = vpop.xlane.xlu0 %3033
    %3035 = vmax.xlane.f32.xlu0 %v2849
    %v3036 = vpop.xlane.xlu0 %3035
    %3037 = vmax.xlane.f32.xlu0 %v2854
    %v3038 = vpop.xlane.xlu0 %3037
    %3039 = vmax.xlane.f32.xlu0 %v2857
    %v3040 = vpop.xlane.xlu0 %3039
    %3041 = vmax.xlane.f32.xlu0 %v2862
    %v3042 = vpop.xlane.xlu0 %3041
    %3043 = vmax.xlane.f32.xlu0 %v2865
    %v3044 = vpop.xlane.xlu0 %3043
    %3045 = vmax.xlane.f32.xlu0 %v2951
    %v3046 = vpop.xlane.xlu0 %3045
    %3047 = vmax.xlane.f32.xlu0 %v2954
    %v3048 = vpop.xlane.xlu0 %3047
    %3049 = vmax.xlane.f32.xlu0 %v2959
    %v3050 = vpop.xlane.xlu0 %3049
    %3051 = vmax.xlane.f32.xlu0 %v2962
    %v3052 = vpop.xlane.xlu0 %3051
    %3053 = vmax.xlane.f32.xlu0 %v2967
    %v3054 = vpop.xlane.xlu0 %3053
    %3055 = vmax.xlane.f32.xlu0 %v2970
    %v3056 = vpop.xlane.xlu0 %3055
    %3057 = vmax.xlane.f32.xlu0 %v2975
    %v3058 = vpop.xlane.xlu0 %3057
    %3059 = vmax.xlane.f32.xlu0 %v2978
    %v3060 = vpop.xlane.xlu0 %3059
    %3061 = vmax.xlane.f32.xlu0 %v2983
    %v3062 = vpop.xlane.xlu0 %3061
    %3063 = vmax.xlane.f32.xlu0 %v2986
    %v3064 = vpop.xlane.xlu0 %3063
    %3065 = vmax.xlane.f32.xlu0 %v2991
    %v3066 = vpop.xlane.xlu0 %3065
    %3067 = vmax.xlane.f32.xlu0 %v2994
    %v3068 = vpop.xlane.xlu0 %3067
    %3069 = vmax.xlane.f32.xlu0 %v2999
    %v3070 = vpop.xlane.xlu0 %3069
    %3071 = vmax.xlane.f32.xlu0 %v3002
    %v3072 = vpop.xlane.xlu0 %3071
    %3073 = vmax.xlane.f32.xlu0 %v3007
    %v3074 = vpop.xlane.xlu0 %3073
    %3075 = vmax.xlane.f32.xlu0 %v3010
    %v3076 = vpop.xlane.xlu0 %3075
    %v3077 = vsub.f32 %v2806, %v3014
    %v3078 = vsub.f32 %v2809, %v3016
    %v3079 = vsub.f32 %v2814, %v3018
    %v3080 = vsub.f32 %v2817, %v3020
    %v3081 = vsub.f32 %v2822, %v3022
    %v3082 = vsub.f32 %v2825, %v3024
    %v3083 = vsub.f32 %v2830, %v3026
    %v3084 = vsub.f32 %v2833, %v3028
    %v3085 = vsub.f32 %v2838, %v3030
    %v3086 = vsub.f32 %v2841, %v3032
    %v3087 = vsub.f32 %v2846, %v3034
    %v3088 = vsub.f32 %v2849, %v3036
    %v3089 = vsub.f32 %v2854, %v3038
    %v3090 = vsub.f32 %v2857, %v3040
    %v3091 = vsub.f32 %v2862, %v3042
    %v3092 = vsub.f32 %v2865, %v3044
    %v3093 = vsub.f32 %v2951, %v3046
    %v3094 = vsub.f32 %v2954, %v3048
    %v3095 = vsub.f32 %v2959, %v3050
    %v3096 = vsub.f32 %v2962, %v3052
    %v3097 = vsub.f32 %v2967, %v3054
    %v3098 = vsub.f32 %v2970, %v3056
    %v3099 = vsub.f32 %v2975, %v3058
    %v3100 = vsub.f32 %v2978, %v3060
    %v3101 = vsub.f32 %v2983, %v3062
    %v3102 = vsub.f32 %v2986, %v3064
    %v3103 = vsub.f32 %v2991, %v3066
    %v3104 = vsub.f32 %v2994, %v3068
    %v3105 = vsub.f32 %v2999, %v3070
    %v3106 = vsub.f32 %v3002, %v3072
    %v3107 = vsub.f32 %v3007, %v3074
    %v3108 = vsub.f32 %v3010, %v3076
    %v3109 = vmul.f32 %v3077, 1.442695
    %v3110 = vpow.pop %v3109
    %v3111 = vmul.f32 %v3078, 1.442695
    %v3112 = vpow.pop %v3111
    %v3113 = vmul.f32 %v3079, 1.442695
    %v3114 = vpow.pop %v3113
    %v3115 = vmul.f32 %v3080, 1.442695
    %v3116 = vpow.pop %v3115
    %v3117 = vmul.f32 %v3081, 1.442695
    %v3118 = vpow.pop %v3117
    %v3119 = vmul.f32 %v3082, 1.442695
    %v3120 = vpow.pop %v3119
    %v3121 = vmul.f32 %v3083, 1.442695
    %v3122 = vpow.pop %v3121
    %v3123 = vmul.f32 %v3084, 1.442695
    %v3124 = vpow.pop %v3123
    %v3125 = vmul.f32 %v3085, 1.442695
    %v3126 = vpow.pop %v3125
    %v3127 = vmul.f32 %v3086, 1.442695
    %v3128 = vpow.pop %v3127
    %v3129 = vmul.f32 %v3087, 1.442695
    %v3130 = vpow.pop %v3129
    %v3131 = vmul.f32 %v3088, 1.442695
    %v3132 = vpow.pop %v3131
    %v3133 = vmul.f32 %v3089, 1.442695
    %v3134 = vpow.pop %v3133
    %v3135 = vmul.f32 %v3090, 1.442695
    %v3136 = vpow.pop %v3135
    %v3137 = vmul.f32 %v3091, 1.442695
    %v3138 = vpow.pop %v3137
    %v3139 = vmul.f32 %v3092, 1.442695
    %v3140 = vpow.pop %v3139
    %v3141 = vmul.f32 %v3093, 1.442695
    %v3142 = vpow.pop %v3141
    %v3143 = vmul.f32 %v3094, 1.442695
    %v3144 = vpow.pop %v3143
    %v3145 = vmul.f32 %v3095, 1.442695
    %v3146 = vpow.pop %v3145
    %v3147 = vmul.f32 %v3096, 1.442695
    %v3148 = vpow.pop %v3147
    %v3149 = vmul.f32 %v3097, 1.442695
    %v3150 = vpow.pop %v3149
    %v3151 = vmul.f32 %v3098, 1.442695
    %v3152 = vpow.pop %v3151
    %v3153 = vmul.f32 %v3099, 1.442695
    %v3154 = vpow.pop %v3153
    %v3155 = vmul.f32 %v3100, 1.442695
    %v3156 = vpow.pop %v3155
    %v3157 = vmul.f32 %v3101, 1.442695
    %v3158 = vpow.pop %v3157
    %v3159 = vmul.f32 %v3102, 1.442695
    %v3160 = vpow.pop %v3159
    %v3161 = vmul.f32 %v3103, 1.442695
    %v3162 = vpow.pop %v3161
    %v3163 = vmul.f32 %v3104, 1.442695
    %v3164 = vpow.pop %v3163
    %v3165 = vmul.f32 %v3105, 1.442695
    %v3166 = vpow.pop %v3165
    %v3167 = vmul.f32 %v3106, 1.442695
    %v3168 = vpow.pop %v3167
    %v3169 = vmul.f32 %v3107, 1.442695
    %v3170 = vpow.pop %v3169
    %v3171 = vmul.f32 %v3108, 1.442695
    %v3172 = vpow.pop %v3171
    %3173 = vadd.xlane.f32.xlu0 %v3110
    %v3174 = vpop.xlane.xlu0 %3173
    %3175 = vadd.xlane.f32.xlu0 %v3112
    %v3176 = vpop.xlane.xlu0 %3175
    %3177 = vadd.xlane.f32.xlu0 %v3114
    %v3178 = vpop.xlane.xlu0 %3177
    %3179 = vadd.xlane.f32.xlu0 %v3116
    %v3180 = vpop.xlane.xlu0 %3179
    %3181 = vadd.xlane.f32.xlu0 %v3118
    %v3182 = vpop.xlane.xlu0 %3181
    %3183 = vadd.xlane.f32.xlu0 %v3120
    %v3184 = vpop.xlane.xlu0 %3183
    %3185 = vadd.xlane.f32.xlu0 %v3122
    %v3186 = vpop.xlane.xlu0 %3185
    %3187 = vadd.xlane.f32.xlu0 %v3124
    %v3188 = vpop.xlane.xlu0 %3187
    %3189 = vadd.xlane.f32.xlu0 %v3126
    %v3190 = vpop.xlane.xlu0 %3189
    %3191 = vadd.xlane.f32.xlu0 %v3128
    %v3192 = vpop.xlane.xlu0 %3191
    %3193 = vadd.xlane.f32.xlu0 %v3130
    %v3194 = vpop.xlane.xlu0 %3193
    %3195 = vadd.xlane.f32.xlu0 %v3132
    %v3196 = vpop.xlane.xlu0 %3195
    %3197 = vadd.xlane.f32.xlu0 %v3134
    %v3198 = vpop.xlane.xlu0 %3197
    %3199 = vadd.xlane.f32.xlu0 %v3136
    %v3200 = vpop.xlane.xlu0 %3199
    %3201 = vadd.xlane.f32.xlu0 %v3138
    %v3202 = vpop.xlane.xlu0 %3201
    %3203 = vadd.xlane.f32.xlu0 %v3140
    %v3204 = vpop.xlane.xlu0 %3203
    %3205 = vadd.xlane.f32.xlu0 %v3142
    %v3206 = vpop.xlane.xlu0 %3205
    %3207 = vadd.xlane.f32.xlu0 %v3144
    %v3208 = vpop.xlane.xlu0 %3207
    %3209 = vadd.xlane.f32.xlu0 %v3146
    %v3210 = vpop.xlane.xlu0 %3209
    %3211 = vadd.xlane.f32.xlu0 %v3148
    %v3212 = vpop.xlane.xlu0 %3211
    %3213 = vadd.xlane.f32.xlu0 %v3150
    %v3214 = vpop.xlane.xlu0 %3213
    %3215 = vadd.xlane.f32.xlu0 %v3152
    %v3216 = vpop.xlane.xlu0 %3215
    %3217 = vadd.xlane.f32.xlu0 %v3154
    %v3218 = vpop.xlane.xlu0 %3217
    %3219 = vadd.xlane.f32.xlu0 %v3156
    %v3220 = vpop.xlane.xlu0 %3219
    %3221 = vadd.xlane.f32.xlu0 %v3158
    %v3222 = vpop.xlane.xlu0 %3221
    %3223 = vadd.xlane.f32.xlu0 %v3160
    %v3224 = vpop.xlane.xlu0 %3223
    %3225 = vadd.xlane.f32.xlu0 %v3162
    %v3226 = vpop.xlane.xlu0 %3225
    %3227 = vadd.xlane.f32.xlu0 %v3164
    %v3228 = vpop.xlane.xlu0 %3227
    %3229 = vadd.xlane.f32.xlu0 %v3166
    %v3230 = vpop.xlane.xlu0 %3229
    %3231 = vadd.xlane.f32.xlu0 %v3168
    %v3232 = vpop.xlane.xlu0 %3231
    %3233 = vadd.xlane.f32.xlu0 %v3170
    %v3234 = vpop.xlane.xlu0 %3233
    %3235 = vadd.xlane.f32.xlu0 %v3172
    %v3236 = vpop.xlane.xlu0 %3235
    %v3237 = vrcp.pop %v3174
    %v3238 = vrcp.pop %v3176
    %v3239 = vrcp.pop %v3178
    %v3240 = vrcp.pop %v3180
    %v3241 = vrcp.pop %v3182
    %v3242 = vrcp.pop %v3184
    %v3243 = vrcp.pop %v3186
    %v3244 = vrcp.pop %v3188
    %v3245 = vrcp.pop %v3190
    %v3246 = vrcp.pop %v3192
    %v3247 = vrcp.pop %v3194
    %v3248 = vrcp.pop %v3196
    %v3249 = vrcp.pop %v3198
    %v3250 = vrcp.pop %v3200
    %v3251 = vrcp.pop %v3202
    %v3252 = vrcp.pop %v3204
    %v3253 = vrcp.pop %v3206
    %v3254 = vrcp.pop %v3208
    %v3255 = vrcp.pop %v3210
    %v3256 = vrcp.pop %v3212
    %v3257 = vrcp.pop %v3214
    %v3258 = vrcp.pop %v3216
    %v3259 = vrcp.pop %v3218
    %v3260 = vrcp.pop %v3220
    %v3261 = vrcp.pop %v3222
    %v3262 = vrcp.pop %v3224
    %v3263 = vrcp.pop %v3226
    %v3264 = vrcp.pop %v3228
    %v3265 = vrcp.pop %v3230
    %v3266 = vrcp.pop %v3232
    %v3267 = vrcp.pop %v3234
    %v3268 = vrcp.pop %v3236
    %v3269 = vmul.f32 %v3110, %v3237
    %v3270 = vmul.f32 %v3112, %v3238
    %v3271 = vmul.f32 %v3114, %v3239
    %v3272 = vmul.f32 %v3116, %v3240
    %v3273 = vmul.f32 %v3118, %v3241
    %v3274 = vmul.f32 %v3120, %v3242
    %v3275 = vmul.f32 %v3122, %v3243
    %v3276 = vmul.f32 %v3124, %v3244
    %v3277 = vmul.f32 %v3126, %v3245
    %v3278 = vmul.f32 %v3128, %v3246
    %v3279 = vmul.f32 %v3130, %v3247
    %v3280 = vmul.f32 %v3132, %v3248
    %v3281 = vmul.f32 %v3134, %v3249
    %v3282 = vmul.f32 %v3136, %v3250
    %v3283 = vmul.f32 %v3138, %v3251
    %v3284 = vmul.f32 %v3140, %v3252
    %v3285 = vmul.f32 %v3142, %v3253
    %v3286 = vmul.f32 %v3144, %v3254
    %v3287 = vmul.f32 %v3146, %v3255
    %v3288 = vmul.f32 %v3148, %v3256
    %v3289 = vmul.f32 %v3150, %v3257
    %v3290 = vmul.f32 %v3152, %v3258
    %v3291 = vmul.f32 %v3154, %v3259
    %v3292 = vmul.f32 %v3156, %v3260
    %v3293 = vmul.f32 %v3158, %v3261
    %v3294 = vmul.f32 %v3160, %v3262
    %v3295 = vmul.f32 %v3162, %v3263
    %v3296 = vmul.f32 %v3164, %v3264
    %v3297 = vmul.f32 %v3166, %v3265
    %v3298 = vmul.f32 %v3168, %v3266
    %v3299 = vmul.f32 %v3170, %v3267
    %v3300 = vmul.f32 %v3172, %v3268
    %v3301 = vpack.c.bf16 %v3270, %v3269
    %v3302 = vpack.c.bf16 %v3272, %v3271
    %v3303 = vpack.c.bf16 %v3274, %v3273
    %v3304 = vpack.c.bf16 %v3276, %v3275
    %v3305 = vpack.c.bf16 %v3278, %v3277
    %v3306 = vpack.c.bf16 %v3280, %v3279
    %v3307 = vpack.c.bf16 %v3282, %v3281
    %v3308 = vpack.c.bf16 %v3284, %v3283
    %v3309 = vpack.c.bf16 %v3286, %v3285
    %v3310 = vpack.c.bf16 %v3288, %v3287
    %v3311 = vpack.c.bf16 %v3290, %v3289
    %v3312 = vpack.c.bf16 %v3292, %v3291
    %v3313 = vpack.c.bf16 %v3294, %v3293
    %v3314 = vpack.c.bf16 %v3296, %v3295
    %v3315 = vpack.c.bf16 %v3298, %v3297
    %v3316 = vpack.c.bf16 %v3300, %v3299
    %3325 = vrot.lane.b32.xlu0 %v2707, 64
    %v3326 = vpop.permute.xlu0 %3325
    %3327 = vrot.lane.b32.xlu0 %v2708, 64
    %v3328 = vpop.permute.xlu0 %3327
    %3329 = vrot.lane.b32.xlu0 %v2709, 64
    %v3330 = vpop.permute.xlu0 %3329
    %3331 = vrot.lane.b32.xlu0 %v2710, 64
    %v3332 = vpop.permute.xlu0 %3331
    %3333 = vrot.lane.b32.xlu0 %v2711, 64
    %v3334 = vpop.permute.xlu0 %3333
    %3335 = vrot.lane.b32.xlu0 %v2712, 64
    %v3336 = vpop.permute.xlu0 %3335
    %3337 = vrot.lane.b32.xlu0 %v2713, 64
    %v3338 = vpop.permute.xlu0 %3337
    %3339 = vrot.lane.b32.xlu0 %v2714, 64
    %v3340 = vpop.permute.xlu0 %3339
    %3349 = vmatprep.subr.bf16.mxu0 0
    %3350 = vmatpush1.bf16.msra.mxu0 %v3340
    %3351 = vmatprep.subr.bf16.mxu0 0
    %3352 = vmatpush1.bf16.msra.mxu0 %v3338
    %3353 = vmatprep.subr.bf16.mxu0 0
    %3354 = vmatpush1.bf16.msra.mxu0 %v3336
    %3355 = vmatprep.subr.bf16.mxu0 0
    %3356 = vmatpush1.bf16.msra.mxu0 %v3334
    %3357 = vmatprep.subr.bf16.mxu0 0
    %3358 = vmatpush1.bf16.msra.mxu0 %v3332
    %3359 = vmatprep.subr.bf16.mxu0 0
    %3360 = vmatpush1.bf16.msra.mxu0 %v3330
    %3361 = vmatprep.subr.bf16.mxu0 0
    %3362 = vmatpush1.bf16.msra.mxu0 %v3328
    %3363 = vmatprep.subr.bf16.mxu0 0
    %3364 = vmatpush1.bf16.msra.mxu0 %v3326
    %3365 = vmatprep.subr.bf16.mxu0 0
    %3366 = vmatpush2.bf16.msra.mxu0 0
    %3367 = vmatprep.subr.bf16.mxu0 0
    %3368 = vmatpush2.bf16.msra.mxu0 0
    %3369 = vmatprep.subr.bf16.mxu0 0
    %3370 = vmatpush2.bf16.msra.mxu0 0
    %3371 = vmatprep.subr.bf16.mxu0 0
    %3372 = vmatpush2.bf16.msra.mxu0 0
    %3373 = vmatprep.subr.bf16.mxu0 0
    %3374 = vmatpush2.bf16.msra.mxu0 0
    %3375 = vmatprep.subr.bf16.mxu0 0
    %3376 = vmatpush2.bf16.msra.mxu0 0
    %3377 = vmatprep.subr.bf16.mxu0 0
    %3378 = vmatpush2.bf16.msra.mxu0 0
    %3379 = vmatprep.subr.bf16.mxu0 0
    %3380 = vmatpush2.bf16.msra.mxu0 0
    %3381 = vmatprep.mubr.bf16.mxu0 0
    %3382 = vmatmul.mubr.bf16.gmra.mxu0 %v3301
    %v3383 = vpop.f32.mrf.mxu0
    %v3384 = vadd.f32 0.0, %v3383
    %v3385 = vpop.f32.mrf.mxu0
    %v3386 = vpop.f32.mrf.mxu0
    %v3387 = vadd.f32 0.0, %v3386
    %v3388 = vpop.f32.mrf.mxu0
    %3389 = vmatprep.mubr.bf16.mxu0 0
    %3390 = vmatmul.mubr.bf16.gmra.mxu0 %v3302
    %v3391 = vpop.f32.mrf.mxu0
    %v3392 = vadd.f32 0.0, %v3391
    %v3393 = vpop.f32.mrf.mxu0
    %v3394 = vpop.f32.mrf.mxu0
    %v3395 = vadd.f32 0.0, %v3394
    %v3396 = vpop.f32.mrf.mxu0
    %3397 = vmatprep.mubr.bf16.mxu0 0
    %3398 = vmatmul.mubr.bf16.gmra.mxu0 %v3303
    %v3399 = vpop.f32.mrf.mxu0
    %v3400 = vadd.f32 0.0, %v3399
    %v3401 = vpop.f32.mrf.mxu0
    %v3402 = vpop.f32.mrf.mxu0
    %v3403 = vadd.f32 0.0, %v3402
    %v3404 = vpop.f32.mrf.mxu0
    %3405 = vmatprep.mubr.bf16.mxu0 0
    %3406 = vmatmul.mubr.bf16.gmra.mxu0 %v3304
    %v3407 = vpop.f32.mrf.mxu0
    %v3408 = vadd.f32 0.0, %v3407
    %v3409 = vpop.f32.mrf.mxu0
    %v3410 = vpop.f32.mrf.mxu0
    %v3411 = vadd.f32 0.0, %v3410
    %v3412 = vpop.f32.mrf.mxu0
    %3413 = vmatprep.mubr.bf16.mxu0 0
    %3414 = vmatmul.mubr.bf16.gmra.mxu0 %v3305
    %v3415 = vpop.f32.mrf.mxu0
    %v3416 = vadd.f32 0.0, %v3415
    %v3417 = vpop.f32.mrf.mxu0
    %v3418 = vpop.f32.mrf.mxu0
    %v3419 = vadd.f32 0.0, %v3418
    %v3420 = vpop.f32.mrf.mxu0
    %3421 = vmatprep.mubr.bf16.mxu0 0
    %3422 = vmatmul.mubr.bf16.gmra.mxu0 %v3306
    %v3423 = vpop.f32.mrf.mxu0
    %v3424 = vadd.f32 0.0, %v3423
    %v3425 = vpop.f32.mrf.mxu0
    %v3426 = vpop.f32.mrf.mxu0
    %v3427 = vadd.f32 0.0, %v3426
    %v3428 = vpop.f32.mrf.mxu0
    %3429 = vmatprep.mubr.bf16.mxu0 0
    %3430 = vmatmul.mubr.bf16.gmra.mxu0 %v3307
    %v3431 = vpop.f32.mrf.mxu0
    %v3432 = vadd.f32 0.0, %v3431
    %v3433 = vpop.f32.mrf.mxu0
    %v3434 = vpop.f32.mrf.mxu0
    %v3435 = vadd.f32 0.0, %v3434
    %v3436 = vpop.f32.mrf.mxu0
    %3437 = vmatprep.mubr.bf16.mxu0 0
    %3438 = vmatmul.mubr.bf16.gmra.mxu0 %v3308
    %v3439 = vpop.f32.mrf.mxu0
    %v3440 = vadd.f32 0.0, %v3439
    %v3441 = vpop.f32.mrf.mxu0
    %v3442 = vpop.f32.mrf.mxu0
    %v3443 = vadd.f32 0.0, %v3442
    %v3444 = vpop.f32.mrf.mxu0
    %3445 = vdwg.mxu0
    %3454 = vrot.lane.b32.xlu0 %v2715, 64
    %v3455 = vpop.permute.xlu0 %3454
    %3456 = vrot.lane.b32.xlu0 %v2716, 64
    %v3457 = vpop.permute.xlu0 %3456
    %3458 = vrot.lane.b32.xlu0 %v2717, 64
    %v3459 = vpop.permute.xlu0 %3458
    %3460 = vrot.lane.b32.xlu0 %v2718, 64
    %v3461 = vpop.permute.xlu0 %3460
    %3462 = vrot.lane.b32.xlu0 %v2719, 64
    %v3463 = vpop.permute.xlu0 %3462
    %3464 = vrot.lane.b32.xlu0 %v2720, 64
    %v3465 = vpop.permute.xlu0 %3464
    %3466 = vrot.lane.b32.xlu0 %v2721, 64
    %v3467 = vpop.permute.xlu0 %3466
    %3468 = vrot.lane.b32.xlu0 %v2722, 64
    %v3469 = vpop.permute.xlu0 %3468
    %3478 = vmatprep.subr.bf16.mxu0 0
    %3479 = vmatpush1.bf16.msra.mxu0 %v3469
    %3480 = vmatprep.subr.bf16.mxu0 0
    %3481 = vmatpush1.bf16.msra.mxu0 %v3467
    %3482 = vmatprep.subr.bf16.mxu0 0
    %3483 = vmatpush1.bf16.msra.mxu0 %v3465
    %3484 = vmatprep.subr.bf16.mxu0 0
    %3485 = vmatpush1.bf16.msra.mxu0 %v3463
    %3486 = vmatprep.subr.bf16.mxu0 0
    %3487 = vmatpush1.bf16.msra.mxu0 %v3461
    %3488 = vmatprep.subr.bf16.mxu0 0
    %3489 = vmatpush1.bf16.msra.mxu0 %v3459
    %3490 = vmatprep.subr.bf16.mxu0 0
    %3491 = vmatpush1.bf16.msra.mxu0 %v3457
    %3492 = vmatprep.subr.bf16.mxu0 0
    %3493 = vmatpush1.bf16.msra.mxu0 %v3455
    %3494 = vmatprep.subr.bf16.mxu0 0
    %3495 = vmatpush2.bf16.msra.mxu0 0
    %3496 = vmatprep.subr.bf16.mxu0 0
    %3497 = vmatpush2.bf16.msra.mxu0 0
    %3498 = vmatprep.subr.bf16.mxu0 0
    %3499 = vmatpush2.bf16.msra.mxu0 0
    %3500 = vmatprep.subr.bf16.mxu0 0
    %3501 = vmatpush2.bf16.msra.mxu0 0
    %3502 = vmatprep.subr.bf16.mxu0 0
    %3503 = vmatpush2.bf16.msra.mxu0 0
    %3504 = vmatprep.subr.bf16.mxu0 0
    %3505 = vmatpush2.bf16.msra.mxu0 0
    %3506 = vmatprep.subr.bf16.mxu0 0
    %3507 = vmatpush2.bf16.msra.mxu0 0
    %3508 = vmatprep.subr.bf16.mxu0 0
    %3509 = vmatpush2.bf16.msra.mxu0 0
    %3510 = vmatprep.mubr.bf16.mxu0 0
    %3511 = vmatmul.mubr.bf16.gmra.mxu0 %v3309
    %v3512 = vpop.f32.mrf.mxu0
    %v3513 = vadd.f32 0.0, %v3512
    %v3514 = vpop.f32.mrf.mxu0
    %v3515 = vpop.f32.mrf.mxu0
    %v3516 = vadd.f32 0.0, %v3515
    %v3517 = vpop.f32.mrf.mxu0
    %3518 = vmatprep.mubr.bf16.mxu0 0
    %3519 = vmatmul.mubr.bf16.gmra.mxu0 %v3310
    %v3520 = vpop.f32.mrf.mxu0
    %v3521 = vadd.f32 0.0, %v3520
    %v3522 = vpop.f32.mrf.mxu0
    %v3523 = vpop.f32.mrf.mxu0
    %v3524 = vadd.f32 0.0, %v3523
    %v3525 = vpop.f32.mrf.mxu0
    %3526 = vmatprep.mubr.bf16.mxu0 0
    %3527 = vmatmul.mubr.bf16.gmra.mxu0 %v3311
    %v3528 = vpop.f32.mrf.mxu0
    %v3529 = vadd.f32 0.0, %v3528
    %v3530 = vpop.f32.mrf.mxu0
    %v3531 = vpop.f32.mrf.mxu0
    %v3532 = vadd.f32 0.0, %v3531
    %v3533 = vpop.f32.mrf.mxu0
    %3534 = vmatprep.mubr.bf16.mxu0 0
    %3535 = vmatmul.mubr.bf16.gmra.mxu0 %v3312
    %v3536 = vpop.f32.mrf.mxu0
    %v3537 = vadd.f32 0.0, %v3536
    %v3538 = vpop.f32.mrf.mxu0
    %v3539 = vpop.f32.mrf.mxu0
    %v3540 = vadd.f32 0.0, %v3539
    %v3541 = vpop.f32.mrf.mxu0
    %3542 = vmatprep.mubr.bf16.mxu0 0
    %3543 = vmatmul.mubr.bf16.gmra.mxu0 %v3313
    %v3544 = vpop.f32.mrf.mxu0
    %v3545 = vadd.f32 0.0, %v3544
    %v3546 = vpop.f32.mrf.mxu0
    %v3547 = vpop.f32.mrf.mxu0
    %v3548 = vadd.f32 0.0, %v3547
    %v3549 = vpop.f32.mrf.mxu0
    %3550 = vmatprep.mubr.bf16.mxu0 0
    %3551 = vmatmul.mubr.bf16.gmra.mxu0 %v3314
    %v3552 = vpop.f32.mrf.mxu0
    %v3553 = vadd.f32 0.0, %v3552
    %v3554 = vpop.f32.mrf.mxu0
    %v3555 = vpop.f32.mrf.mxu0
    %v3556 = vadd.f32 0.0, %v3555
    %v3557 = vpop.f32.mrf.mxu0
    %3558 = vmatprep.mubr.bf16.mxu0 0
    %3559 = vmatmul.mubr.bf16.gmra.mxu0 %v3315
    %v3560 = vpop.f32.mrf.mxu0
    %v3561 = vadd.f32 0.0, %v3560
    %v3562 = vpop.f32.mrf.mxu0
    %v3563 = vpop.f32.mrf.mxu0
    %v3564 = vadd.f32 0.0, %v3563
    %v3565 = vpop.f32.mrf.mxu0
    %3566 = vmatprep.mubr.bf16.mxu0 0
    %3567 = vmatmul.mubr.bf16.gmra.mxu0 %v3316
    %v3568 = vpop.f32.mrf.mxu0
    %v3569 = vadd.f32 0.0, %v3568
    %v3570 = vpop.f32.mrf.mxu0
    %v3571 = vpop.f32.mrf.mxu0
    %v3572 = vadd.f32 0.0, %v3571
    %v3573 = vpop.f32.mrf.mxu0
    %3574 = vdwg.mxu0
    %v3575 = vpack.c.bf16 %v3387, %v3384
    %v3576 = vpack.c.bf16 %v3395, %v3392
    %v3577 = vpack.c.bf16 %v3403, %v3400
    %v3578 = vpack.c.bf16 %v3411, %v3408
    %v3579 = vpack.c.bf16 %v3419, %v3416
    %v3580 = vpack.c.bf16 %v3427, %v3424
    %v3581 = vpack.c.bf16 %v3435, %v3432
    %v3582 = vpack.c.bf16 %v3443, %v3440
    %v3583 = vpack.c.bf16 %v3516, %v3513
    %v3584 = vpack.c.bf16 %v3524, %v3521
    %v3585 = vpack.c.bf16 %v3532, %v3529
    %v3586 = vpack.c.bf16 %v3540, %v3537
    %v3587 = vpack.c.bf16 %v3548, %v3545
    %v3588 = vpack.c.bf16 %v3556, %v3553
    %v3589 = vpack.c.bf16 %v3564, %v3561
    %v3590 = vpack.c.bf16 %v3572, %v3569
    %v3591 = vld [vmem:[#allocation7] sm:$0xf]
    %v3592 = vld [vmem:[#allocation7 + $0x4] sm:$0xf]
    %v3593 = vld [vmem:[#allocation7 + $0x8] sm:$0xf]
    %v3594 = vld [vmem:[#allocation7 + $0xc] sm:$0xf]
    %v3595 = vld [vmem:[#allocation7 + $0x10] sm:$0xf]
    %v3596 = vld [vmem:[#allocation7 + $0x14] sm:$0xf]
    %v3597 = vld [vmem:[#allocation7 + $0x18] sm:$0xf]
    %v3598 = vld [vmem:[#allocation7 + $0x1c] sm:$0xf]
    %v3599 = vlaneseq
    %v3600 = vshrl.u32 %v3599, 7
    %v3601 = vsub.s32 0, %v3600
    %v3602 = vrot.slane %v1107, %v3601
    %v3611 = vunpack.c.l.b16 %v3591
    %v3612 = vunpack.c.l.b16 %v3592
    %v3613 = vunpack.c.l.b16 %v3593
    %v3614 = vunpack.c.l.b16 %v3594
    %v3615 = vunpack.c.l.b16 %v3595
    %v3616 = vunpack.c.l.b16 %v3596
    %v3617 = vunpack.c.l.b16 %v3597
    %v3618 = vunpack.c.l.b16 %v3598
    %v3619 = vpack.c.b16 %v3612, %v3611
    %v3620 = vpack.c.b16 %v3614, %v3613
    %v3621 = vpack.c.b16 %v3616, %v3615
    %v3622 = vpack.c.b16 %v3618, %v3617
    %v3628 = vsel %vm1157, %v3575, 0
    %v3631 = vsel %vm1157, %v3576, 0
    %v3634 = vsel %vm1157, %v3577, 0
    %v3637 = vsel %vm1157, %v3578, 0
    %v3640 = vsel %vm1157, %v3579, 0
    %v3643 = vsel %vm1157, %v3580, 0
    %v3646 = vsel %vm1157, %v3581, 0
    %v3649 = vsel %vm1157, %v3582, 0
    %v3652 = vsel %vm1157, %v3583, 0
    %v3655 = vsel %vm1157, %v3584, 0
    %v3658 = vsel %vm1157, %v3585, 0
    %v3661 = vsel %vm1157, %v3586, 0
    %v3664 = vsel %vm1157, %v3587, 0
    %v3667 = vsel %vm1157, %v3588, 0
    %v3670 = vsel %vm1157, %v3589, 0
    %v3673 = vsel %vm1157, %v3590, 0
    %3675 = vmatprep.subr.bf16.mxu0 0
    %3676 = vmatpush1.bf16.msra.mxu0 0
    %3677 = vmatprep.subr.bf16.mxu0 0
    %3678 = vmatpush1.bf16.msra.mxu0 0
    %3679 = vmatprep.subr.bf16.mxu0 0
    %3680 = vmatpush1.bf16.msra.mxu0 0
    %3681 = vmatprep.subr.bf16.mxu0 0
    %3682 = vmatpush1.bf16.msra.mxu0 0
    %3683 = vmatprep.subr.bf16.mxu0 0
    %3684 = vmatpush1.bf16.msra.mxu0 %v3622
    %3685 = vmatprep.subr.bf16.mxu0 0
    %3686 = vmatpush1.bf16.msra.mxu0 %v3621
    %3687 = vmatprep.subr.bf16.mxu0 0
    %3688 = vmatpush1.bf16.msra.mxu0 %v3620
    %3689 = vmatprep.subr.bf16.mxu0 0
    %3690 = vmatpush1.bf16.msra.mxu0 %v3619
    %3691 = vmatprep.subr.bf16.mxu0 0
    %3692 = vmatpush2.bf16.msra.mxu0 0
    %3693 = vmatprep.subr.bf16.mxu0 0
    %3694 = vmatpush2.bf16.msra.mxu0 0
    %3695 = vmatprep.subr.bf16.mxu0 0
    %3696 = vmatpush2.bf16.msra.mxu0 0
    %3697 = vmatprep.subr.bf16.mxu0 0
    %3698 = vmatpush2.bf16.msra.mxu0 0
    %3699 = vmatprep.subr.bf16.mxu0 0
    %3700 = vmatpush2.bf16.msra.mxu0 0
    %3701 = vmatprep.subr.bf16.mxu0 0
    %3702 = vmatpush2.bf16.msra.mxu0 0
    %3703 = vmatprep.subr.bf16.mxu0 0
    %3704 = vmatpush2.bf16.msra.mxu0 0
    %3705 = vmatprep.subr.bf16.mxu0 0
    %3706 = vmatpush2.bf16.msra.mxu0 0
    %3707 = vmatprep.mubr.bf16.mxu0 0
    %3708 = vmatmul.mubr.bf16.gmra.mxu0 %v3628
    %v3709 = vpop.f32.mrf.mxu0
    %v3710 = vadd.f32 %v3602, %v3709
    %v3711 = vpop.f32.mrf.mxu0
    %v3712 = vpop.f32.mrf.mxu0
    %v3713 = vadd.f32 %v3602, %v3712
    %v3714 = vpop.f32.mrf.mxu0
    %3715 = vmatprep.mubr.bf16.mxu0 0
    %3716 = vmatmul.mubr.bf16.gmra.mxu0 %v3631
    %v3717 = vpop.f32.mrf.mxu0
    %v3718 = vadd.f32 %v3602, %v3717
    %v3719 = vpop.f32.mrf.mxu0
    %v3720 = vpop.f32.mrf.mxu0
    %v3721 = vadd.f32 %v3602, %v3720
    %v3722 = vpop.f32.mrf.mxu0
    %3723 = vmatprep.mubr.bf16.mxu0 0
    %3724 = vmatmul.mubr.bf16.gmra.mxu0 %v3634
    %v3725 = vpop.f32.mrf.mxu0
    %v3726 = vadd.f32 %v3602, %v3725
    %v3727 = vpop.f32.mrf.mxu0
    %v3728 = vpop.f32.mrf.mxu0
    %v3729 = vadd.f32 %v3602, %v3728
    %v3730 = vpop.f32.mrf.mxu0
    %3731 = vmatprep.mubr.bf16.mxu0 0
    %3732 = vmatmul.mubr.bf16.gmra.mxu0 %v3637
    %v3733 = vpop.f32.mrf.mxu0
    %v3734 = vadd.f32 %v3602, %v3733
    %v3735 = vpop.f32.mrf.mxu0
    %v3736 = vpop.f32.mrf.mxu0
    %v3737 = vadd.f32 %v3602, %v3736
    %v3738 = vpop.f32.mrf.mxu0
    %3739 = vmatprep.mubr.bf16.mxu0 0
    %3740 = vmatmul.mubr.bf16.gmra.mxu0 %v3640
    %v3741 = vpop.f32.mrf.mxu0
    %v3742 = vadd.f32 %v3602, %v3741
    %v3743 = vpop.f32.mrf.mxu0
    %v3744 = vpop.f32.mrf.mxu0
    %v3745 = vadd.f32 %v3602, %v3744
    %v3746 = vpop.f32.mrf.mxu0
    %3747 = vmatprep.mubr.bf16.mxu0 0
    %3748 = vmatmul.mubr.bf16.gmra.mxu0 %v3643
    %v3749 = vpop.f32.mrf.mxu0
    %v3750 = vadd.f32 %v3602, %v3749
    %v3751 = vpop.f32.mrf.mxu0
    %v3752 = vpop.f32.mrf.mxu0
    %v3753 = vadd.f32 %v3602, %v3752
    %v3754 = vpop.f32.mrf.mxu0
    %3755 = vmatprep.mubr.bf16.mxu0 0
    %3756 = vmatmul.mubr.bf16.gmra.mxu0 %v3646
    %v3757 = vpop.f32.mrf.mxu0
    %v3758 = vadd.f32 %v3602, %v3757
    %v3759 = vpop.f32.mrf.mxu0
    %v3760 = vpop.f32.mrf.mxu0
    %v3761 = vadd.f32 %v3602, %v3760
    %v3762 = vpop.f32.mrf.mxu0
    %3763 = vmatprep.mubr.bf16.mxu0 0
    %3764 = vmatmul.mubr.bf16.gmra.mxu0 %v3649
    %v3765 = vpop.f32.mrf.mxu0
    %v3766 = vadd.f32 %v3602, %v3765
    %v3767 = vpop.f32.mrf.mxu0
    %v3768 = vpop.f32.mrf.mxu0
    %v3769 = vadd.f32 %v3602, %v3768
    %v3770 = vpop.f32.mrf.mxu0
    %3771 = vmatprep.mubr.bf16.mxu0 0
    %3772 = vmatmul.mubr.bf16.gmra.mxu0 %v3652
    %v3773 = vpop.f32.mrf.mxu0
    %v3774 = vadd.f32 %v3602, %v3773
    %v3775 = vpop.f32.mrf.mxu0
    %v3776 = vpop.f32.mrf.mxu0
    %v3777 = vadd.f32 %v3602, %v3776
    %v3778 = vpop.f32.mrf.mxu0
    %3779 = vmatprep.mubr.bf16.mxu0 0
    %3780 = vmatmul.mubr.bf16.gmra.mxu0 %v3655
    %v3781 = vpop.f32.mrf.mxu0
    %v3782 = vadd.f32 %v3602, %v3781
    %v3783 = vpop.f32.mrf.mxu0
    %v3784 = vpop.f32.mrf.mxu0
    %v3785 = vadd.f32 %v3602, %v3784
    %v3786 = vpop.f32.mrf.mxu0
    %3787 = vmatprep.mubr.bf16.mxu0 0
    %3788 = vmatmul.mubr.bf16.gmra.mxu0 %v3658
    %v3789 = vpop.f32.mrf.mxu0
    %v3790 = vadd.f32 %v3602, %v3789
    %v3791 = vpop.f32.mrf.mxu0
    %v3792 = vpop.f32.mrf.mxu0
    %v3793 = vadd.f32 %v3602, %v3792
    %v3794 = vpop.f32.mrf.mxu0
    %3795 = vmatprep.mubr.bf16.mxu0 0
    %3796 = vmatmul.mubr.bf16.gmra.mxu0 %v3661
    %v3797 = vpop.f32.mrf.mxu0
    %v3798 = vadd.f32 %v3602, %v3797
    %v3799 = vpop.f32.mrf.mxu0
    %v3800 = vpop.f32.mrf.mxu0
    %v3801 = vadd.f32 %v3602, %v3800
    %v3802 = vpop.f32.mrf.mxu0
    %3803 = vmatprep.mubr.bf16.mxu0 0
    %3804 = vmatmul.mubr.bf16.gmra.mxu0 %v3664
    %v3805 = vpop.f32.mrf.mxu0
    %v3806 = vadd.f32 %v3602, %v3805
    %v3807 = vpop.f32.mrf.mxu0
    %v3808 = vpop.f32.mrf.mxu0
    %v3809 = vadd.f32 %v3602, %v3808
    %v3810 = vpop.f32.mrf.mxu0
    %3811 = vmatprep.mubr.bf16.mxu0 0
    %3812 = vmatmul.mubr.bf16.gmra.mxu0 %v3667
    %v3813 = vpop.f32.mrf.mxu0
    %v3814 = vadd.f32 %v3602, %v3813
    %v3815 = vpop.f32.mrf.mxu0
    %v3816 = vpop.f32.mrf.mxu0
    %v3817 = vadd.f32 %v3602, %v3816
    %v3818 = vpop.f32.mrf.mxu0
    %3819 = vmatprep.mubr.bf16.mxu0 0
    %3820 = vmatmul.mubr.bf16.gmra.mxu0 %v3670
    %v3821 = vpop.f32.mrf.mxu0
    %v3822 = vadd.f32 %v3602, %v3821
    %v3823 = vpop.f32.mrf.mxu0
    %v3824 = vpop.f32.mrf.mxu0
    %v3825 = vadd.f32 %v3602, %v3824
    %v3826 = vpop.f32.mrf.mxu0
    %3827 = vmatprep.mubr.bf16.mxu0 0
    %3828 = vmatmul.mubr.bf16.gmra.mxu0 %v3673
    %v3829 = vpop.f32.mrf.mxu0
    %v3830 = vadd.f32 %v3602, %v3829
    %v3831 = vpop.f32.mrf.mxu0
    %v3832 = vpop.f32.mrf.mxu0
    %v3833 = vadd.f32 %v3602, %v3832
    %v3834 = vpop.f32.mrf.mxu0
    %3835 = vdwg.mxu0
    %v3836 = vadd.f32 %v3710, %v1403
    %v3837 = vadd.f32 %v3713, %v1404
    %v3838 = vadd.f32 %v3718, %v1405
    %v3839 = vadd.f32 %v3721, %v1406
    %v3840 = vadd.f32 %v3726, %v1407
    %v3841 = vadd.f32 %v3729, %v1408
    %v3842 = vadd.f32 %v3734, %v1409
    %v3843 = vadd.f32 %v3737, %v1410
    %v3844 = vadd.f32 %v3742, %v1411
    %v3845 = vadd.f32 %v3745, %v1412
    %v3846 = vadd.f32 %v3750, %v1413
    %v3847 = vadd.f32 %v3753, %v1414
    %v3848 = vadd.f32 %v3758, %v1415
    %v3849 = vadd.f32 %v3761, %v1416
    %v3850 = vadd.f32 %v3766, %v1417
    %v3851 = vadd.f32 %v3769, %v1418
    %v3852 = vadd.f32 %v3774, %v1419
    %v3853 = vadd.f32 %v3777, %v1420
    %v3854 = vadd.f32 %v3782, %v1421
    %v3855 = vadd.f32 %v3785, %v1422
    %v3856 = vadd.f32 %v3790, %v1423
    %v3857 = vadd.f32 %v3793, %v1424
    %v3858 = vadd.f32 %v3798, %v1425
    %v3859 = vadd.f32 %v3801, %v1426
    %v3860 = vadd.f32 %v3806, %v1427
    %v3861 = vadd.f32 %v3809, %v1428
    %v3862 = vadd.f32 %v3814, %v1429
    %v3863 = vadd.f32 %v3817, %v1430
    %v3864 = vadd.f32 %v3822, %v1431
    %v3865 = vadd.f32 %v3825, %v1432
    %v3866 = vadd.f32 %v3830, %v1433
    %v3867 = vadd.f32 %v3833, %v1434
    %v3868 = vsub.f32 0.0, %v3836
    %v3869 = vsub.f32 0.0, %v3837
    %v3870 = vsub.f32 0.0, %v3838
    %v3871 = vsub.f32 0.0, %v3839
    %v3872 = vsub.f32 0.0, %v3840
    %v3873 = vsub.f32 0.0, %v3841
    %v3874 = vsub.f32 0.0, %v3842
    %v3875 = vsub.f32 0.0, %v3843
    %v3876 = vsub.f32 0.0, %v3844
    %v3877 = vsub.f32 0.0, %v3845
    %v3878 = vsub.f32 0.0, %v3846
    %v3879 = vsub.f32 0.0, %v3847
    %v3880 = vsub.f32 0.0, %v3848
    %v3881 = vsub.f32 0.0, %v3849
    %v3882 = vsub.f32 0.0, %v3850
    %v3883 = vsub.f32 0.0, %v3851
    %v3884 = vsub.f32 0.0, %v3852
    %v3885 = vsub.f32 0.0, %v3853
    %v3886 = vsub.f32 0.0, %v3854
    %v3887 = vsub.f32 0.0, %v3855
    %v3888 = vsub.f32 0.0, %v3856
    %v3889 = vsub.f32 0.0, %v3857
    %v3890 = vsub.f32 0.0, %v3858
    %v3891 = vsub.f32 0.0, %v3859
    %v3892 = vsub.f32 0.0, %v3860
    %v3893 = vsub.f32 0.0, %v3861
    %v3894 = vsub.f32 0.0, %v3862
    %v3895 = vsub.f32 0.0, %v3863
    %v3896 = vsub.f32 0.0, %v3864
    %v3897 = vsub.f32 0.0, %v3865
    %v3898 = vsub.f32 0.0, %v3866
    %v3899 = vsub.f32 0.0, %v3867
    %v3900 = vmul.f32 %v3868, 1.442695
    %v3901 = vpow.pop %v3900
    %v3902 = vmul.f32 %v3869, 1.442695
    %v3903 = vpow.pop %v3902
    %v3904 = vmul.f32 %v3870, 1.442695
    %v3905 = vpow.pop %v3904
    %v3906 = vmul.f32 %v3871, 1.442695
    %v3907 = vpow.pop %v3906
    %v3908 = vmul.f32 %v3872, 1.442695
    %v3909 = vpow.pop %v3908
    %v3910 = vmul.f32 %v3873, 1.442695
    %v3911 = vpow.pop %v3910
    %v3912 = vmul.f32 %v3874, 1.442695
    %v3913 = vpow.pop %v3912
    %v3914 = vmul.f32 %v3875, 1.442695
    %v3915 = vpow.pop %v3914
    %v3916 = vmul.f32 %v3876, 1.442695
    %v3917 = vpow.pop %v3916
    %v3918 = vmul.f32 %v3877, 1.442695
    %v3919 = vpow.pop %v3918
    %v3920 = vmul.f32 %v3878, 1.442695
    %v3921 = vpow.pop %v3920
    %v3922 = vmul.f32 %v3879, 1.442695
    %v3923 = vpow.pop %v3922
    %v3924 = vmul.f32 %v3880, 1.442695
    %v3925 = vpow.pop %v3924
    %v3926 = vmul.f32 %v3881, 1.442695
    %v3927 = vpow.pop %v3926
    %v3928 = vmul.f32 %v3882, 1.442695
    %v3929 = vpow.pop %v3928
    %v3930 = vmul.f32 %v3883, 1.442695
    %v3931 = vpow.pop %v3930
    %v3932 = vmul.f32 %v3884, 1.442695
    %v3933 = vpow.pop %v3932
    %v3934 = vmul.f32 %v3885, 1.442695
    %v3935 = vpow.pop %v3934
    %v3936 = vmul.f32 %v3886, 1.442695
    %v3937 = vpow.pop %v3936
    %v3938 = vmul.f32 %v3887, 1.442695
    %v3939 = vpow.pop %v3938
    %v3940 = vmul.f32 %v3888, 1.442695
    %v3941 = vpow.pop %v3940
    %v3942 = vmul.f32 %v3889, 1.442695
    %v3943 = vpow.pop %v3942
    %v3944 = vmul.f32 %v3890, 1.442695
    %v3945 = vpow.pop %v3944
    %v3946 = vmul.f32 %v3891, 1.442695
    %v3947 = vpow.pop %v3946
    %v3948 = vmul.f32 %v3892, 1.442695
    %v3949 = vpow.pop %v3948
    %v3950 = vmul.f32 %v3893, 1.442695
    %v3951 = vpow.pop %v3950
    %v3952 = vmul.f32 %v3894, 1.442695
    %v3953 = vpow.pop %v3952
    %v3954 = vmul.f32 %v3895, 1.442695
    %v3955 = vpow.pop %v3954
    %v3956 = vmul.f32 %v3896, 1.442695
    %v3957 = vpow.pop %v3956
    %v3958 = vmul.f32 %v3897, 1.442695
    %v3959 = vpow.pop %v3958
    %v3960 = vmul.f32 %v3898, 1.442695
    %v3961 = vpow.pop %v3960
    %v3962 = vmul.f32 %v3899, 1.442695
    %v3963 = vpow.pop %v3962
    %v3964 = vadd.f32 %v3901, 1.0
    %v3965 = vadd.f32 %v3903, 1.0
    %v3966 = vadd.f32 %v3905, 1.0
    %v3967 = vadd.f32 %v3907, 1.0
    %v3968 = vadd.f32 %v3909, 1.0
    %v3969 = vadd.f32 %v3911, 1.0
    %v3970 = vadd.f32 %v3913, 1.0
    %v3971 = vadd.f32 %v3915, 1.0
    %v3972 = vadd.f32 %v3917, 1.0
    %v3973 = vadd.f32 %v3919, 1.0
    %v3974 = vadd.f32 %v3921, 1.0
    %v3975 = vadd.f32 %v3923, 1.0
    %v3976 = vadd.f32 %v3925, 1.0
    %v3977 = vadd.f32 %v3927, 1.0
    %v3978 = vadd.f32 %v3929, 1.0
    %v3979 = vadd.f32 %v3931, 1.0
    %v3980 = vadd.f32 %v3933, 1.0
    %v3981 = vadd.f32 %v3935, 1.0
    %v3982 = vadd.f32 %v3937, 1.0
    %v3983 = vadd.f32 %v3939, 1.0
    %v3984 = vadd.f32 %v3941, 1.0
    %v3985 = vadd.f32 %v3943, 1.0
    %v3986 = vadd.f32 %v3945, 1.0
    %v3987 = vadd.f32 %v3947, 1.0
    %v3988 = vadd.f32 %v3949, 1.0
    %v3989 = vadd.f32 %v3951, 1.0
    %v3990 = vadd.f32 %v3953, 1.0
    %v3991 = vadd.f32 %v3955, 1.0
    %v3992 = vadd.f32 %v3957, 1.0
    %v3993 = vadd.f32 %v3959, 1.0
    %v3994 = vadd.f32 %v3961, 1.0
    %v3995 = vadd.f32 %v3963, 1.0
    %v3996 = vrcp.pop %v3964
    %v3997 = vrcp.pop %v3965
    %v3998 = vrcp.pop %v3966
    %v3999 = vrcp.pop %v3967
    %v4000 = vrcp.pop %v3968
    %v4001 = vrcp.pop %v3969
    %v4002 = vrcp.pop %v3970
    %v4003 = vrcp.pop %v3971
    %v4004 = vrcp.pop %v3972
    %v4005 = vrcp.pop %v3973
    %v4006 = vrcp.pop %v3974
    %v4007 = vrcp.pop %v3975
    %v4008 = vrcp.pop %v3976
    %v4009 = vrcp.pop %v3977
    %v4010 = vrcp.pop %v3978
    %v4011 = vrcp.pop %v3979
    %v4012 = vrcp.pop %v3980
    %v4013 = vrcp.pop %v3981
    %v4014 = vrcp.pop %v3982
    %v4015 = vrcp.pop %v3983
    %v4016 = vrcp.pop %v3984
    %v4017 = vrcp.pop %v3985
    %v4018 = vrcp.pop %v3986
    %v4019 = vrcp.pop %v3987
    %v4020 = vrcp.pop %v3988
    %v4021 = vrcp.pop %v3989
    %v4022 = vrcp.pop %v3990
    %v4023 = vrcp.pop %v3991
    %v4024 = vrcp.pop %v3992
    %v4025 = vrcp.pop %v3993
    %v4026 = vrcp.pop %v3994
    %v4027 = vrcp.pop %v3995
    %4060 = vrot.lane.b32.xlu0 %v3710, 64
    %v4061 = vpop.permute.xlu0 %4060
    %4062 = vrot.lane.b32.xlu0 %v3713, 64
    %v4063 = vpop.permute.xlu0 %4062
    %4064 = vrot.lane.b32.xlu0 %v3718, 64
    %v4065 = vpop.permute.xlu0 %4064
    %4066 = vrot.lane.b32.xlu0 %v3721, 64
    %v4067 = vpop.permute.xlu0 %4066
    %4068 = vrot.lane.b32.xlu0 %v3726, 64
    %v4069 = vpop.permute.xlu0 %4068
    %4070 = vrot.lane.b32.xlu0 %v3729, 64
    %v4071 = vpop.permute.xlu0 %4070
    %4072 = vrot.lane.b32.xlu0 %v3734, 64
    %v4073 = vpop.permute.xlu0 %4072
    %4074 = vrot.lane.b32.xlu0 %v3737, 64
    %v4075 = vpop.permute.xlu0 %4074
    %4076 = vrot.lane.b32.xlu0 %v3742, 64
    %v4077 = vpop.permute.xlu0 %4076
    %4078 = vrot.lane.b32.xlu0 %v3745, 64
    %v4079 = vpop.permute.xlu0 %4078
    %4080 = vrot.lane.b32.xlu0 %v3750, 64
    %v4081 = vpop.permute.xlu0 %4080
    %4082 = vrot.lane.b32.xlu0 %v3753, 64
    %v4083 = vpop.permute.xlu0 %4082
    %4084 = vrot.lane.b32.xlu0 %v3758, 64
    %v4085 = vpop.permute.xlu0 %4084
    %4086 = vrot.lane.b32.xlu0 %v3761, 64
    %v4087 = vpop.permute.xlu0 %4086
    %4088 = vrot.lane.b32.xlu0 %v3766, 64
    %v4089 = vpop.permute.xlu0 %4088
    %4090 = vrot.lane.b32.xlu0 %v3769, 64
    %v4091 = vpop.permute.xlu0 %4090
    %4092 = vrot.lane.b32.xlu0 %v3774, 64
    %v4093 = vpop.permute.xlu0 %4092
    %4094 = vrot.lane.b32.xlu0 %v3777, 64
    %v4095 = vpop.permute.xlu0 %4094
    %4096 = vrot.lane.b32.xlu0 %v3782, 64
    %v4097 = vpop.permute.xlu0 %4096
    %4098 = vrot.lane.b32.xlu0 %v3785, 64
    %v4099 = vpop.permute.xlu0 %4098
    %4100 = vrot.lane.b32.xlu0 %v3790, 64
    %v4101 = vpop.permute.xlu0 %4100
    %4102 = vrot.lane.b32.xlu0 %v3793, 64
    %v4103 = vpop.permute.xlu0 %4102
    %4104 = vrot.lane.b32.xlu0 %v3798, 64
    %v4105 = vpop.permute.xlu0 %4104
    %4106 = vrot.lane.b32.xlu0 %v3801, 64
    %v4107 = vpop.permute.xlu0 %4106
    %4108 = vrot.lane.b32.xlu0 %v3806, 64
    %v4109 = vpop.permute.xlu0 %4108
    %4110 = vrot.lane.b32.xlu0 %v3809, 64
    %v4111 = vpop.permute.xlu0 %4110
    %4112 = vrot.lane.b32.xlu0 %v3814, 64
    %v4113 = vpop.permute.xlu0 %4112
    %4114 = vrot.lane.b32.xlu0 %v3817, 64
    %v4115 = vpop.permute.xlu0 %4114
    %4116 = vrot.lane.b32.xlu0 %v3822, 64
    %v4117 = vpop.permute.xlu0 %4116
    %4118 = vrot.lane.b32.xlu0 %v3825, 64
    %v4119 = vpop.permute.xlu0 %4118
    %4120 = vrot.lane.b32.xlu0 %v3830, 64
    %v4121 = vpop.permute.xlu0 %4120
    %4122 = vrot.lane.b32.xlu0 %v3833, 64
    %v4123 = vpop.permute.xlu0 %4122
    %v4156 = vmul.f32 %v3996, %v4061
    %v4157 = vmul.f32 %v3997, %v4063
    %v4158 = vmul.f32 %v3998, %v4065
    %v4159 = vmul.f32 %v3999, %v4067
    %v4160 = vmul.f32 %v4000, %v4069
    %v4161 = vmul.f32 %v4001, %v4071
    %v4162 = vmul.f32 %v4002, %v4073
    %v4163 = vmul.f32 %v4003, %v4075
    %v4164 = vmul.f32 %v4004, %v4077
    %v4165 = vmul.f32 %v4005, %v4079
    %v4166 = vmul.f32 %v4006, %v4081
    %v4167 = vmul.f32 %v4007, %v4083
    %v4168 = vmul.f32 %v4008, %v4085
    %v4169 = vmul.f32 %v4009, %v4087
    %v4170 = vmul.f32 %v4010, %v4089
    %v4171 = vmul.f32 %v4011, %v4091
    %v4172 = vmul.f32 %v4012, %v4093
    %v4173 = vmul.f32 %v4013, %v4095
    %v4174 = vmul.f32 %v4014, %v4097
    %v4175 = vmul.f32 %v4015, %v4099
    %v4176 = vmul.f32 %v4016, %v4101
    %v4177 = vmul.f32 %v4017, %v4103
    %v4178 = vmul.f32 %v4018, %v4105
    %v4179 = vmul.f32 %v4019, %v4107
    %v4180 = vmul.f32 %v4020, %v4109
    %v4181 = vmul.f32 %v4021, %v4111
    %v4182 = vmul.f32 %v4022, %v4113
    %v4183 = vmul.f32 %v4023, %v4115
    %v4184 = vmul.f32 %v4024, %v4117
    %v4185 = vmul.f32 %v4025, %v4119
    %v4186 = vmul.f32 %v4026, %v4121
    %v4187 = vmul.f32 %v4027, %v4123
    %4220 = vrot.lane.b32.xlu0 %v4156, 64
    %v4221 = vpop.permute.xlu0 %4220
    %4222 = vrot.lane.b32.xlu0 %v4157, 64
    %v4223 = vpop.permute.xlu0 %4222
    %4224 = vrot.lane.b32.xlu0 %v4158, 64
    %v4225 = vpop.permute.xlu0 %4224
    %4226 = vrot.lane.b32.xlu0 %v4159, 64
    %v4227 = vpop.permute.xlu0 %4226
    %4228 = vrot.lane.b32.xlu0 %v4160, 64
    %v4229 = vpop.permute.xlu0 %4228
    %4230 = vrot.lane.b32.xlu0 %v4161, 64
    %v4231 = vpop.permute.xlu0 %4230
    %4232 = vrot.lane.b32.xlu0 %v4162, 64
    %v4233 = vpop.permute.xlu0 %4232
    %4234 = vrot.lane.b32.xlu0 %v4163, 64
    %v4235 = vpop.permute.xlu0 %4234
    %4236 = vrot.lane.b32.xlu0 %v4164, 64
    %v4237 = vpop.permute.xlu0 %4236
    %4238 = vrot.lane.b32.xlu0 %v4165, 64
    %v4239 = vpop.permute.xlu0 %4238
    %4240 = vrot.lane.b32.xlu0 %v4166, 64
    %v4241 = vpop.permute.xlu0 %4240
    %4242 = vrot.lane.b32.xlu0 %v4167, 64
    %v4243 = vpop.permute.xlu0 %4242
    %4244 = vrot.lane.b32.xlu0 %v4168, 64
    %v4245 = vpop.permute.xlu0 %4244
    %4246 = vrot.lane.b32.xlu0 %v4169, 64
    %v4247 = vpop.permute.xlu0 %4246
    %4248 = vrot.lane.b32.xlu0 %v4170, 64
    %v4249 = vpop.permute.xlu0 %4248
    %4250 = vrot.lane.b32.xlu0 %v4171, 64
    %v4251 = vpop.permute.xlu0 %4250
    %4252 = vrot.lane.b32.xlu0 %v4172, 64
    %v4253 = vpop.permute.xlu0 %4252
    %4254 = vrot.lane.b32.xlu0 %v4173, 64
    %v4255 = vpop.permute.xlu0 %4254
    %4256 = vrot.lane.b32.xlu0 %v4174, 64
    %v4257 = vpop.permute.xlu0 %4256
    %4258 = vrot.lane.b32.xlu0 %v4175, 64
    %v4259 = vpop.permute.xlu0 %4258
    %4260 = vrot.lane.b32.xlu0 %v4176, 64
    %v4261 = vpop.permute.xlu0 %4260
    %4262 = vrot.lane.b32.xlu0 %v4177, 64
    %v4263 = vpop.permute.xlu0 %4262
    %4264 = vrot.lane.b32.xlu0 %v4178, 64
    %v4265 = vpop.permute.xlu0 %4264
    %4266 = vrot.lane.b32.xlu0 %v4179, 64
    %v4267 = vpop.permute.xlu0 %4266
    %4268 = vrot.lane.b32.xlu0 %v4180, 64
    %v4269 = vpop.permute.xlu0 %4268
    %4270 = vrot.lane.b32.xlu0 %v4181, 64
    %v4271 = vpop.permute.xlu0 %4270
    %4272 = vrot.lane.b32.xlu0 %v4182, 64
    %v4273 = vpop.permute.xlu0 %4272
    %4274 = vrot.lane.b32.xlu0 %v4183, 64
    %v4275 = vpop.permute.xlu0 %4274
    %4276 = vrot.lane.b32.xlu0 %v4184, 64
    %v4277 = vpop.permute.xlu0 %4276
    %4278 = vrot.lane.b32.xlu0 %v4185, 64
    %v4279 = vpop.permute.xlu0 %4278
    %4280 = vrot.lane.b32.xlu0 %v4186, 64
    %v4281 = vpop.permute.xlu0 %4280
    %4282 = vrot.lane.b32.xlu0 %v4187, 64
    %v4283 = vpop.permute.xlu0 %4282
    %v4316 = vadd.f32 %v83, %v4221
    %v4317 = vadd.f32 %v84, %v4223
    %v4318 = vadd.f32 %v85, %v4225
    %v4319 = vadd.f32 %v86, %v4227
    %v4320 = vadd.f32 %v87, %v4229
    %v4321 = vadd.f32 %v88, %v4231
    %v4322 = vadd.f32 %v89, %v4233
    %v4323 = vadd.f32 %v90, %v4235
    %v4324 = vadd.f32 %v91, %v4237
    %v4325 = vadd.f32 %v92, %v4239
    %v4326 = vadd.f32 %v93, %v4241
    %v4327 = vadd.f32 %v94, %v4243
    %v4328 = vadd.f32 %v95, %v4245
    %v4329 = vadd.f32 %v96, %v4247
    %v4330 = vadd.f32 %v97, %v4249
    %v4331 = vadd.f32 %v98, %v4251
    %v4332 = vadd.f32 %v99, %v4253
    %v4333 = vadd.f32 %v100, %v4255
    %v4334 = vadd.f32 %v101, %v4257
    %v4335 = vadd.f32 %v102, %v4259
    %v4336 = vadd.f32 %v103, %v4261
    %v4337 = vadd.f32 %v104, %v4263
    %v4338 = vadd.f32 %v105, %v4265
    %v4339 = vadd.f32 %v106, %v4267
    %v4340 = vadd.f32 %v107, %v4269
    %v4341 = vadd.f32 %v108, %v4271
    %v4342 = vadd.f32 %v109, %v4273
    %v4343 = vadd.f32 %v110, %v4275
    %v4344 = vadd.f32 %v111, %v4277
    %v4345 = vadd.f32 %v112, %v4279
    %v4346 = vadd.f32 %v113, %v4281
    %v4347 = vadd.f32 %v114, %v4283
    %v4348 = vsel %vm1157, %v4316, 0.0
    %4349 = vadd.xlane.f32.xlu0 %v4348
    %v4350 = vpop.xlane.xlu0 %4349
    %v4351 = vsel %vm1157, %v4317, 0.0
    %4352 = vadd.xlane.f32.xlu0 %v4351
    %v4353 = vpop.xlane.xlu0 %4352
    %v4354 = vsel %vm1157, %v4318, 0.0
    %4355 = vadd.xlane.f32.xlu0 %v4354
    %v4356 = vpop.xlane.xlu0 %4355
    %v4357 = vsel %vm1157, %v4319, 0.0
    %4358 = vadd.xlane.f32.xlu0 %v4357
    %v4359 = vpop.xlane.xlu0 %4358
    %v4360 = vsel %vm1157, %v4320, 0.0
    %4361 = vadd.xlane.f32.xlu0 %v4360
    %v4362 = vpop.xlane.xlu0 %4361
    %v4363 = vsel %vm1157, %v4321, 0.0
    %4364 = vadd.xlane.f32.xlu0 %v4363
    %v4365 = vpop.xlane.xlu0 %4364
    %v4366 = vsel %vm1157, %v4322, 0.0
    %4367 = vadd.xlane.f32.xlu0 %v4366
    %v4368 = vpop.xlane.xlu0 %4367
    %v4369 = vsel %vm1157, %v4323, 0.0
    %4370 = vadd.xlane.f32.xlu0 %v4369
    %v4371 = vpop.xlane.xlu0 %4370
    %v4372 = vsel %vm1157, %v4324, 0.0
    %4373 = vadd.xlane.f32.xlu0 %v4372
    %v4374 = vpop.xlane.xlu0 %4373
    %v4375 = vsel %vm1157, %v4325, 0.0
    %4376 = vadd.xlane.f32.xlu0 %v4375
    %v4377 = vpop.xlane.xlu0 %4376
    %v4378 = vsel %vm1157, %v4326, 0.0
    %4379 = vadd.xlane.f32.xlu0 %v4378
    %v4380 = vpop.xlane.xlu0 %4379
    %v4381 = vsel %vm1157, %v4327, 0.0
    %4382 = vadd.xlane.f32.xlu0 %v4381
    %v4383 = vpop.xlane.xlu0 %4382
    %v4384 = vsel %vm1157, %v4328, 0.0
    %4385 = vadd.xlane.f32.xlu0 %v4384
    %v4386 = vpop.xlane.xlu0 %4385
    %v4387 = vsel %vm1157, %v4329, 0.0
    %4388 = vadd.xlane.f32.xlu0 %v4387
    %v4389 = vpop.xlane.xlu0 %4388
    %v4390 = vsel %vm1157, %v4330, 0.0
    %4391 = vadd.xlane.f32.xlu0 %v4390
    %v4392 = vpop.xlane.xlu0 %4391
    %v4393 = vsel %vm1157, %v4331, 0.0
    %4394 = vadd.xlane.f32.xlu0 %v4393
    %v4395 = vpop.xlane.xlu0 %4394
    %v4396 = vsel %vm1157, %v4332, 0.0
    %4397 = vadd.xlane.f32.xlu0 %v4396
    %v4398 = vpop.xlane.xlu0 %4397
    %v4399 = vsel %vm1157, %v4333, 0.0
    %4400 = vadd.xlane.f32.xlu0 %v4399
    %v4401 = vpop.xlane.xlu0 %4400
    %v4402 = vsel %vm1157, %v4334, 0.0
    %4403 = vadd.xlane.f32.xlu0 %v4402
    %v4404 = vpop.xlane.xlu0 %4403
    %v4405 = vsel %vm1157, %v4335, 0.0
    %4406 = vadd.xlane.f32.xlu0 %v4405
    %v4407 = vpop.xlane.xlu0 %4406
    %v4408 = vsel %vm1157, %v4336, 0.0
    %4409 = vadd.xlane.f32.xlu0 %v4408
    %v4410 = vpop.xlane.xlu0 %4409
    %v4411 = vsel %vm1157, %v4337, 0.0
    %4412 = vadd.xlane.f32.xlu0 %v4411
    %v4413 = vpop.xlane.xlu0 %4412
    %v4414 = vsel %vm1157, %v4338, 0.0
    %4415 = vadd.xlane.f32.xlu0 %v4414
    %v4416 = vpop.xlane.xlu0 %4415
    %v4417 = vsel %vm1157, %v4339, 0.0
    %4418 = vadd.xlane.f32.xlu0 %v4417
    %v4419 = vpop.xlane.xlu0 %4418
    %v4420 = vsel %vm1157, %v4340, 0.0
    %4421 = vadd.xlane.f32.xlu0 %v4420
    %v4422 = vpop.xlane.xlu0 %4421
    %v4423 = vsel %vm1157, %v4341, 0.0
    %4424 = vadd.xlane.f32.xlu0 %v4423
    %v4425 = vpop.xlane.xlu0 %4424
    %v4426 = vsel %vm1157, %v4342, 0.0
    %4427 = vadd.xlane.f32.xlu0 %v4426
    %v4428 = vpop.xlane.xlu0 %4427
    %v4429 = vsel %vm1157, %v4343, 0.0
    %4430 = vadd.xlane.f32.xlu0 %v4429
    %v4431 = vpop.xlane.xlu0 %4430
    %v4432 = vsel %vm1157, %v4344, 0.0
    %4433 = vadd.xlane.f32.xlu0 %v4432
    %v4434 = vpop.xlane.xlu0 %4433
    %v4435 = vsel %vm1157, %v4345, 0.0
    %4436 = vadd.xlane.f32.xlu0 %v4435
    %v4437 = vpop.xlane.xlu0 %4436
    %v4438 = vsel %vm1157, %v4346, 0.0
    %4439 = vadd.xlane.f32.xlu0 %v4438
    %v4440 = vpop.xlane.xlu0 %4439
    %v4441 = vsel %vm1157, %v4347, 0.0
    %4442 = vadd.xlane.f32.xlu0 %v4441
    %v4443 = vpop.xlane.xlu0 %4442
    %v4444 = vrcp.pop 64.0
    %v4445 = vmul.f32 %v4350, %v4444
    %v4446 = vmul.f32 %v4353, %v4444
    %v4447 = vmul.f32 %v4356, %v4444
    %v4448 = vmul.f32 %v4359, %v4444
    %v4449 = vmul.f32 %v4362, %v4444
    %v4450 = vmul.f32 %v4365, %v4444
    %v4451 = vmul.f32 %v4368, %v4444
    %v4452 = vmul.f32 %v4371, %v4444
    %v4453 = vmul.f32 %v4374, %v4444
    %v4454 = vmul.f32 %v4377, %v4444
    %v4455 = vmul.f32 %v4380, %v4444
    %v4456 = vmul.f32 %v4383, %v4444
    %v4457 = vmul.f32 %v4386, %v4444
    %v4458 = vmul.f32 %v4389, %v4444
    %v4459 = vmul.f32 %v4392, %v4444
    %v4460 = vmul.f32 %v4395, %v4444
    %v4461 = vmul.f32 %v4398, %v4444
    %v4462 = vmul.f32 %v4401, %v4444
    %v4463 = vmul.f32 %v4404, %v4444
    %v4464 = vmul.f32 %v4407, %v4444
    %v4465 = vmul.f32 %v4410, %v4444
    %v4466 = vmul.f32 %v4413, %v4444
    %v4467 = vmul.f32 %v4416, %v4444
    %v4468 = vmul.f32 %v4419, %v4444
    %v4469 = vmul.f32 %v4422, %v4444
    %v4470 = vmul.f32 %v4425, %v4444
    %v4471 = vmul.f32 %v4428, %v4444
    %v4472 = vmul.f32 %v4431, %v4444
    %v4473 = vmul.f32 %v4434, %v4444
    %v4474 = vmul.f32 %v4437, %v4444
    %v4475 = vmul.f32 %v4440, %v4444
    %v4476 = vmul.f32 %v4443, %v4444
    %v4477 = vsub.f32 %v4316, %v4445
    %v4478 = vsub.f32 %v4317, %v4446
    %v4479 = vsub.f32 %v4318, %v4447
    %v4480 = vsub.f32 %v4319, %v4448
    %v4481 = vsub.f32 %v4320, %v4449
    %v4482 = vsub.f32 %v4321, %v4450
    %v4483 = vsub.f32 %v4322, %v4451
    %v4484 = vsub.f32 %v4323, %v4452
    %v4485 = vsub.f32 %v4324, %v4453
    %v4486 = vsub.f32 %v4325, %v4454
    %v4487 = vsub.f32 %v4326, %v4455
    %v4488 = vsub.f32 %v4327, %v4456
    %v4489 = vsub.f32 %v4328, %v4457
    %v4490 = vsub.f32 %v4329, %v4458
    %v4491 = vsub.f32 %v4330, %v4459
    %v4492 = vsub.f32 %v4331, %v4460
    %v4493 = vsub.f32 %v4332, %v4461
    %v4494 = vsub.f32 %v4333, %v4462
    %v4495 = vsub.f32 %v4334, %v4463
    %v4496 = vsub.f32 %v4335, %v4464
    %v4497 = vsub.f32 %v4336, %v4465
    %v4498 = vsub.f32 %v4337, %v4466
    %v4499 = vsub.f32 %v4338, %v4467
    %v4500 = vsub.f32 %v4339, %v4468
    %v4501 = vsub.f32 %v4340, %v4469
    %v4502 = vsub.f32 %v4341, %v4470
    %v4503 = vsub.f32 %v4342, %v4471
    %v4504 = vsub.f32 %v4343, %v4472
    %v4505 = vsub.f32 %v4344, %v4473
    %v4506 = vsub.f32 %v4345, %v4474
    %v4507 = vsub.f32 %v4346, %v4475
    %v4508 = vsub.f32 %v4347, %v4476
    %v4509 = vmul.f32 %v4477, %v4477
    %v4510 = vmul.f32 %v4478, %v4478
    %v4511 = vmul.f32 %v4479, %v4479
    %v4512 = vmul.f32 %v4480, %v4480
    %v4513 = vmul.f32 %v4481, %v4481
    %v4514 = vmul.f32 %v4482, %v4482
    %v4515 = vmul.f32 %v4483, %v4483
    %v4516 = vmul.f32 %v4484, %v4484
    %v4517 = vmul.f32 %v4485, %v4485
    %v4518 = vmul.f32 %v4486, %v4486
    %v4519 = vmul.f32 %v4487, %v4487
    %v4520 = vmul.f32 %v4488, %v4488
    %v4521 = vmul.f32 %v4489, %v4489
    %v4522 = vmul.f32 %v4490, %v4490
    %v4523 = vmul.f32 %v4491, %v4491
    %v4524 = vmul.f32 %v4492, %v4492
    %v4525 = vmul.f32 %v4493, %v4493
    %v4526 = vmul.f32 %v4494, %v4494
    %v4527 = vmul.f32 %v4495, %v4495
    %v4528 = vmul.f32 %v4496, %v4496
    %v4529 = vmul.f32 %v4497, %v4497
    %v4530 = vmul.f32 %v4498, %v4498
    %v4531 = vmul.f32 %v4499, %v4499
    %v4532 = vmul.f32 %v4500, %v4500
    %v4533 = vmul.f32 %v4501, %v4501
    %v4534 = vmul.f32 %v4502, %v4502
    %v4535 = vmul.f32 %v4503, %v4503
    %v4536 = vmul.f32 %v4504, %v4504
    %v4537 = vmul.f32 %v4505, %v4505
    %v4538 = vmul.f32 %v4506, %v4506
    %v4539 = vmul.f32 %v4507, %v4507
    %v4540 = vmul.f32 %v4508, %v4508
    %v4541 = vsel %vm1157, %v4509, 0.0
    %4542 = vadd.xlane.f32.xlu0 %v4541
    %v4543 = vpop.xlane.xlu0 %4542
    %v4544 = vsel %vm1157, %v4510, 0.0
    %4545 = vadd.xlane.f32.xlu0 %v4544
    %v4546 = vpop.xlane.xlu0 %4545
    %v4547 = vsel %vm1157, %v4511, 0.0
    %4548 = vadd.xlane.f32.xlu0 %v4547
    %v4549 = vpop.xlane.xlu0 %4548
    %v4550 = vsel %vm1157, %v4512, 0.0
    %4551 = vadd.xlane.f32.xlu0 %v4550
    %v4552 = vpop.xlane.xlu0 %4551
    %v4553 = vsel %vm1157, %v4513, 0.0
    %4554 = vadd.xlane.f32.xlu0 %v4553
    %v4555 = vpop.xlane.xlu0 %4554
    %v4556 = vsel %vm1157, %v4514, 0.0
    %4557 = vadd.xlane.f32.xlu0 %v4556
    %v4558 = vpop.xlane.xlu0 %4557
    %v4559 = vsel %vm1157, %v4515, 0.0
    %4560 = vadd.xlane.f32.xlu0 %v4559
    %v4561 = vpop.xlane.xlu0 %4560
    %v4562 = vsel %vm1157, %v4516, 0.0
    %4563 = vadd.xlane.f32.xlu0 %v4562
    %v4564 = vpop.xlane.xlu0 %4563
    %v4565 = vsel %vm1157, %v4517, 0.0
    %4566 = vadd.xlane.f32.xlu0 %v4565
    %v4567 = vpop.xlane.xlu0 %4566
    %v4568 = vsel %vm1157, %v4518, 0.0
    %4569 = vadd.xlane.f32.xlu0 %v4568
    %v4570 = vpop.xlane.xlu0 %4569
    %v4571 = vsel %vm1157, %v4519, 0.0
    %4572 = vadd.xlane.f32.xlu0 %v4571
    %v4573 = vpop.xlane.xlu0 %4572
    %v4574 = vsel %vm1157, %v4520, 0.0
    %4575 = vadd.xlane.f32.xlu0 %v4574
    %v4576 = vpop.xlane.xlu0 %4575
    %v4577 = vsel %vm1157, %v4521, 0.0
    %4578 = vadd.xlane.f32.xlu0 %v4577
    %v4579 = vpop.xlane.xlu0 %4578
    %v4580 = vsel %vm1157, %v4522, 0.0
    %4581 = vadd.xlane.f32.xlu0 %v4580
    %v4582 = vpop.xlane.xlu0 %4581
    %v4583 = vsel %vm1157, %v4523, 0.0
    %4584 = vadd.xlane.f32.xlu0 %v4583
    %v4585 = vpop.xlane.xlu0 %4584
    %v4586 = vsel %vm1157, %v4524, 0.0
    %4587 = vadd.xlane.f32.xlu0 %v4586
    %v4588 = vpop.xlane.xlu0 %4587
    %v4589 = vsel %vm1157, %v4525, 0.0
    %4590 = vadd.xlane.f32.xlu0 %v4589
    %v4591 = vpop.xlane.xlu0 %4590
    %v4592 = vsel %vm1157, %v4526, 0.0
    %4593 = vadd.xlane.f32.xlu0 %v4592
    %v4594 = vpop.xlane.xlu0 %4593
    %v4595 = vsel %vm1157, %v4527, 0.0
    %4596 = vadd.xlane.f32.xlu0 %v4595
    %v4597 = vpop.xlane.xlu0 %4596
    %v4598 = vsel %vm1157, %v4528, 0.0
    %4599 = vadd.xlane.f32.xlu0 %v4598
    %v4600 = vpop.xlane.xlu0 %4599
    %v4601 = vsel %vm1157, %v4529, 0.0
    %4602 = vadd.xlane.f32.xlu0 %v4601
    %v4603 = vpop.xlane.xlu0 %4602
    %v4604 = vsel %vm1157, %v4530, 0.0
    %4605 = vadd.xlane.f32.xlu0 %v4604
    %v4606 = vpop.xlane.xlu0 %4605
    %v4607 = vsel %vm1157, %v4531, 0.0
    %4608 = vadd.xlane.f32.xlu0 %v4607
    %v4609 = vpop.xlane.xlu0 %4608
    %v4610 = vsel %vm1157, %v4532, 0.0
    %4611 = vadd.xlane.f32.xlu0 %v4610
    %v4612 = vpop.xlane.xlu0 %4611
    %v4613 = vsel %vm1157, %v4533, 0.0
    %4614 = vadd.xlane.f32.xlu0 %v4613
    %v4615 = vpop.xlane.xlu0 %4614
    %v4616 = vsel %vm1157, %v4534, 0.0
    %4617 = vadd.xlane.f32.xlu0 %v4616
    %v4618 = vpop.xlane.xlu0 %4617
    %v4619 = vsel %vm1157, %v4535, 0.0
    %4620 = vadd.xlane.f32.xlu0 %v4619
    %v4621 = vpop.xlane.xlu0 %4620
    %v4622 = vsel %vm1157, %v4536, 0.0
    %4623 = vadd.xlane.f32.xlu0 %v4622
    %v4624 = vpop.xlane.xlu0 %4623
    %v4625 = vsel %vm1157, %v4537, 0.0
    %4626 = vadd.xlane.f32.xlu0 %v4625
    %v4627 = vpop.xlane.xlu0 %4626
    %v4628 = vsel %vm1157, %v4538, 0.0
    %4629 = vadd.xlane.f32.xlu0 %v4628
    %v4630 = vpop.xlane.xlu0 %4629
    %v4631 = vsel %vm1157, %v4539, 0.0
    %4632 = vadd.xlane.f32.xlu0 %v4631
    %v4633 = vpop.xlane.xlu0 %4632
    %v4634 = vsel %vm1157, %v4540, 0.0
    %4635 = vadd.xlane.f32.xlu0 %v4634
    %v4636 = vpop.xlane.xlu0 %4635
    %v4637 = vmul.f32 %v4543, %v4444
    %v4638 = vmul.f32 %v4546, %v4444
    %v4639 = vmul.f32 %v4549, %v4444
    %v4640 = vmul.f32 %v4552, %v4444
    %v4641 = vmul.f32 %v4555, %v4444
    %v4642 = vmul.f32 %v4558, %v4444
    %v4643 = vmul.f32 %v4561, %v4444
    %v4644 = vmul.f32 %v4564, %v4444
    %v4645 = vmul.f32 %v4567, %v4444
    %v4646 = vmul.f32 %v4570, %v4444
    %v4647 = vmul.f32 %v4573, %v4444
    %v4648 = vmul.f32 %v4576, %v4444
    %v4649 = vmul.f32 %v4579, %v4444
    %v4650 = vmul.f32 %v4582, %v4444
    %v4651 = vmul.f32 %v4585, %v4444
    %v4652 = vmul.f32 %v4588, %v4444
    %v4653 = vmul.f32 %v4591, %v4444
    %v4654 = vmul.f32 %v4594, %v4444
    %v4655 = vmul.f32 %v4597, %v4444
    %v4656 = vmul.f32 %v4600, %v4444
    %v4657 = vmul.f32 %v4603, %v4444
    %v4658 = vmul.f32 %v4606, %v4444
    %v4659 = vmul.f32 %v4609, %v4444
    %v4660 = vmul.f32 %v4612, %v4444
    %v4661 = vmul.f32 %v4615, %v4444
    %v4662 = vmul.f32 %v4618, %v4444
    %v4663 = vmul.f32 %v4621, %v4444
    %v4664 = vmul.f32 %v4624, %v4444
    %v4665 = vmul.f32 %v4627, %v4444
    %v4666 = vmul.f32 %v4630, %v4444
    %v4667 = vmul.f32 %v4633, %v4444
    %v4668 = vmul.f32 %v4636, %v4444
    %v4669 = vadd.f32 %v4637, 1e-05
    %v4670 = vadd.f32 %v4638, 1e-05
    %v4671 = vadd.f32 %v4639, 1e-05
    %v4672 = vadd.f32 %v4640, 1e-05
    %v4673 = vadd.f32 %v4641, 1e-05
    %v4674 = vadd.f32 %v4642, 1e-05
    %v4675 = vadd.f32 %v4643, 1e-05
    %v4676 = vadd.f32 %v4644, 1e-05
    %v4677 = vadd.f32 %v4645, 1e-05
    %v4678 = vadd.f32 %v4646, 1e-05
    %v4679 = vadd.f32 %v4647, 1e-05
    %v4680 = vadd.f32 %v4648, 1e-05
    %v4681 = vadd.f32 %v4649, 1e-05
    %v4682 = vadd.f32 %v4650, 1e-05
    %v4683 = vadd.f32 %v4651, 1e-05
    %v4684 = vadd.f32 %v4652, 1e-05
    %v4685 = vadd.f32 %v4653, 1e-05
    %v4686 = vadd.f32 %v4654, 1e-05
    %v4687 = vadd.f32 %v4655, 1e-05
    %v4688 = vadd.f32 %v4656, 1e-05
    %v4689 = vadd.f32 %v4657, 1e-05
    %v4690 = vadd.f32 %v4658, 1e-05
    %v4691 = vadd.f32 %v4659, 1e-05
    %v4692 = vadd.f32 %v4660, 1e-05
    %v4693 = vadd.f32 %v4661, 1e-05
    %v4694 = vadd.f32 %v4662, 1e-05
    %v4695 = vadd.f32 %v4663, 1e-05
    %v4696 = vadd.f32 %v4664, 1e-05
    %v4697 = vadd.f32 %v4665, 1e-05
    %v4698 = vadd.f32 %v4666, 1e-05
    %v4699 = vadd.f32 %v4667, 1e-05
    %v4700 = vadd.f32 %v4668, 1e-05
    %v4701 = vrsqrt.pop %v4669
    %v4702 = vrsqrt.pop %v4670
    %v4703 = vrsqrt.pop %v4671
    %v4704 = vrsqrt.pop %v4672
    %v4705 = vrsqrt.pop %v4673
    %v4706 = vrsqrt.pop %v4674
    %v4707 = vrsqrt.pop %v4675
    %v4708 = vrsqrt.pop %v4676
    %v4709 = vrsqrt.pop %v4677
    %v4710 = vrsqrt.pop %v4678
    %v4711 = vrsqrt.pop %v4679
    %v4712 = vrsqrt.pop %v4680
    %v4713 = vrsqrt.pop %v4681
    %v4714 = vrsqrt.pop %v4682
    %v4715 = vrsqrt.pop %v4683
    %v4716 = vrsqrt.pop %v4684
    %v4717 = vrsqrt.pop %v4685
    %v4718 = vrsqrt.pop %v4686
    %v4719 = vrsqrt.pop %v4687
    %v4720 = vrsqrt.pop %v4688
    %v4721 = vrsqrt.pop %v4689
    %v4722 = vrsqrt.pop %v4690
    %v4723 = vrsqrt.pop %v4691
    %v4724 = vrsqrt.pop %v4692
    %v4725 = vrsqrt.pop %v4693
    %v4726 = vrsqrt.pop %v4694
    %v4727 = vrsqrt.pop %v4695
    %v4728 = vrsqrt.pop %v4696
    %v4729 = vrsqrt.pop %v4697
    %v4730 = vrsqrt.pop %v4698
    %v4731 = vrsqrt.pop %v4699
    %v4732 = vrsqrt.pop %v4700
    %v4733 = vmul.f32 %v4477, %v4701
    %v4734 = vmul.f32 %v4478, %v4702
    %v4735 = vmul.f32 %v4479, %v4703
    %v4736 = vmul.f32 %v4480, %v4704
    %v4737 = vmul.f32 %v4481, %v4705
    %v4738 = vmul.f32 %v4482, %v4706
    %v4739 = vmul.f32 %v4483, %v4707
    %v4740 = vmul.f32 %v4484, %v4708
    %v4741 = vmul.f32 %v4485, %v4709
    %v4742 = vmul.f32 %v4486, %v4710
    %v4743 = vmul.f32 %v4487, %v4711
    %v4744 = vmul.f32 %v4488, %v4712
    %v4745 = vmul.f32 %v4489, %v4713
    %v4746 = vmul.f32 %v4490, %v4714
    %v4747 = vmul.f32 %v4491, %v4715
    %v4748 = vmul.f32 %v4492, %v4716
    %v4749 = vmul.f32 %v4493, %v4717
    %v4750 = vmul.f32 %v4494, %v4718
    %v4751 = vmul.f32 %v4495, %v4719
    %v4752 = vmul.f32 %v4496, %v4720
    %v4753 = vmul.f32 %v4497, %v4721
    %v4754 = vmul.f32 %v4498, %v4722
    %v4755 = vmul.f32 %v4499, %v4723
    %v4756 = vmul.f32 %v4500, %v4724
    %v4757 = vmul.f32 %v4501, %v4725
    %v4758 = vmul.f32 %v4502, %v4726
    %v4759 = vmul.f32 %v4503, %v4727
    %v4760 = vmul.f32 %v4504, %v4728
    %v4761 = vmul.f32 %v4505, %v4729
    %v4762 = vmul.f32 %v4506, %v4730
    %v4763 = vmul.f32 %v4507, %v4731
    %v4764 = vmul.f32 %v4508, %v4732
    %v4765 = vlaneseq
    %v4766 = vshrl.u32 %v4765, 7
    %v4767 = vsub.s32 0, %v4766
    %v4768 = vrot.slane %v1108, %v4767
    %v4769 = vmul.f32 %v4733, %v4768
    %v4770 = vmul.f32 %v4734, %v4768
    %v4771 = vmul.f32 %v4735, %v4768
    %v4772 = vmul.f32 %v4736, %v4768
    %v4773 = vmul.f32 %v4737, %v4768
    %v4774 = vmul.f32 %v4738, %v4768
    %v4775 = vmul.f32 %v4739, %v4768
    %v4776 = vmul.f32 %v4740, %v4768
    %v4777 = vmul.f32 %v4741, %v4768
    %v4778 = vmul.f32 %v4742, %v4768
    %v4779 = vmul.f32 %v4743, %v4768
    %v4780 = vmul.f32 %v4744, %v4768
    %v4781 = vmul.f32 %v4745, %v4768
    %v4782 = vmul.f32 %v4746, %v4768
    %v4783 = vmul.f32 %v4747, %v4768
    %v4784 = vmul.f32 %v4748, %v4768
    %v4785 = vmul.f32 %v4749, %v4768
    %v4786 = vmul.f32 %v4750, %v4768
    %v4787 = vmul.f32 %v4751, %v4768
    %v4788 = vmul.f32 %v4752, %v4768
    %v4789 = vmul.f32 %v4753, %v4768
    %v4790 = vmul.f32 %v4754, %v4768
    %v4791 = vmul.f32 %v4755, %v4768
    %v4792 = vmul.f32 %v4756, %v4768
    %v4793 = vmul.f32 %v4757, %v4768
    %v4794 = vmul.f32 %v4758, %v4768
    %v4795 = vmul.f32 %v4759, %v4768
    %v4796 = vmul.f32 %v4760, %v4768
    %v4797 = vmul.f32 %v4761, %v4768
    %v4798 = vmul.f32 %v4762, %v4768
    %v4799 = vmul.f32 %v4763, %v4768
    %v4800 = vmul.f32 %v4764, %v4768
    %4802 = vrot.lane.b32.xlu0 %v4768, 64
    %v4803 = vpop.permute.xlu0 %4802
    %v4805 = vadd.f32 %v4769, %v4803
    %v4806 = vadd.f32 %v4770, %v4803
    %v4807 = vadd.f32 %v4771, %v4803
    %v4808 = vadd.f32 %v4772, %v4803
    %v4809 = vadd.f32 %v4773, %v4803
    %v4810 = vadd.f32 %v4774, %v4803
    %v4811 = vadd.f32 %v4775, %v4803
    %v4812 = vadd.f32 %v4776, %v4803
    %v4813 = vadd.f32 %v4777, %v4803
    %v4814 = vadd.f32 %v4778, %v4803
    %v4815 = vadd.f32 %v4779, %v4803
    %v4816 = vadd.f32 %v4780, %v4803
    %v4817 = vadd.f32 %v4781, %v4803
    %v4818 = vadd.f32 %v4782, %v4803
    %v4819 = vadd.f32 %v4783, %v4803
    %v4820 = vadd.f32 %v4784, %v4803
    %v4821 = vadd.f32 %v4785, %v4803
    %v4822 = vadd.f32 %v4786, %v4803
    %v4823 = vadd.f32 %v4787, %v4803
    %v4824 = vadd.f32 %v4788, %v4803
    %v4825 = vadd.f32 %v4789, %v4803
    %v4826 = vadd.f32 %v4790, %v4803
    %v4827 = vadd.f32 %v4791, %v4803
    %v4828 = vadd.f32 %v4792, %v4803
    %v4829 = vadd.f32 %v4793, %v4803
    %v4830 = vadd.f32 %v4794, %v4803
    %v4831 = vadd.f32 %v4795, %v4803
    %v4832 = vadd.f32 %v4796, %v4803
    %v4833 = vadd.f32 %v4797, %v4803
    %v4834 = vadd.f32 %v4798, %v4803
    %v4835 = vadd.f32 %v4799, %v4803
    %v4836 = vadd.f32 %v4800, %v4803
    %4837 = vst.msk [vmem:[%s8] sm:$0xff] %vm1157, %v4805
    %4838 = vst.msk [vmem:[%s8 + $0x8] sm:$0xff] %vm1157, %v4806
    %4839 = vst.msk [vmem:[%s8 + $0x10] sm:$0xff] %vm1157, %v4807
    %4840 = vst.msk [vmem:[%s8 + $0x18] sm:$0xff] %vm1157, %v4808
    %4841 = vst.msk [vmem:[%s8 + $0x20] sm:$0xff] %vm1157, %v4809
    %4842 = vst.msk [vmem:[%s8 + $0x28] sm:$0xff] %vm1157, %v4810
    %4843 = vst.msk [vmem:[%s8 + $0x30] sm:$0xff] %vm1157, %v4811
    %4844 = vst.msk [vmem:[%s8 + $0x38] sm:$0xff] %vm1157, %v4812
    %4845 = vst.msk [vmem:[%s8 + $0x40] sm:$0xff] %vm1157, %v4813
    %4846 = vst.msk [vmem:[%s8 + $0x48] sm:$0xff] %vm1157, %v4814
    %4847 = vst.msk [vmem:[%s8 + $0x50] sm:$0xff] %vm1157, %v4815
    %4848 = vst.msk [vmem:[%s8 + $0x58] sm:$0xff] %vm1157, %v4816
    %4849 = vst.msk [vmem:[%s8 + $0x60] sm:$0xff] %vm1157, %v4817
    %4850 = vst.msk [vmem:[%s8 + $0x68] sm:$0xff] %vm1157, %v4818
    %4851 = vst.msk [vmem:[%s8 + $0x70] sm:$0xff] %vm1157, %v4819
    %4852 = vst.msk [vmem:[%s8 + $0x78] sm:$0xff] %vm1157, %v4820
    %4853 = vst.msk [vmem:[%s8 + $0x80] sm:$0xff] %vm1157, %v4821
    %4854 = vst.msk [vmem:[%s8 + $0x88] sm:$0xff] %vm1157, %v4822
    %4855 = vst.msk [vmem:[%s8 + $0x90] sm:$0xff] %vm1157, %v4823
    %4856 = vst.msk [vmem:[%s8 + $0x98] sm:$0xff] %vm1157, %v4824
    %4857 = vst.msk [vmem:[%s8 + $0xa0] sm:$0xff] %vm1157, %v4825
    %4858 = vst.msk [vmem:[%s8 + $0xa8] sm:$0xff] %vm1157, %v4826
    %4859 = vst.msk [vmem:[%s8 + $0xb0] sm:$0xff] %vm1157, %v4827
    %4860 = vst.msk [vmem:[%s8 + $0xb8] sm:$0xff] %vm1157, %v4828
    %4861 = vst.msk [vmem:[%s8 + $0xc0] sm:$0xff] %vm1157, %v4829
    %4862 = vst.msk [vmem:[%s8 + $0xc8] sm:$0xff] %vm1157, %v4830
    %4863 = vst.msk [vmem:[%s8 + $0xd0] sm:$0xff] %vm1157, %v4831
    %4864 = vst.msk [vmem:[%s8 + $0xd8] sm:$0xff] %vm1157, %v4832
    %4865 = vst.msk [vmem:[%s8 + $0xe0] sm:$0xff] %vm1157, %v4833
    %4866 = vst.msk [vmem:[%s8 + $0xe8] sm:$0xff] %vm1157, %v4834
    %4867 = vst.msk [vmem:[%s8 + $0xf0] sm:$0xff] %vm1157, %v4835
    %4868 = vst.msk [vmem:[%s8 + $0xf8] sm:$0xff] %vm1157, %v4836
    // Predicated region
    $region50: #{tpu_custom_call.1} parent=1 // pred_check
      _
    $region51: #{tpu_custom_call.1} parent=1 // pred_check_branch
      %4870 = sbr.rel (0) target = $region53
    $region52: #{tpu_custom_call.1} parent=1 // pred_region
      _
    $region53: #{tpu_custom_call.1} parent=1 // pred_fallthru
      _
    // Predicated region
    $region54: #{tpu_custom_call.1} parent=1 // pred_check
      _
    $region55: #{tpu_custom_call.1} parent=1 // pred_check_branch
      %4872 = sbr.rel (0) target = $region57
    $region56: #{tpu_custom_call.1} parent=1 // pred_region
      _
    $region57: #{tpu_custom_call.1} parent=1 // pred_fallthru
      _
    %4873 = vsyncpa [#allocation4], 1
    %4874 = vsyncpa [#allocation6], 1
    %4875 = vsyncpa [#allocation9], 1

</llo_original>
